<compile_context>
chip_gen: v7x
topology: tpu7x:2x2x1
jax: 0.10.0
libtpu: 0.0.40
codegen_flags: <defaults>
</compile_context>

<pallas_src>
import jax
import jax.numpy as jnp
from jax import lax
from jax.experimental import pallas as pl
from jax.experimental.pallas import tpu as pltpu


# ---------------------------------------------------------------- kernels ---

def _conv_relu_pool_kernel(p_ref, w_ref, b_ref, o_ref):
    """p_ref: (4, K, TM) bf16 K-major im2col patches (one slab per pixel of a
    2x2 pooling window); w_ref: (C, K) bf16; b_ref: (C, 1) f32; o_ref: (C, TM)
    bf16.  Computes relu(max_q(w @ p[q]) + b) == maxpool2x2(relu(conv(x)+b))
    (bias and ReLU commute with the max, so this is exact)."""
    w = w_ref[...]
    acc = jnp.dot(w, p_ref[0], preferred_element_type=jnp.float32)
    for q in range(1, 4):                      # static unroll, max-accumulate
        acc = jnp.maximum(
            acc, jnp.dot(w, p_ref[q], preferred_element_type=jnp.float32))
    o_ref[...] = jnp.maximum(acc + b_ref[...], 0.0).astype(o_ref.dtype)


def _mlp_softmax_kernel(x_ref, w2_ref, b2_ref, w3_ref, b3_ref, o_ref):
    """x: (TB, 400) bf16; fc2 -> ReLU -> fc4 -> softmax.  Class dim is padded
    to 128 lanes; padded logits carry a -1e30 bias so softmax ignores them."""
    h = jnp.dot(x_ref[...], w2_ref[...], preferred_element_type=jnp.float32)
    h = jnp.maximum(h + b2_ref[...], 0.0)
    logits = jnp.dot(h.astype(jnp.bfloat16), w3_ref[...],
                     preferred_element_type=jnp.float32) + b3_ref[...]
    m = jnp.max(logits, axis=-1, keepdims=True)
    e = jnp.exp(logits - m)
    denom = jnp.sum(e, axis=-1, keepdims=True)
    o_ref[...] = e * pl.reciprocal(denom, approx=True)


# ------------------------------------------------------------- tiling plan --

def _plan_tiles(m, unit, target):
    """Split axis m into n equal tiles of size tm (a multiple of `unit`),
    padding m up to n*tm so no tile is ragged.  Forces n >= 2 whenever the
    axis is splittable so the 'parallel' grid axis uses both v7x TCs."""
    n = max(1, pl.cdiv(m, target))
    if n == 1 and m > unit:
        n = 2
    tm = pl.cdiv(pl.cdiv(m, n), unit) * unit
    n = pl.cdiv(m, tm)
    return n, tm, n * tm


# ------------------------------------------------------------- pallas_call --

def _conv_block(p, w_t, b, lane_target):
    """p: (4, K, M) bf16 K-major patches; w_t: (C, K) bf16; b: (C, 1) f32
    -> (C, M) bf16 (transposed, lane-dense conv+relu+pool output)."""
    _, K, M = p.shape
    C = w_t.shape[0]
    n, tm, mp = _plan_tiles(M, 128, lane_target)
    if mp != M:
        p = jnp.pad(p, ((0, 0), (0, 0), (0, mp - M)))
    cost = pl.CostEstimate(
        flops=2 * 4 * mp * K * C, transcendentals=0,
        bytes_accessed=p.size * 2 + w_t.size * 2 + b.size * 4 + C * mp * 2)
    out = pl.pallas_call(
        _conv_relu_pool_kernel,
        out_shape=jax.ShapeDtypeStruct((C, mp), jnp.bfloat16),
        grid=(n,),
        in_specs=[pl.BlockSpec((4, K, tm), lambda i: (0, 0, i)),
                  pl.BlockSpec((C, K), lambda i: (0, 0)),
                  pl.BlockSpec((C, 1), lambda i: (0, 0))],
        out_specs=pl.BlockSpec((C, tm), lambda i: (0, i)),
        compiler_params=pltpu.CompilerParams(
            dimension_semantics=("parallel",)),
        cost_estimate=cost,
    )(p, w_t, b)
    return out[:, :M]


def _mlp_block(x, w2, b2, w3p, b3p, row_target):
    B, K = x.shape
    H = w2.shape[1]
    NP = w3p.shape[1]
    n, tb, bp = _plan_tiles(B, 8, row_target)
    if bp != B:
        x = jnp.pad(x, ((0, bp - B), (0, 0)))
    cost = pl.CostEstimate(
        flops=2 * bp * (K * H + H * NP), transcendentals=bp * NP,
        bytes_accessed=x.size * 2 + w2.size * 2 + w3p.size * 2 + bp * NP * 4)
    out = pl.pallas_call(
        _mlp_softmax_kernel,
        out_shape=jax.ShapeDtypeStruct((bp, NP), jnp.float32),
        grid=(n,),
        in_specs=[pl.BlockSpec((tb, K), lambda i: (i, 0)),
                  pl.BlockSpec((K, H), lambda i: (0, 0)),
                  pl.BlockSpec((1, H), lambda i: (0, 0)),
                  pl.BlockSpec((H, NP), lambda i: (0, 0)),
                  pl.BlockSpec((1, NP), lambda i: (0, 0))],
        out_specs=pl.BlockSpec((tb, NP), lambda i: (i, 0)),
        compiler_params=pltpu.CompilerParams(
            dimension_semantics=("parallel",)),
        cost_estimate=cost,
    )(x, w2, b2, w3p, b3p)
    return out[:B]


# ------------------------------------------------------------ full forward --

def conv_classifier_forward(x, w0, b0, w1, b1, w2, b2, w3, b3, *,
                            lane_tile=2048, mlp_row_tile=512):
    """x: (B,1,28,28) f32.  Conv weights in HWIO layout: w0 (5,5,1,6),
    w1 (5,5,6,16).  FC weights: w2 (400,64), w3 (64,num_classes)."""
    B = x.shape[0]
    ncls = w3.shape[1]

    # --- stage 0: conv0(pad=2) + ReLU + maxpool2x2 -------------------------
    # cast to bf16 BEFORE im2col so the inflated patch tensor is half-width.
    xb = x[:, 0].astype(jnp.bfloat16)                                # (B,28,28)
    xp = jnp.pad(xb, ((0, 0), (2, 2), (2, 2)))                       # (B,32,32)
    p0 = jnp.stack([xp[:, dy:dy + 28, dx:dx + 28]
                    for dy in range(5) for dx in range(5)], axis=0)  # (25,B,28,28)
    p0 = (p0.reshape(25, B, 14, 2, 14, 2)
            .transpose(3, 5, 0, 1, 2, 4)                             # (2,2,25,B,14,14)
            .reshape(4, 25, B * 196))
    w0t = w0.reshape(25, 6).T.astype(jnp.bfloat16)                   # (6,25)
    h0t = _conv_block(p0, w0t, b0.reshape(6, 1).astype(jnp.float32),
                      lane_tile)                                     # (6,B*196) bf16

    # --- stage 1: conv1(valid) + ReLU + maxpool2x2 -------------------------
    h0 = h0t.reshape(6, B, 14, 14).transpose(1, 2, 3, 0)             # (B,14,14,6)
    p1 = jnp.stack([h0[:, dy:dy + 10, dx:dx + 10, :]
                    for dy in range(5) for dx in range(5)], axis=0)  # (25,B,10,10,6)
    p1 = (p1.reshape(25, B, 5, 2, 5, 2, 6)
            .transpose(3, 5, 0, 6, 1, 2, 4)                          # (2,2,25,6,B,5,5)
            .reshape(4, 150, B * 25))
    w1t = w1.reshape(150, 16).T.astype(jnp.bfloat16)                 # (16,150)
    h1t = _conv_block(p1, w1t, b1.reshape(16, 1).astype(jnp.float32),
                      lane_tile)                                     # (16,B*25) bf16

    # --- flatten in NCHW order (matches torch f.view(B, -1)) ---------------
    feats = h1t.reshape(16, B, 25).transpose(1, 0, 2).reshape(B, 400)

    # --- MLP + softmax (classes lane-padded to 128 for dense stores) -------
    w3p = jnp.zeros((w3.shape[0], 128), jnp.float32).at[:, :ncls].set(w3)
    b3p = jnp.full((1, 128), -1e30, jnp.float32).at[0, :ncls].set(
        b3.astype(jnp.float32))
    probs = _mlp_block(feats, w2.astype(jnp.bfloat16),
                       b2.reshape(1, -1).astype(jnp.float32),
                       w3p.astype(jnp.bfloat16), b3p, mlp_row_tile)
    return probs[:, :ncls]


# ----------------------------------------------------------- JAX reference --

def conv_classifier_reference(x, w0, b0, w1, b1, w2, b2, w3, b3):
    B = x.shape[0]
    xn = jnp.transpose(x, (0, 2, 3, 1))                              # NHWC
    h = lax.conv_general_dilated(xn, w0, (1, 1), ((2, 2), (2, 2)),
                                 dimension_numbers=("NHWC", "HWIO", "NHWC"))
    h = jnp.maximum(h + b0.reshape(1, 1, 1, -1), 0.0)
    h = lax.reduce_window(h, -jnp.inf, lax.max, (1, 2, 2, 1), (1, 2, 2, 1), "VALID")
    h = lax.conv_general_dilated(h, w1, (1, 1), "VALID",
                                 dimension_numbers=("NHWC", "HWIO", "NHWC"))
    h = jnp.maximum(h + b1.reshape(1, 1, 1, -1), 0.0)
    h = lax.reduce_window(h, -jnp.inf, lax.max, (1, 2, 2, 1), (1, 2, 2, 1), "VALID")
    f = jnp.transpose(h, (0, 3, 1, 2)).reshape(B, -1)                # NCHW flatten
    h2 = jnp.maximum(f @ w2 + b2.reshape(1, -1), 0.0)
    logits = h2 @ w3 + b3.reshape(1, -1)
    return jax.nn.softmax(logits, axis=1)


if __name__ == "__main__":
    B, num_classes = 8, 10
    key = jax.random.PRNGKey(0)
    ks = jax.random.split(key, 9)

    x = jax.random.normal(ks[0], (B, 1, 28, 28), dtype=jnp.float32)
    w0 = jax.random.normal(ks[1], (5, 5, 1, 6), dtype=jnp.float32) / 5.0
    b0 = jax.random.normal(ks[2], (6,), dtype=jnp.float32) * 0.1
    w1 = jax.random.normal(ks[3], (5, 5, 6, 16), dtype=jnp.float32) / jnp.sqrt(150.0)
    b1 = jax.random.normal(ks[4], (16,), dtype=jnp.float32) * 0.1
    w2 = jax.random.normal(ks[5], (400, 64), dtype=jnp.float32) / 20.0
    b2 = jax.random.normal(ks[6], (64,), dtype=jnp.float32) * 0.1
    w3 = jax.random.normal(ks[7], (64, num_classes), dtype=jnp.float32) / 8.0
    b3 = jax.random.normal(ks[8], (num_classes,), dtype=jnp.float32) * 0.1

    fwd = jax.jit(conv_classifier_forward)
    probs = jax.block_until_ready(fwd(x, w0, b0, w1, b1, w2, b2, w3, b3))

    ref = conv_classifier_reference(x, w0, b0, w1, b1, w2, b2, w3, b3)

    assert probs.shape == (B, num_classes), probs.shape
    assert bool(jnp.all(jnp.isfinite(probs)))
    # approx EUP reciprocal in the softmax denominator -> small row-sum slack.
    assert bool(jnp.allclose(jnp.sum(probs, axis=1), 1.0, atol=1e-2))
    # bf16 MXU operands (f32 accumulation) vs an all-f32 reference -> loose tol.
    assert bool(jnp.allclose(probs, ref, atol=3e-2, rtol=3e-2)), (
        float(jnp.max(jnp.abs(probs - ref))))

    print("KERNEL_OK")
</pallas_src>

<mosaic_0001>
module attributes {stable_mosaic.version = 11 : i64} {
  func.func @_conv_relu_pool_kernel(%arg0: i32, %arg1: memref<4x25x896xbf16, #tpu.memory_space<vmem>>, %arg2: memref<6x25xbf16, #tpu.memory_space<vmem>>, %arg3: memref<6x1xf32, #tpu.memory_space<vmem>>, %arg4: memref<6x896xbf16, #tpu.memory_space<vmem>>) attributes {dimension_semantics = [#tpu.dimension_semantics<parallel>], iteration_bounds = array<i64: 2>, scalar_prefetch = 0 : i64, scratch_operands = 0 : i64, tpu.core_type = #tpu.core_type<tc>, window_params = [{transform_indices = @transform_0, window_bounds = array<i64: 4, 25, 896>}, {pipeline_mode = #tpu.pipeline_mode<synchronous>, transform_indices = @transform_1, window_bounds = array<i64: 6, 25>}, {pipeline_mode = #tpu.pipeline_mode<synchronous>, transform_indices = @transform_2, window_bounds = array<i64: 6, 1>}, {transform_indices = @transform_3, window_bounds = array<i64: 6, 896>}]} {
    %c0 = arith.constant 0 : index
    %c0_0 = arith.constant 0 : index
    %0 = vector.load %arg2[%c0, %c0_0] : memref<6x25xbf16, #tpu.memory_space<vmem>>, vector<6x25xbf16>
    %c0_1 = arith.constant 0 : index
    %c0_2 = arith.constant 0 : index
    %c0_3 = arith.constant 0 : index
    %1 = vector.load %arg1[%c0_1, %c0_2, %c0_3] : memref<4x25x896xbf16, #tpu.memory_space<vmem>>, vector<1x25x896xbf16>
    %2 = vector.shape_cast %1 : vector<1x25x896xbf16> to vector<25x896xbf16>
    %cst = arith.constant dense<0.000000e+00> : vector<6x896xf32>
    %3 = tpu.matmul %0, %2, %cst {dimension_numbers = #tpu.dot_dimension_numbers<[1], [0], [0], [1], [0, 0, 1, 1], [], []>} : vector<6x25xbf16>, vector<25x896xbf16>, vector<6x896xf32> -> vector<6x896xf32>
    %c1 = arith.constant 1 : index
    %c0_4 = arith.constant 0 : index
    %c0_5 = arith.constant 0 : index
    %4 = vector.load %arg1[%c1, %c0_4, %c0_5] : memref<4x25x896xbf16, #tpu.memory_space<vmem>>, vector<1x25x896xbf16>
    %5 = vector.shape_cast %4 : vector<1x25x896xbf16> to vector<25x896xbf16>
    %cst_6 = arith.constant dense<0.000000e+00> : vector<6x896xf32>
    %6 = tpu.matmul %0, %5, %cst_6 {dimension_numbers = #tpu.dot_dimension_numbers<[1], [0], [0], [1], [0, 0, 1, 1], [], []>} : vector<6x25xbf16>, vector<25x896xbf16>, vector<6x896xf32> -> vector<6x896xf32>
    %7 = arith.maximumf %3, %6 : vector<6x896xf32>
    %c2 = arith.constant 2 : index
    %c0_7 = arith.constant 0 : index
    %c0_8 = arith.constant 0 : index
    %8 = vector.load %arg1[%c2, %c0_7, %c0_8] : memref<4x25x896xbf16, #tpu.memory_space<vmem>>, vector<1x25x896xbf16>
    %9 = vector.shape_cast %8 : vector<1x25x896xbf16> to vector<25x896xbf16>
    %cst_9 = arith.constant dense<0.000000e+00> : vector<6x896xf32>
    %10 = tpu.matmul %0, %9, %cst_9 {dimension_numbers = #tpu.dot_dimension_numbers<[1], [0], [0], [1], [0, 0, 1, 1], [], []>} : vector<6x25xbf16>, vector<25x896xbf16>, vector<6x896xf32> -> vector<6x896xf32>
    %11 = arith.maximumf %7, %10 : vector<6x896xf32>
    %c3 = arith.constant 3 : index
    %c0_10 = arith.constant 0 : index
    %c0_11 = arith.constant 0 : index
    %12 = vector.load %arg1[%c3, %c0_10, %c0_11] : memref<4x25x896xbf16, #tpu.memory_space<vmem>>, vector<1x25x896xbf16>
    %13 = vector.shape_cast %12 : vector<1x25x896xbf16> to vector<25x896xbf16>
    %cst_12 = arith.constant dense<0.000000e+00> : vector<6x896xf32>
    %14 = tpu.matmul %0, %13, %cst_12 {dimension_numbers = #tpu.dot_dimension_numbers<[1], [0], [0], [1], [0, 0, 1, 1], [], []>} : vector<6x25xbf16>, vector<25x896xbf16>, vector<6x896xf32> -> vector<6x896xf32>
    %15 = arith.maximumf %11, %14 : vector<6x896xf32>
    %c0_13 = arith.constant 0 : index
    %c0_14 = arith.constant 0 : index
    %16 = vector.load %arg3[%c0_13, %c0_14] : memref<6x1xf32, #tpu.memory_space<vmem>>, vector<6x1xf32>
    %17 = vector.broadcast %16 : vector<6x1xf32> to vector<6x896xf32>
    %18 = arith.addf %15, %17 : vector<6x896xf32>
    %cst_15 = arith.constant 0.000000e+00 : f32
    %19 = vector.broadcast %cst_15 : f32 to vector<6x896xf32>
    %20 = arith.maximumf %18, %19 : vector<6x896xf32>
    %21 = arith.truncf %20 : vector<6x896xf32> to vector<6x896xbf16>
    %c0_16 = arith.constant 0 : index
    %c0_17 = arith.constant 0 : index
    %22 = vector.load %arg4[%c0_16, %c0_17] : memref<6x896xbf16, #tpu.memory_space<vmem>>, vector<6x896xbf16>
    tpu.vector_store %arg4[%c0_16, %c0_17], %21 {strides = array<i32>} : memref<6x896xbf16, #tpu.memory_space<vmem>>, vector<6x896xbf16>,
    return
  }
  func.func @transform_0(%arg0: i32) -> (i32, i32, i32) {
    %c0_i32 = arith.constant 0 : i32
    %c0_i32_0 = arith.constant 0 : i32
    %c0_i32_1 = arith.constant 0 : i32
    return %c0_i32, %c0_i32_0, %arg0 : i32, i32, i32
  }
  func.func @transform_1(%arg0: i32) -> (i32, i32) {
    %c0_i32 = arith.constant 0 : i32
    %c0_i32_0 = arith.constant 0 : i32
    %c0_i32_1 = arith.constant 0 : i32
    return %c0_i32, %c0_i32_0 : i32, i32
  }
  func.func @transform_2(%arg0: i32) -> (i32, i32) {
    %c0_i32 = arith.constant 0 : i32
    %c0_i32_0 = arith.constant 0 : i32
    %c0_i32_1 = arith.constant 0 : i32
    return %c0_i32, %c0_i32_0 : i32, i32
  }
  func.func @transform_3(%arg0: i32) -> (i32, i32) {
    %c0_i32 = arith.constant 0 : i32
    %c0_i32_0 = arith.constant 0 : i32
    return %c0_i32, %arg0 : i32, i32
  }
}

module attributes {stable_mosaic.version = 11 : i64} {
  func.func @_conv_relu_pool_kernel(%arg0: i32, %arg1: memref<4x150x128xbf16, #tpu.memory_space<vmem>>, %arg2: memref<16x150xbf16, #tpu.memory_space<vmem>>, %arg3: memref<16x1xf32, #tpu.memory_space<vmem>>, %arg4: memref<16x128xbf16, #tpu.memory_space<vmem>>) attributes {dimension_semantics = [#tpu.dimension_semantics<parallel>], iteration_bounds = array<i64: 2>, scalar_prefetch = 0 : i64, scratch_operands = 0 : i64, tpu.core_type = #tpu.core_type<tc>, window_params = [{transform_indices = @transform_0, window_bounds = array<i64: 4, 150, 128>}, {pipeline_mode = #tpu.pipeline_mode<synchronous>, transform_indices = @transform_1, window_bounds = array<i64: 16, 150>}, {pipeline_mode = #tpu.pipeline_mode<synchronous>, transform_indices = @transform_2, window_bounds = array<i64: 16, 1>}, {transform_indices = @transform_3, window_bounds = array<i64: 16, 128>}]} {
    %c0 = arith.constant 0 : index
    %c0_0 = arith.constant 0 : index
    %0 = vector.load %arg2[%c0, %c0_0] : memref<16x150xbf16, #tpu.memory_space<vmem>>, vector<16x150xbf16>
    %c0_1 = arith.constant 0 : index
    %c0_2 = arith.constant 0 : index
    %c0_3 = arith.constant 0 : index
    %1 = vector.load %arg1[%c0_1, %c0_2, %c0_3] : memref<4x150x128xbf16, #tpu.memory_space<vmem>>, vector<1x150x128xbf16>
    %2 = vector.shape_cast %1 : vector<1x150x128xbf16> to vector<150x128xbf16>
    %cst = arith.constant dense<0.000000e+00> : vector<16x128xf32>
    %3 = tpu.matmul %0, %2, %cst {dimension_numbers = #tpu.dot_dimension_numbers<[1], [0], [0], [1], [0, 0, 1, 1], [], []>} : vector<16x150xbf16>, vector<150x128xbf16>, vector<16x128xf32> -> vector<16x128xf32>
    %c1 = arith.constant 1 : index
    %c0_4 = arith.constant 0 : index
    %c0_5 = arith.constant 0 : index
    %4 = vector.load %arg1[%c1, %c0_4, %c0_5] : memref<4x150x128xbf16, #tpu.memory_space<vmem>>, vector<1x150x128xbf16>
    %5 = vector.shape_cast %4 : vector<1x150x128xbf16> to vector<150x128xbf16>
    %cst_6 = arith.constant dense<0.000000e+00> : vector<16x128xf32>
    %6 = tpu.matmul %0, %5, %cst_6 {dimension_numbers = #tpu.dot_dimension_numbers<[1], [0], [0], [1], [0, 0, 1, 1], [], []>} : vector<16x150xbf16>, vector<150x128xbf16>, vector<16x128xf32> -> vector<16x128xf32>
    %7 = arith.maximumf %3, %6 : vector<16x128xf32>
    %c2 = arith.constant 2 : index
    %c0_7 = arith.constant 0 : index
    %c0_8 = arith.constant 0 : index
    %8 = vector.load %arg1[%c2, %c0_7, %c0_8] : memref<4x150x128xbf16, #tpu.memory_space<vmem>>, vector<1x150x128xbf16>
    %9 = vector.shape_cast %8 : vector<1x150x128xbf16> to vector<150x128xbf16>
    %cst_9 = arith.constant dense<0.000000e+00> : vector<16x128xf32>
    %10 = tpu.matmul %0, %9, %cst_9 {dimension_numbers = #tpu.dot_dimension_numbers<[1], [0], [0], [1], [0, 0, 1, 1], [], []>} : vector<16x150xbf16>, vector<150x128xbf16>, vector<16x128xf32> -> vector<16x128xf32>
    %11 = arith.maximumf %7, %10 : vector<16x128xf32>
    %c3 = arith.constant 3 : index
    %c0_10 = arith.constant 0 : index
    %c0_11 = arith.constant 0 : index
    %12 = vector.load %arg1[%c3, %c0_10, %c0_11] : memref<4x150x128xbf16, #tpu.memory_space<vmem>>, vector<1x150x128xbf16>
    %13 = vector.shape_cast %12 : vector<1x150x128xbf16> to vector<150x128xbf16>
    %cst_12 = arith.constant dense<0.000000e+00> : vector<16x128xf32>
    %14 = tpu.matmul %0, %13, %cst_12 {dimension_numbers = #tpu.dot_dimension_numbers<[1], [0], [0], [1], [0, 0, 1, 1], [], []>} : vector<16x150xbf16>, vector<150x128xbf16>, vector<16x128xf32> -> vector<16x128xf32>
    %15 = arith.maximumf %11, %14 : vector<16x128xf32>
    %c0_13 = arith.constant 0 : index
    %c0_14 = arith.constant 0 : index
    %16 = vector.load %arg3[%c0_13, %c0_14] : memref<16x1xf32, #tpu.memory_space<vmem>>, vector<16x1xf32>
    %17 = vector.broadcast %16 : vector<16x1xf32> to vector<16x128xf32>
    %18 = arith.addf %15, %17 : vector<16x128xf32>
    %cst_15 = arith.constant 0.000000e+00 : f32
    %19 = vector.broadcast %cst_15 : f32 to vector<16x128xf32>
    %20 = arith.maximumf %18, %19 : vector<16x128xf32>
    %21 = arith.truncf %20 : vector<16x128xf32> to vector<16x128xbf16>
    %c0_16 = arith.constant 0 : index
    %c0_17 = arith.constant 0 : index
    %22 = vector.load %arg4[%c0_16, %c0_17] : memref<16x128xbf16, #tpu.memory_space<vmem>>, vector<16x128xbf16>
    tpu.vector_store %arg4[%c0_16, %c0_17], %21 {strides = array<i32>} : memref<16x128xbf16, #tpu.memory_space<vmem>>, vector<16x128xbf16>,
    return
  }
  func.func @transform_0(%arg0: i32) -> (i32, i32, i32) {
    %c0_i32 = arith.constant 0 : i32
    %c0_i32_0 = arith.constant 0 : i32
    %c0_i32_1 = arith.constant 0 : i32
    return %c0_i32, %c0_i32_0, %arg0 : i32, i32, i32
  }
  func.func @transform_1(%arg0: i32) -> (i32, i32) {
    %c0_i32 = arith.constant 0 : i32
    %c0_i32_0 = arith.constant 0 : i32
    %c0_i32_1 = arith.constant 0 : i32
    return %c0_i32, %c0_i32_0 : i32, i32
  }
  func.func @transform_2(%arg0: i32) -> (i32, i32) {
    %c0_i32 = arith.constant 0 : i32
    %c0_i32_0 = arith.constant 0 : i32
    %c0_i32_1 = arith.constant 0 : i32
    return %c0_i32, %c0_i32_0 : i32, i32
  }
  func.func @transform_3(%arg0: i32) -> (i32, i32) {
    %c0_i32 = arith.constant 0 : i32
    %c0_i32_0 = arith.constant 0 : i32
    return %c0_i32, %arg0 : i32, i32
  }
}

module attributes {stable_mosaic.version = 11 : i64} {
  func.func @_mlp_softmax_kernel(%arg0: i32, %arg1: memref<8x400xbf16, #tpu.memory_space<vmem>>, %arg2: memref<400x64xbf16, #tpu.memory_space<vmem>>, %arg3: memref<1x64xf32, #tpu.memory_space<vmem>>, %arg4: memref<64x128xbf16, #tpu.memory_space<vmem>>, %arg5: memref<1x128xf32, #tpu.memory_space<vmem>>, %arg6: memref<8x128xf32, #tpu.memory_space<vmem>>) attributes {dimension_semantics = [#tpu.dimension_semantics<parallel>], iteration_bounds = array<i64: 1>, scalar_prefetch = 0 : i64, scratch_operands = 0 : i64, tpu.core_type = #tpu.core_type<tc>, window_params = [{transform_indices = @transform_0, window_bounds = array<i64: 8, 400>}, {pipeline_mode = #tpu.pipeline_mode<synchronous>, transform_indices = @transform_1, window_bounds = array<i64: 400, 64>}, {pipeline_mode = #tpu.pipeline_mode<synchronous>, transform_indices = @transform_2, window_bounds = array<i64: 1, 64>}, {pipeline_mode = #tpu.pipeline_mode<synchronous>, transform_indices = @transform_3, window_bounds = array<i64: 64, 128>}, {pipeline_mode = #tpu.pipeline_mode<synchronous>, transform_indices = @transform_4, window_bounds = array<i64: 1, 128>}, {transform_indices = @transform_5, window_bounds = array<i64: 8, 128>}]} {
    %c0 = arith.constant 0 : index
    %c0_0 = arith.constant 0 : index
    %0 = vector.load %arg1[%c0, %c0_0] : memref<8x400xbf16, #tpu.memory_space<vmem>>, vector<8x400xbf16>
    %c0_1 = arith.constant 0 : index
    %c0_2 = arith.constant 0 : index
    %1 = vector.load %arg2[%c0_1, %c0_2] : memref<400x64xbf16, #tpu.memory_space<vmem>>, vector<400x64xbf16>
    %cst = arith.constant dense<0.000000e+00> : vector<8x64xf32>
    %2 = tpu.matmul %0, %1, %cst {dimension_numbers = #tpu.dot_dimension_numbers<[1], [0], [0], [1], [0, 0, 1, 1], [], []>} : vector<8x400xbf16>, vector<400x64xbf16>, vector<8x64xf32> -> vector<8x64xf32>
    %c0_3 = arith.constant 0 : index
    %c0_4 = arith.constant 0 : index
    %3 = vector.load %arg3[%c0_3, %c0_4] : memref<1x64xf32, #tpu.memory_space<vmem>>, vector<1x64xf32>
    %4 = vector.broadcast %3 : vector<1x64xf32> to vector<8x64xf32>
    %5 = arith.addf %2, %4 : vector<8x64xf32>
    %cst_5 = arith.constant 0.000000e+00 : f32
    %6 = vector.broadcast %cst_5 : f32 to vector<8x64xf32>
    %7 = arith.maximumf %5, %6 : vector<8x64xf32>
    %8 = arith.truncf %7 : vector<8x64xf32> to vector<8x64xbf16>
    %c0_6 = arith.constant 0 : index
    %c0_7 = arith.constant 0 : index
    %9 = vector.load %arg4[%c0_6, %c0_7] : memref<64x128xbf16, #tpu.memory_space<vmem>>, vector<64x128xbf16>
    %cst_8 = arith.constant dense<0.000000e+00> : vector<8x128xf32>
    %10 = tpu.matmul %8, %9, %cst_8 {dimension_numbers = #tpu.dot_dimension_numbers<[1], [0], [0], [1], [0, 0, 1, 1], [], []>} : vector<8x64xbf16>, vector<64x128xbf16>, vector<8x128xf32> -> vector<8x128xf32>
    %c0_9 = arith.constant 0 : index
    %c0_10 = arith.constant 0 : index
    %11 = vector.load %arg5[%c0_9, %c0_10] : memref<1x128xf32, #tpu.memory_space<vmem>>, vector<1x128xf32>
    %12 = vector.broadcast %11 : vector<1x128xf32> to vector<8x128xf32>
    %13 = arith.addf %10, %12 : vector<8x128xf32>
    %cst_11 = arith.constant dense<0xFF800000> : vector<8xf32>
    %14 = vector.multi_reduction <maximumf>, %13, %cst_11 [1] : vector<8x128xf32> to vector<8xf32>
    %15 = vector.shape_cast %14 : vector<8xf32> to vector<8x1xf32>
    %16 = vector.broadcast %15 : vector<8x1xf32> to vector<8x128xf32>
    %17 = arith.subf %13, %16 : vector<8x128xf32>
    %18 = math.exp %17 : vector<8x128xf32>
    %cst_12 = arith.constant dense<0.000000e+00> : vector<8xf32>
    %19 = vector.multi_reduction <add>, %18, %cst_12 [1] : vector<8x128xf32> to vector<8xf32>
    %20 = vector.shape_cast %19 : vector<8xf32> to vector<8x1xf32>
    %21 = tpu.reciprocal %20 {approx = true} : vector<8x1xf32> -> vector<8x1xf32>
    %22 = vector.broadcast %21 : vector<8x1xf32> to vector<8x128xf32>
    %23 = arith.mulf %18, %22 : vector<8x128xf32>
    %c0_13 = arith.constant 0 : index
    %c0_14 = arith.constant 0 : index
    %24 = vector.load %arg6[%c0_13, %c0_14] : memref<8x128xf32, #tpu.memory_space<vmem>>, vector<8x128xf32>
    tpu.vector_store %arg6[%c0_13, %c0_14], %23 {strides = array<i32>} : memref<8x128xf32, #tpu.memory_space<vmem>>, vector<8x128xf32>,
    return
  }
  func.func @transform_0(%arg0: i32) -> (i32, i32) {
    %c0_i32 = arith.constant 0 : i32
    %c0_i32_0 = arith.constant 0 : i32
    return %arg0, %c0_i32 : i32, i32
  }
  func.func @transform_1(%arg0: i32) -> (i32, i32) {
    %c0_i32 = arith.constant 0 : i32
    %c0_i32_0 = arith.constant 0 : i32
    %c0_i32_1 = arith.constant 0 : i32
    return %c0_i32, %c0_i32_0 : i32, i32
  }
  func.func @transform_2(%arg0: i32) -> (i32, i32) {
    %c0_i32 = arith.constant 0 : i32
    %c0_i32_0 = arith.constant 0 : i32
    %c0_i32_1 = arith.constant 0 : i32
    return %c0_i32, %c0_i32_0 : i32, i32
  }
  func.func @transform_3(%arg0: i32) -> (i32, i32) {
    %c0_i32 = arith.constant 0 : i32
    %c0_i32_0 = arith.constant 0 : i32
    %c0_i32_1 = arith.constant 0 : i32
    return %c0_i32, %c0_i32_0 : i32, i32
  }
  func.func @transform_4(%arg0: i32) -> (i32, i32) {
    %c0_i32 = arith.constant 0 : i32
    %c0_i32_0 = arith.constant 0 : i32
    %c0_i32_1 = arith.constant 0 : i32
    return %c0_i32, %c0_i32_0 : i32, i32
  }
  func.func @transform_5(%arg0: i32) -> (i32, i32) {
    %c0_i32 = arith.constant 0 : i32
    %c0_i32_0 = arith.constant 0 : i32
    return %arg0, %c0_i32 : i32, i32
  }
}

</mosaic_0001>

<llo_original>
// kernel: conv_classifier_forward.3
$region0: #{conv_classifier_forward.3}
  #allocation0 [shape = 'u32[]', space=smem, size = 0x4, offset = 0x4, fixed_abs, tag = 'smem constant byte address 0x4 - core index']
  #allocation1 [shape = 'u32[144,128]{1,0:T(1,128)}', space=vmem, size = 0x12000, scoped, tag = 'internal scratch']
  %s0 = inlined_call_operand.vmem [shape: bf16[4,25,1792], index: 0, kind: input, shape index: {}]
  %s1 = inlined_call_operand.vmem [shape: bf16[6,25], index: 1, kind: input, shape index: {}]
  %s2 = inlined_call_operand.vmem [shape: f32[6,1], index: 2, kind: input, shape index: {}]
  %s3 = inlined_call_operand.vmem [shape: bf16[6,1792], index: 3, kind: output, shape index: {}]
  %s4 = sld [smem:[#allocation0]]
  $region71: #{conv_classifier_forward.3} parent=0
    _
  %s6 = ssub.s32 1, %s4
  %s7 = scalar_select 0, %s6, %s4
  $region1: #{conv_classifier_forward.3} parent=0
    #allocation2 [shape = 'u8[458752]{0}', space=vmem, size = 0x70000, scoped, tag = 'input window, operand 0']
    loop: start=0, step=1, limit=4
    $region2: #{conv_classifier_forward.3} parent=1 // loop_pre_header
      _
    $region3: #{conv_classifier_forward.3} parent=1 // loop_header
      %s9 = sphi 0, %s13
      %p10 = scmp.ge.s32.totalorder %s9, 4
      %s19 = sphi 0, %s21
      %s22 = sphi 0, %s19
      %s23 = sphi 0, %s22
      %s39 = sphi 0, %s23
      %s43 = sphi 0, %s43
      %s45 = sphi 0, %s43
      %s46 = sphi 0, %s45
      %s60 = sphi 0, %s46
      %s64 = sphi 0, %s64
      %s66 = sphi 0, %s64
      %s67 = sphi 0, %s66
      %s81 = sphi 0, %s67
      %s87 = sphi 0, %s89
      %s90 = sphi 0, %s87
      %s91 = sphi 0, %s90
      %s107 = sphi 0, %s91
    $region4: #{conv_classifier_forward.3} parent=1 // loop_header_branch
      %12 = sbr.rel (%p10) target = $region8
    $region5: #{conv_classifier_forward.3} parent=1 // loop_body
      %s14 = ssub.s32 %s9, 1
      %s15 = ssub.s32 %s9, 2
      %s16 = sadd.s32 %s9, 1
      %s17 = ssub.s32 %s9, %s16
      %p18 = scmp.eq.s32.totalorder %s17, 0
      %s20 = sadd.s32 %s19, 1
      %s21 = scalar_select %p18, %s19, %s20
      %p24 = pneg %p18
      %p25 = scmp.eq.s32.totalorder %s9, 1
      %p26 = por %p24, %p25
      %p27 = scmp.ne.s32.totalorder %s19, %s22
      %p28 = scmp.eq.s32.totalorder %s9, 0
      %p29 = por %p27, %p28
      %p30 = scmp.ne.s32.totalorder %s19, %s22
      %p31 = scmp.eq.s32.totalorder %s14, 1
      %p32 = por %p30, %p31
      %p33 = scmp.ne.s32.totalorder %s22, %s23
      %p34 = scmp.eq.s32.totalorder %s14, 0
      %p35 = por %p33, %p34
      %p36 = scmp.ne.s32.totalorder %s22, %s23
      %p37 = scmp.eq.s32.totalorder %s15, 1
      %p38 = por %p36, %p37
      %p40 = scmp.ne.s32.totalorder %s23, %s39
      %p41 = scmp.eq.s32.totalorder %s15, 0
      %p42 = por %p40, %p41
      %s44 = sadd.s32 %s43, 1
      %p47 = scmp.eq.s32.totalorder %s9, 1
      %p48 = scmp.ne.s32.totalorder %s43, %s45
      %p49 = scmp.eq.s32.totalorder %s9, 0
      %p50 = por %p48, %p49
      %p51 = scmp.ne.s32.totalorder %s43, %s45
      %p52 = scmp.eq.s32.totalorder %s14, 1
      %p53 = por %p51, %p52
      %p54 = scmp.ne.s32.totalorder %s45, %s46
      %p55 = scmp.eq.s32.totalorder %s14, 0
      %p56 = por %p54, %p55
      %p57 = scmp.ne.s32.totalorder %s45, %s46
      %p58 = scmp.eq.s32.totalorder %s15, 1
      %p59 = por %p57, %p58
      %p61 = scmp.ne.s32.totalorder %s46, %s60
      %p62 = scmp.eq.s32.totalorder %s15, 0
      %p63 = por %p61, %p62
      %s65 = sadd.s32 %s64, 1
      %p68 = scmp.eq.s32.totalorder %s9, 1
      %p69 = scmp.ne.s32.totalorder %s64, %s66
      %p70 = scmp.eq.s32.totalorder %s9, 0
      %p71 = por %p69, %p70
      %p72 = scmp.ne.s32.totalorder %s64, %s66
      %p73 = scmp.eq.s32.totalorder %s14, 1
      %p74 = por %p72, %p73
      %p75 = scmp.ne.s32.totalorder %s66, %s67
      %p76 = scmp.eq.s32.totalorder %s14, 0
      %p77 = por %p75, %p76
      %p78 = scmp.ne.s32.totalorder %s66, %s67
      %p79 = scmp.eq.s32.totalorder %s15, 1
      %p80 = por %p78, %p79
      %p82 = scmp.ne.s32.totalorder %s67, %s81
      %p83 = scmp.eq.s32.totalorder %s15, 0
      %p84 = por %p82, %p83
      %s85 = ssub.s32 %s9, %s16
      %p86 = scmp.eq.s32.totalorder %s85, 0
      %s88 = sadd.s32 %s87, 1
      %s89 = scalar_select %p86, %s87, %s88
      %p92 = pneg %p86
      %p93 = scmp.eq.s32.totalorder %s9, 1
      %p94 = por %p92, %p93
      %p95 = scmp.ne.s32.totalorder %s87, %s90
      %p96 = scmp.eq.s32.totalorder %s9, 0
      %p97 = por %p95, %p96
      %p98 = scmp.ne.s32.totalorder %s87, %s90
      %p99 = scmp.eq.s32.totalorder %s14, 1
      %p100 = por %p98, %p99
      %p101 = scmp.ne.s32.totalorder %s90, %s91
      %p102 = scmp.eq.s32.totalorder %s14, 0
      %p103 = por %p101, %p102
      %p104 = scmp.ne.s32.totalorder %s90, %s91
      %p105 = scmp.eq.s32.totalorder %s15, 1
      %p106 = por %p104, %p105
      %p108 = scmp.ne.s32.totalorder %s91, %s107
      %p109 = scmp.eq.s32.totalorder %s15, 0
      %p110 = por %p108, %p109
      %p111 = scmp.le.s32.totalorder 1, %s9
      %p112 = scmp.lt.s32.totalorder %s9, 3
      %p113 = pnand %p111, %p112
      %p114 = pneg %p113
      // Predicated region
      $region9: #{conv_classifier_forward.3} parent=5 // pred_check
        _
      $region10: #{conv_classifier_forward.3} parent=5 // pred_check_branch
        %116 = sbr.rel (%p113) target = $region12
      $region11: #{conv_classifier_forward.3} parent=5 // pred_region
        %s117 = ssub.s32 %s9, 1
        // Predicated region
        $region13: #{conv_classifier_forward.3} parent=11 // pred_check
          %p118 = pneg %p56
        $region14: #{conv_classifier_forward.3} parent=11 // pred_check_branch
          %120 = sbr.rel (%p118) target = $region16
        $region15: #{conv_classifier_forward.3} parent=11 // pred_region
          _
        $region16: #{conv_classifier_forward.3} parent=11 // pred_fallthru
          _
        // Predicated region
        $region17: #{conv_classifier_forward.3} parent=11 // pred_check
          %p121 = pneg %p77
        $region18: #{conv_classifier_forward.3} parent=11 // pred_check_branch
          %123 = sbr.rel (%p121) target = $region20
        $region19: #{conv_classifier_forward.3} parent=11 // pred_region
          _
        $region20: #{conv_classifier_forward.3} parent=11 // pred_fallthru
          _
      $region12: #{conv_classifier_forward.3} parent=5 // pred_fallthru
        _
      %p124 = scmp.lt.s32.totalorder %s9, 2
      // Predicated region
      $region21: #{conv_classifier_forward.3} parent=5 // pred_check
        %p125 = pneg %p124
      $region22: #{conv_classifier_forward.3} parent=5 // pred_check_branch
        %127 = sbr.rel (%p125) target = $region24
      $region23: #{conv_classifier_forward.3} parent=5 // pred_region
        // Predicated region
        $region25: #{conv_classifier_forward.3} parent=23 // pred_check
          %p128 = pneg %p29
        $region26: #{conv_classifier_forward.3} parent=23 // pred_check_branch
          %130 = sbr.rel (%p128) target = $region28
        $region27: #{conv_classifier_forward.3} parent=23 // pred_region
          %s131 = sand.u32 %s19, 1
          %s132 = sand.u32 %s19, 1
          %s133 = smul.addr %s132, 448
          %s134 = scalar_lea.vmem [#allocation2], %s133
          %s135 = smul.u32 7, %s9
          %s136 = smul.addr %s135, 4
          %s137 = scalar_lea.vmem %s0, %s136
          // Predicated region
          $region29: #{conv_classifier_forward.3} parent=27 // pred_check
            _
          $region30: #{conv_classifier_forward.3} parent=27 // pred_check_branch
            %139 = sbr.rel (0) target = $region32
          $region31: #{conv_classifier_forward.3} parent=27 // pred_region
            // Predicated region
            $region33: #{conv_classifier_forward.3} parent=31 // pred_check
              _
            $region34: #{conv_classifier_forward.3} parent=31 // pred_check_branch
              %141 = sbr.rel (0) target = $region36
            $region35: #{conv_classifier_forward.3} parent=31 // pred_region
              %s142 = scalar_lea.vmem %s137, 24
              %s143 = scalar_lea.vmem %s134, 24 [#allocation2]
              loop: start=0, step=1, limit=1
              $region37: #{conv_classifier_forward.3} parent=35 // loop_pre_header
                _
              $region38: #{conv_classifier_forward.3} parent=35 // loop_header
                %s145 = sphi 0, %s149
                %p146 = scmp.ge.s32.totalorder %s145, 1
                %s150 = sphi %s137, %s137
                %s151 = sphi %s134, %s134
              $region39: #{conv_classifier_forward.3} parent=35 // loop_header_branch
                %148 = sbr.rel (%p146) target = $region43
              $region40: #{conv_classifier_forward.3} parent=35 // loop_body
                %v152 = vld [vmem:[%s150] sm:$0xff]
                %153 = vst [vmem:[%s151] sm:$0xff] %v152
                %v154 = vld [vmem:[%s150 + $0x8] sm:$0xff]
                %155 = vst [vmem:[%s151 + $0x8] sm:$0xff] %v154
                %v156 = vld [vmem:[%s150 + $0x10] sm:$0xff]
                %157 = vst [vmem:[%s151 + $0x10] sm:$0xff] %v156
                %v158 = vld [vmem:[%s150 + $0x38] sm:$0xff]
                %159 = vst [vmem:[%s151 + $0x1c] sm:$0xff] %v158
                %v160 = vld [vmem:[%s150 + $0x40] sm:$0xff]
                %161 = vst [vmem:[%s151 + $0x24] sm:$0xff] %v160
                %v162 = vld [vmem:[%s150 + $0x48] sm:$0xff]
                %163 = vst [vmem:[%s151 + $0x2c] sm:$0xff] %v162
                %v164 = vld [vmem:[%s150 + $0x70] sm:$0xff]
                %165 = vst [vmem:[%s151 + $0x38] sm:$0xff] %v164
                %v166 = vld [vmem:[%s150 + $0x78] sm:$0xff]
                %167 = vst [vmem:[%s151 + $0x40] sm:$0xff] %v166
                %v168 = vld [vmem:[%s150 + $0x80] sm:$0xff]
                %169 = vst [vmem:[%s151 + $0x48] sm:$0xff] %v168
                %v170 = vld [vmem:[%s150 + $0xa8] sm:$0xff]
                %171 = vst [vmem:[%s151 + $0x54] sm:$0xff] %v170
                %v172 = vld [vmem:[%s150 + $0xb0] sm:$0xff]
                %173 = vst [vmem:[%s151 + $0x5c] sm:$0xff] %v172
                %v174 = vld [vmem:[%s150 + $0xb8] sm:$0xff]
                %175 = vst [vmem:[%s151 + $0x64] sm:$0xff] %v174
                %v176 = vld [vmem:[%s150 + $0xe0] sm:$0xff]
                %177 = vst [vmem:[%s151 + $0x70] sm:$0xff] %v176
                %v178 = vld [vmem:[%s150 + $0xe8] sm:$0xff]
                %179 = vst [vmem:[%s151 + $0x78] sm:$0xff] %v178
                %v180 = vld [vmem:[%s150 + $0xf0] sm:$0xff]
                %181 = vst [vmem:[%s151 + $0x80] sm:$0xff] %v180
                %v182 = vld [vmem:[%s150 + $0x118] sm:$0xff]
                %183 = vst [vmem:[%s151 + $0x8c] sm:$0xff] %v182
                %v184 = vld [vmem:[%s150 + $0x120] sm:$0xff]
                %185 = vst [vmem:[%s151 + $0x94] sm:$0xff] %v184
                %v186 = vld [vmem:[%s150 + $0x128] sm:$0xff]
                %187 = vst [vmem:[%s151 + $0x9c] sm:$0xff] %v186
                %v188 = vld [vmem:[%s150 + $0x150] sm:$0xff]
                %189 = vst [vmem:[%s151 + $0xa8] sm:$0xff] %v188
                %v190 = vld [vmem:[%s150 + $0x158] sm:$0xff]
                %191 = vst [vmem:[%s151 + $0xb0] sm:$0xff] %v190
                %v192 = vld [vmem:[%s150 + $0x160] sm:$0xff]
                %193 = vst [vmem:[%s151 + $0xb8] sm:$0xff] %v192
                %v194 = vld [vmem:[%s150 + $0x188] sm:$0xff]
                %195 = vst [vmem:[%s151 + $0xc4] sm:$0xff] %v194
                %v196 = vld [vmem:[%s150 + $0x190] sm:$0xff]
                %197 = vst [vmem:[%s151 + $0xcc] sm:$0xff] %v196
                %v198 = vld [vmem:[%s150 + $0x198] sm:$0xff]
                %199 = vst [vmem:[%s151 + $0xd4] sm:$0xff] %v198
                %v200 = vld [vmem:[%s150 + $0x1c0] sm:$0xff]
                %201 = vst [vmem:[%s151 + $0xe0] sm:$0xff] %v200
                %v202 = vld [vmem:[%s150 + $0x1c8] sm:$0xff]
                %203 = vst [vmem:[%s151 + $0xe8] sm:$0xff] %v202
                %v204 = vld [vmem:[%s150 + $0x1d0] sm:$0xff]
                %205 = vst [vmem:[%s151 + $0xf0] sm:$0xff] %v204
                %v206 = vld [vmem:[%s150 + $0x1f8] sm:$0xff]
                %207 = vst [vmem:[%s151 + $0xfc] sm:$0xff] %v206
                %v208 = vld [vmem:[%s150 + $0x200] sm:$0xff]
                %209 = vst [vmem:[%s151 + $0x104] sm:$0xff] %v208
                %v210 = vld [vmem:[%s150 + $0x208] sm:$0xff]
                %211 = vst [vmem:[%s151 + $0x10c] sm:$0xff] %v210
                %v212 = vld [vmem:[%s150 + $0x230] sm:$0xff]
                %213 = vst [vmem:[%s151 + $0x118] sm:$0xff] %v212
                %v214 = vld [vmem:[%s150 + $0x238] sm:$0xff]
                %215 = vst [vmem:[%s151 + $0x120] sm:$0xff] %v214
                %v216 = vld [vmem:[%s150 + $0x240] sm:$0xff]
                %217 = vst [vmem:[%s151 + $0x128] sm:$0xff] %v216
                %v218 = vld [vmem:[%s150 + $0x268] sm:$0xff]
                %219 = vst [vmem:[%s151 + $0x134] sm:$0xff] %v218
                %v220 = vld [vmem:[%s150 + $0x270] sm:$0xff]
                %221 = vst [vmem:[%s151 + $0x13c] sm:$0xff] %v220
                %v222 = vld [vmem:[%s150 + $0x278] sm:$0xff]
                %223 = vst [vmem:[%s151 + $0x144] sm:$0xff] %v222
                %v224 = vld [vmem:[%s150 + $0x2a0] sm:$0xff]
                %225 = vst [vmem:[%s151 + $0x150] sm:$0xff] %v224
                %v226 = vld [vmem:[%s150 + $0x2a8] sm:$0xff]
                %227 = vst [vmem:[%s151 + $0x158] sm:$0xff] %v226
                %v228 = vld [vmem:[%s150 + $0x2b0] sm:$0xff]
                %229 = vst [vmem:[%s151 + $0x160] sm:$0xff] %v228
                %v230 = vld [vmem:[%s150 + $0x2d8] sm:$0xff]
                %231 = vst [vmem:[%s151 + $0x16c] sm:$0xff] %v230
                %v232 = vld [vmem:[%s150 + $0x2e0] sm:$0xff]
                %233 = vst [vmem:[%s151 + $0x174] sm:$0xff] %v232
                %v234 = vld [vmem:[%s150 + $0x2e8] sm:$0xff]
                %235 = vst [vmem:[%s151 + $0x17c] sm:$0xff] %v234
                %v236 = vld [vmem:[%s150 + $0x310] sm:$0xff]
                %237 = vst [vmem:[%s151 + $0x188] sm:$0xff] %v236
                %v238 = vld [vmem:[%s150 + $0x318] sm:$0xff]
                %239 = vst [vmem:[%s151 + $0x190] sm:$0xff] %v238
                %v240 = vld [vmem:[%s150 + $0x320] sm:$0xff]
                %241 = vst [vmem:[%s151 + $0x198] sm:$0xff] %v240
                %v242 = vld [vmem:[%s150 + $0x348] sm:$0xff]
                %243 = vst [vmem:[%s151 + $0x1a4] sm:$0xff] %v242
                %v244 = vld [vmem:[%s150 + $0x350] sm:$0xff]
                %245 = vst [vmem:[%s151 + $0x1ac] sm:$0xff] %v244
                %v246 = vld [vmem:[%s150 + $0x358] sm:$0xff]
                %247 = vst [vmem:[%s151 + $0x1b4] sm:$0xff] %v246
              $region41: #{conv_classifier_forward.3} parent=35 // loop_footer
                %s149 = sadd.s32 1, %s145
              $region42: #{conv_classifier_forward.3} parent=35 // loop_footer_branch
                %144 = sbr.rel target = $region38
              $region43: #{conv_classifier_forward.3} parent=35 // loop_exit
                _
              loop: start=0, step=1, limit=1
              $region44: #{conv_classifier_forward.3} parent=35 // loop_pre_header
                _
              $region45: #{conv_classifier_forward.3} parent=35 // loop_header
                %s250 = sphi 0, %s254
                %p251 = scmp.ge.s32.totalorder %s250, 1
                %s255 = sphi %s142, %s142
                %s256 = sphi %s143, %s143
              $region46: #{conv_classifier_forward.3} parent=35 // loop_header_branch
                %253 = sbr.rel (%p251) target = $region50
              $region47: #{conv_classifier_forward.3} parent=35 // loop_body
                %v257 = vld [vmem:[%s255] sm:$0xf]
                %258 = vst [vmem:[%s256] sm:$0xf] %v257
                %v259 = vld [vmem:[%s255 + $0x38] sm:$0xf]
                %260 = vst [vmem:[%s256 + $0x1c] sm:$0xf] %v259
                %v261 = vld [vmem:[%s255 + $0x70] sm:$0xf]
                %262 = vst [vmem:[%s256 + $0x38] sm:$0xf] %v261
                %v263 = vld [vmem:[%s255 + $0xa8] sm:$0xf]
                %264 = vst [vmem:[%s256 + $0x54] sm:$0xf] %v263
                %v265 = vld [vmem:[%s255 + $0xe0] sm:$0xf]
                %266 = vst [vmem:[%s256 + $0x70] sm:$0xf] %v265
                %v267 = vld [vmem:[%s255 + $0x118] sm:$0xf]
                %268 = vst [vmem:[%s256 + $0x8c] sm:$0xf] %v267
                %v269 = vld [vmem:[%s255 + $0x150] sm:$0xf]
                %270 = vst [vmem:[%s256 + $0xa8] sm:$0xf] %v269
                %v271 = vld [vmem:[%s255 + $0x188] sm:$0xf]
                %272 = vst [vmem:[%s256 + $0xc4] sm:$0xf] %v271
                %v273 = vld [vmem:[%s255 + $0x1c0] sm:$0xf]
                %274 = vst [vmem:[%s256 + $0xe0] sm:$0xf] %v273
                %v275 = vld [vmem:[%s255 + $0x1f8] sm:$0xf]
                %276 = vst [vmem:[%s256 + $0xfc] sm:$0xf] %v275
                %v277 = vld [vmem:[%s255 + $0x230] sm:$0xf]
                %278 = vst [vmem:[%s256 + $0x118] sm:$0xf] %v277
                %v279 = vld [vmem:[%s255 + $0x268] sm:$0xf]
                %280 = vst [vmem:[%s256 + $0x134] sm:$0xf] %v279
                %v281 = vld [vmem:[%s255 + $0x2a0] sm:$0xf]
                %282 = vst [vmem:[%s256 + $0x150] sm:$0xf] %v281
                %v283 = vld [vmem:[%s255 + $0x2d8] sm:$0xf]
                %284 = vst [vmem:[%s256 + $0x16c] sm:$0xf] %v283
                %v285 = vld [vmem:[%s255 + $0x310] sm:$0xf]
                %286 = vst [vmem:[%s256 + $0x188] sm:$0xf] %v285
                %v287 = vld [vmem:[%s255 + $0x348] sm:$0xf]
                %288 = vst [vmem:[%s256 + $0x1a4] sm:$0xf] %v287
              $region48: #{conv_classifier_forward.3} parent=35 // loop_footer
                %s254 = sadd.s32 1, %s250
              $region49: #{conv_classifier_forward.3} parent=35 // loop_footer_branch
                %249 = sbr.rel target = $region45
              $region50: #{conv_classifier_forward.3} parent=35 // loop_exit
                _
            $region36: #{conv_classifier_forward.3} parent=31 // pred_fallthru
              _
          $region32: #{conv_classifier_forward.3} parent=27 // pred_fallthru
            _
          %289 = vnop
        $region28: #{conv_classifier_forward.3} parent=23 // pred_fallthru
          _
      $region24: #{conv_classifier_forward.3} parent=5 // pred_fallthru
        _
      %p290 = scmp.le.s32.totalorder 1, %s9
      %p291 = scmp.lt.s32.totalorder %s9, 3
      %p292 = pnand %p290, %p291
      %p293 = pneg %p292
      // Predicated region
      $region51: #{conv_classifier_forward.3} parent=5 // pred_check
        _
      $region52: #{conv_classifier_forward.3} parent=5 // pred_check_branch
        %295 = sbr.rel (%p292) target = $region54
      $region53: #{conv_classifier_forward.3} parent=5 // pred_region
        %s296 = ssub.s32 %s9, 1
        %s297 = sand.u32 %s22, 1
        %s298 = sand.u32 %s22, 1
        %s299 = smul.addr %s298, 448
        %s300 = scalar_lea.vmem [#allocation2], %s299
        // Predicated region
        $region55: #{conv_classifier_forward.3} parent=53 // pred_check
          %p301 = pneg %p35
        $region56: #{conv_classifier_forward.3} parent=53 // pred_check_branch
          %303 = sbr.rel (%p301) target = $region58
        $region57: #{conv_classifier_forward.3} parent=53 // pred_region
          _
        $region58: #{conv_classifier_forward.3} parent=53 // pred_fallthru
          _
        %s304 = sand.u32 %s22, 1
        %s305 = sand.u32 %s22, 1
        %s306 = smul.addr %s305, 448
        %s307 = scalar_lea.vmem [#allocation2], %s306
        %p308 = pneg %p35
        %p309 = pneg %p32
        %p310 = pneg %p56
        %p311 = pneg %p53
        %p312 = pneg %p77
        %p313 = pneg %p74
        %p314 = pneg %p103
        %p315 = pneg %p100
        %s316 = smul.u32 7, %s14
        %p317 = scmp.lt.s32.totalorder %s316, 13
        %s318 = scalar_select %p317, %s316, 13
        %s319 = smul.addr %s318, 4
        %s320 = scalar_lea.vmem %s3, %s319
        %s321 = smul.u32 7, %s14
        %s322 = smul.u32 7, %s14
        %p323 = scmp.lt.s32.totalorder %s322, 13
        %s324 = scalar_select %p323, %s322, 13
        %s325 = smul.addr %s324, 4
        %s326 = scalar_lea.vmem %s3, %s325
        %s327 = smul.u32 7, %s14
        %v329 = vld [vmem:[%s1] sm:$0x7]
        %v330 = vld [vmem:[%s300] sm:$0xff]
        %v331 = vld [vmem:[%s300 + $0x8] sm:$0xff]
        %v332 = vld [vmem:[%s300 + $0x10] sm:$0xff]
        %v333 = vld [vmem:[%s300 + $0x18] sm:$0xf]
        %v334 = vld [vmem:[%s300 + $0x1c] sm:$0xff]
        %v335 = vld [vmem:[%s300 + $0x24] sm:$0xff]
        %v336 = vld [vmem:[%s300 + $0x2c] sm:$0xff]
        %v337 = vld [vmem:[%s300 + $0x34] sm:$0xf]
        %v338 = vld [vmem:[%s300 + $0x38] sm:$0xff]
        %v339 = vld [vmem:[%s300 + $0x40] sm:$0xff]
        %v340 = vld [vmem:[%s300 + $0x48] sm:$0xff]
        %v341 = vld [vmem:[%s300 + $0x50] sm:$0xf]
        %v342 = vld [vmem:[%s300 + $0x54] sm:$0x11]
        %v343 = vld [vmem:[%s300 + $0x5c] sm:$0x11]
        %v344 = vld [vmem:[%s300 + $0x64] sm:$0x11]
        %v345 = vld [vmem:[%s300 + $0x6c] sm:$0x1]
        %v362 = vunpack.c.l.b16 %v330
        %v363 = vunpack.c.h.b16 %v330
        %v364 = vunpack.c.l.b16 %v331
        %v365 = vunpack.c.h.b16 %v331
        %v366 = vunpack.c.l.b16 %v332
        %v367 = vunpack.c.h.b16 %v332
        %v368 = vunpack.c.l.b16 %v333
        %v369 = vunpack.c.l.b16 %v334
        %v370 = vunpack.c.h.b16 %v334
        %v371 = vunpack.c.l.b16 %v335
        %v372 = vunpack.c.h.b16 %v335
        %v373 = vunpack.c.l.b16 %v336
        %v374 = vunpack.c.h.b16 %v336
        %v375 = vunpack.c.l.b16 %v337
        %v376 = vunpack.c.l.b16 %v338
        %v377 = vunpack.c.h.b16 %v338
        %v378 = vunpack.c.l.b16 %v339
        %v379 = vunpack.c.h.b16 %v339
        %v380 = vunpack.c.l.b16 %v340
        %v381 = vunpack.c.h.b16 %v340
        %v382 = vunpack.c.l.b16 %v341
        %v383 = vunpack.c.l.b16 %v342
        %v384 = vunpack.c.h.b16 %v342
        %v385 = vunpack.c.l.b16 %v343
        %v386 = vunpack.c.h.b16 %v343
        %v387 = vunpack.c.l.b16 %v344
        %v388 = vunpack.c.h.b16 %v344
        %v389 = vunpack.c.l.b16 %v345
        %v390 = vpack.c.b16 %v369, %v362
        %v391 = vpack.c.b16 %v370, %v363
        %v392 = vpack.c.b16 %v371, %v364
        %v393 = vpack.c.b16 %v372, %v365
        %v394 = vpack.c.b16 %v373, %v366
        %v395 = vpack.c.b16 %v374, %v367
        %v396 = vpack.c.b16 %v375, %v368
        %v397 = vpack.c.b16 %v383, %v376
        %v398 = vpack.c.b16 %v384, %v377
        %v399 = vpack.c.b16 %v385, %v378
        %v400 = vpack.c.b16 %v386, %v379
        %v401 = vpack.c.b16 %v387, %v380
        %v402 = vpack.c.b16 %v388, %v381
        %v403 = vpack.c.b16 %v389, %v382
        %vm411 = vcmask 203776
        %v413 = vsel %vm411, %v329, 0
        %vm415 = vcmask 1043456
        %vm416 = vcmask 1044480
        %v417 = vsel %vm415, 4294967295, 65535
        %v418 = vsel %vm416, %v417, 0
        %v420 = vand.u32 %v397, %v418
        %v423 = vand.u32 %v398, %v418
        %v426 = vand.u32 %v399, %v418
        %v429 = vand.u32 %v400, %v418
        %v432 = vand.u32 %v401, %v418
        %v435 = vand.u32 %v402, %v418
        %v438 = vand.u32 %v403, %v418
        %440 = vmatprep.subr.bf16.mxu0 %v391
        %441 = vmatpush1.bf16.msra.mxu0 %v390
        %442 = vmatprep.subr.bf16.mxu0 %v423
        %443 = vmatpush1.bf16.msra.mxu0 %v420
        %444 = vmatprep.subr.bf16.mxu0 0
        %445 = vmatpush1.bf16.msra.mxu0 0
        %446 = vmatprep.subr.bf16.mxu0 0
        %447 = vmatpush1.bf16.msra.mxu0 0
        %448 = vmatprep.subr.bf16.mxu0 0
        %449 = vmatpush1.bf16.msra.mxu0 0
        %450 = vmatprep.subr.bf16.mxu0 0
        %451 = vmatpush1.bf16.msra.mxu0 0
        %452 = vmatprep.subr.bf16.mxu0 0
        %453 = vmatpush1.bf16.msra.mxu0 0
        %454 = vmatprep.subr.bf16.mxu0 0
        %455 = vmatpush1.bf16.msra.mxu0 0
        %456 = vmatprep.subr.bf16.mxu0 0
        %457 = vmatpush1.bf16.msra.mxu0 0
        %458 = vmatprep.subr.bf16.mxu0 0
        %459 = vmatpush1.bf16.msra.mxu0 0
        %460 = vmatprep.subr.bf16.mxu0 0
        %461 = vmatpush1.bf16.msra.mxu0 0
        %462 = vmatprep.subr.bf16.mxu0 0
        %463 = vmatpush1.bf16.msra.mxu0 0
        %464 = vmatprep.subr.bf16.mxu0 0
        %465 = vmatpush1.bf16.msra.mxu0 0
        %466 = vmatprep.subr.bf16.mxu0 0
        %467 = vmatpush1.bf16.msra.mxu0 0
        %468 = vmatprep.subr.bf16.mxu0 0
        %469 = vmatpush1.bf16.msra.mxu0 0
        %470 = vmatprep.subr.bf16.mxu0 0
        %471 = vmatpush1.bf16.msra.mxu0 0
        %472 = vmatprep.mubr.bf16.mxu0 0
        %473 = vmatmul.mubr.bf16.gmra.mrb[0].mxu0 %v413
        %v474 = vpop.f32.mrb[0].mxu0
        %v475 = vadd.f32 0.0, %v474
        %v476 = vpop.f32.mrb[0].mxu0
        %v477 = vadd.f32 0.0, %v476
        %v478 = vpop.f32.mrb[0].mxu0
        %v479 = vpop.f32.mrb[0].mxu0
        %480 = vdwg.mxu0
        %481 = vmatprep.subr.bf16.mxu0 %v393
        %482 = vmatpush1.bf16.msra.mxu0 %v392
        %483 = vmatprep.subr.bf16.mxu0 %v429
        %484 = vmatpush1.bf16.msra.mxu0 %v426
        %485 = vmatprep.subr.bf16.mxu0 0
        %486 = vmatpush1.bf16.msra.mxu0 0
        %487 = vmatprep.subr.bf16.mxu0 0
        %488 = vmatpush1.bf16.msra.mxu0 0
        %489 = vmatprep.subr.bf16.mxu0 0
        %490 = vmatpush1.bf16.msra.mxu0 0
        %491 = vmatprep.subr.bf16.mxu0 0
        %492 = vmatpush1.bf16.msra.mxu0 0
        %493 = vmatprep.subr.bf16.mxu0 0
        %494 = vmatpush1.bf16.msra.mxu0 0
        %495 = vmatprep.subr.bf16.mxu0 0
        %496 = vmatpush1.bf16.msra.mxu0 0
        %497 = vmatprep.subr.bf16.mxu0 0
        %498 = vmatpush1.bf16.msra.mxu0 0
        %499 = vmatprep.subr.bf16.mxu0 0
        %500 = vmatpush1.bf16.msra.mxu0 0
        %501 = vmatprep.subr.bf16.mxu0 0
        %502 = vmatpush1.bf16.msra.mxu0 0
        %503 = vmatprep.subr.bf16.mxu0 0
        %504 = vmatpush1.bf16.msra.mxu0 0
        %505 = vmatprep.subr.bf16.mxu0 0
        %506 = vmatpush1.bf16.msra.mxu0 0
        %507 = vmatprep.subr.bf16.mxu0 0
        %508 = vmatpush1.bf16.msra.mxu0 0
        %509 = vmatprep.subr.bf16.mxu0 0
        %510 = vmatpush1.bf16.msra.mxu0 0
        %511 = vmatprep.subr.bf16.mxu0 0
        %512 = vmatpush1.bf16.msra.mxu0 0
        %513 = vmatprep.mubr.bf16.mxu0 0
        %514 = vmatmul.mubr.bf16.gmra.mrb[0].mxu0 %v413
        %v515 = vpop.f32.mrb[0].mxu0
        %v516 = vadd.f32 0.0, %v515
        %v517 = vpop.f32.mrb[0].mxu0
        %v518 = vadd.f32 0.0, %v517
        %v519 = vpop.f32.mrb[0].mxu0
        %v520 = vpop.f32.mrb[0].mxu0
        %521 = vdwg.mxu0
        %522 = vmatprep.subr.bf16.mxu0 %v395
        %523 = vmatpush1.bf16.msra.mxu0 %v394
        %524 = vmatprep.subr.bf16.mxu0 %v435
        %525 = vmatpush1.bf16.msra.mxu0 %v432
        %526 = vmatprep.subr.bf16.mxu0 0
        %527 = vmatpush1.bf16.msra.mxu0 0
        %528 = vmatprep.subr.bf16.mxu0 0
        %529 = vmatpush1.bf16.msra.mxu0 0
        %530 = vmatprep.subr.bf16.mxu0 0
        %531 = vmatpush1.bf16.msra.mxu0 0
        %532 = vmatprep.subr.bf16.mxu0 0
        %533 = vmatpush1.bf16.msra.mxu0 0
        %534 = vmatprep.subr.bf16.mxu0 0
        %535 = vmatpush1.bf16.msra.mxu0 0
        %536 = vmatprep.subr.bf16.mxu0 0
        %537 = vmatpush1.bf16.msra.mxu0 0
        %538 = vmatprep.subr.bf16.mxu0 0
        %539 = vmatpush1.bf16.msra.mxu0 0
        %540 = vmatprep.subr.bf16.mxu0 0
        %541 = vmatpush1.bf16.msra.mxu0 0
        %542 = vmatprep.subr.bf16.mxu0 0
        %543 = vmatpush1.bf16.msra.mxu0 0
        %544 = vmatprep.subr.bf16.mxu0 0
        %545 = vmatpush1.bf16.msra.mxu0 0
        %546 = vmatprep.subr.bf16.mxu0 0
        %547 = vmatpush1.bf16.msra.mxu0 0
        %548 = vmatprep.subr.bf16.mxu0 0
        %549 = vmatpush1.bf16.msra.mxu0 0
        %550 = vmatprep.subr.bf16.mxu0 0
        %551 = vmatpush1.bf16.msra.mxu0 0
        %552 = vmatprep.subr.bf16.mxu0 0
        %553 = vmatpush1.bf16.msra.mxu0 0
        %554 = vmatprep.mubr.bf16.mxu0 0
        %555 = vmatmul.mubr.bf16.gmra.mrb[0].mxu0 %v413
        %v556 = vpop.f32.mrb[0].mxu0
        %v557 = vadd.f32 0.0, %v556
        %v558 = vpop.f32.mrb[0].mxu0
        %v559 = vadd.f32 0.0, %v558
        %v560 = vpop.f32.mrb[0].mxu0
        %v561 = vpop.f32.mrb[0].mxu0
        %562 = vdwg.mxu0
        %563 = vmatprep.subr.bf16.mxu0 0
        %564 = vmatpush1.bf16.msra.mxu0 %v396
        %565 = vmatprep.subr.bf16.mxu0 0
        %566 = vmatpush1.bf16.msra.mxu0 %v438
        %567 = vmatprep.subr.bf16.mxu0 0
        %568 = vmatpush1.bf16.msra.mxu0 0
        %569 = vmatprep.subr.bf16.mxu0 0
        %570 = vmatpush1.bf16.msra.mxu0 0
        %571 = vmatprep.subr.bf16.mxu0 0
        %572 = vmatpush1.bf16.msra.mxu0 0
        %573 = vmatprep.subr.bf16.mxu0 0
        %574 = vmatpush1.bf16.msra.mxu0 0
        %575 = vmatprep.subr.bf16.mxu0 0
        %576 = vmatpush1.bf16.msra.mxu0 0
        %577 = vmatprep.subr.bf16.mxu0 0
        %578 = vmatpush1.bf16.msra.mxu0 0
        %579 = vmatprep.subr.bf16.mxu0 0
        %580 = vmatpush1.bf16.msra.mxu0 0
        %581 = vmatprep.subr.bf16.mxu0 0
        %582 = vmatpush1.bf16.msra.mxu0 0
        %583 = vmatprep.subr.bf16.mxu0 0
        %584 = vmatpush1.bf16.msra.mxu0 0
        %585 = vmatprep.subr.bf16.mxu0 0
        %586 = vmatpush1.bf16.msra.mxu0 0
        %587 = vmatprep.subr.bf16.mxu0 0
        %588 = vmatpush1.bf16.msra.mxu0 0
        %589 = vmatprep.subr.bf16.mxu0 0
        %590 = vmatpush1.bf16.msra.mxu0 0
        %591 = vmatprep.subr.bf16.mxu0 0
        %592 = vmatpush1.bf16.msra.mxu0 0
        %593 = vmatprep.subr.bf16.mxu0 0
        %594 = vmatpush1.bf16.msra.mxu0 0
        %595 = vmatprep.mubr.bf16.mxu0 0
        %596 = vmatmul.mubr.bf16.gmra.mrb[0].mxu0 %v413
        %v597 = vpop.f32.mrb[0].mxu0
        %v598 = vadd.f32 0.0, %v597
        %v599 = vpop.f32.mrb[0].mxu0
        %v600 = vpop.f32.mrb[0].mxu0
        %v601 = vpop.f32.mrb[0].mxu0
        %602 = vdwg.mxu0
        %s603 = scalar_lea.vmem %s300, 112 [#allocation2]
        %v604 = vld [vmem:[%s603] sm:$0xff]
        %v605 = vld [vmem:[%s603 + $0x8] sm:$0xff]
        %v606 = vld [vmem:[%s603 + $0x10] sm:$0xff]
        %v607 = vld [vmem:[%s603 + $0x18] sm:$0xf]
        %v608 = vld [vmem:[%s603 + $0x1c] sm:$0xff]
        %v609 = vld [vmem:[%s603 + $0x24] sm:$0xff]
        %v610 = vld [vmem:[%s603 + $0x2c] sm:$0xff]
        %v611 = vld [vmem:[%s603 + $0x34] sm:$0xf]
        %v612 = vld [vmem:[%s603 + $0x38] sm:$0xff]
        %v613 = vld [vmem:[%s603 + $0x40] sm:$0xff]
        %v614 = vld [vmem:[%s603 + $0x48] sm:$0xff]
        %v615 = vld [vmem:[%s603 + $0x50] sm:$0xf]
        %v616 = vld [vmem:[%s603 + $0x54] sm:$0x11]
        %v617 = vld [vmem:[%s603 + $0x5c] sm:$0x11]
        %v618 = vld [vmem:[%s603 + $0x64] sm:$0x11]
        %v619 = vld [vmem:[%s603 + $0x6c] sm:$0x1]
        %v636 = vunpack.c.l.b16 %v604
        %v637 = vunpack.c.h.b16 %v604
        %v638 = vunpack.c.l.b16 %v605
        %v639 = vunpack.c.h.b16 %v605
        %v640 = vunpack.c.l.b16 %v606
        %v641 = vunpack.c.h.b16 %v606
        %v642 = vunpack.c.l.b16 %v607
        %v643 = vunpack.c.l.b16 %v608
        %v644 = vunpack.c.h.b16 %v608
        %v645 = vunpack.c.l.b16 %v609
        %v646 = vunpack.c.h.b16 %v609
        %v647 = vunpack.c.l.b16 %v610
        %v648 = vunpack.c.h.b16 %v610
        %v649 = vunpack.c.l.b16 %v611
        %v650 = vunpack.c.l.b16 %v612
        %v651 = vunpack.c.h.b16 %v612
        %v652 = vunpack.c.l.b16 %v613
        %v653 = vunpack.c.h.b16 %v613
        %v654 = vunpack.c.l.b16 %v614
        %v655 = vunpack.c.h.b16 %v614
        %v656 = vunpack.c.l.b16 %v615
        %v657 = vunpack.c.l.b16 %v616
        %v658 = vunpack.c.h.b16 %v616
        %v659 = vunpack.c.l.b16 %v617
        %v660 = vunpack.c.h.b16 %v617
        %v661 = vunpack.c.l.b16 %v618
        %v662 = vunpack.c.h.b16 %v618
        %v663 = vunpack.c.l.b16 %v619
        %v664 = vpack.c.b16 %v643, %v636
        %v665 = vpack.c.b16 %v644, %v637
        %v666 = vpack.c.b16 %v645, %v638
        %v667 = vpack.c.b16 %v646, %v639
        %v668 = vpack.c.b16 %v647, %v640
        %v669 = vpack.c.b16 %v648, %v641
        %v670 = vpack.c.b16 %v649, %v642
        %v671 = vpack.c.b16 %v657, %v650
        %v672 = vpack.c.b16 %v658, %v651
        %v673 = vpack.c.b16 %v659, %v652
        %v674 = vpack.c.b16 %v660, %v653
        %v675 = vpack.c.b16 %v661, %v654
        %v676 = vpack.c.b16 %v662, %v655
        %v677 = vpack.c.b16 %v663, %v656
        %v686 = vand.u32 %v671, %v418
        %v689 = vand.u32 %v672, %v418
        %v692 = vand.u32 %v673, %v418
        %v695 = vand.u32 %v674, %v418
        %v698 = vand.u32 %v675, %v418
        %v701 = vand.u32 %v676, %v418
        %v704 = vand.u32 %v677, %v418
        %706 = vmatprep.subr.bf16.mxu0 %v665
        %707 = vmatpush1.bf16.msra.mxu0 %v664
        %708 = vmatprep.subr.bf16.mxu0 %v689
        %709 = vmatpush1.bf16.msra.mxu0 %v686
        %710 = vmatprep.subr.bf16.mxu0 0
        %711 = vmatpush1.bf16.msra.mxu0 0
        %712 = vmatprep.subr.bf16.mxu0 0
        %713 = vmatpush1.bf16.msra.mxu0 0
        %714 = vmatprep.subr.bf16.mxu0 0
        %715 = vmatpush1.bf16.msra.mxu0 0
        %716 = vmatprep.subr.bf16.mxu0 0
        %717 = vmatpush1.bf16.msra.mxu0 0
        %718 = vmatprep.subr.bf16.mxu0 0
        %719 = vmatpush1.bf16.msra.mxu0 0
        %720 = vmatprep.subr.bf16.mxu0 0
        %721 = vmatpush1.bf16.msra.mxu0 0
        %722 = vmatprep.subr.bf16.mxu0 0
        %723 = vmatpush1.bf16.msra.mxu0 0
        %724 = vmatprep.subr.bf16.mxu0 0
        %725 = vmatpush1.bf16.msra.mxu0 0
        %726 = vmatprep.subr.bf16.mxu0 0
        %727 = vmatpush1.bf16.msra.mxu0 0
        %728 = vmatprep.subr.bf16.mxu0 0
        %729 = vmatpush1.bf16.msra.mxu0 0
        %730 = vmatprep.subr.bf16.mxu0 0
        %731 = vmatpush1.bf16.msra.mxu0 0
        %732 = vmatprep.subr.bf16.mxu0 0
        %733 = vmatpush1.bf16.msra.mxu0 0
        %734 = vmatprep.subr.bf16.mxu0 0
        %735 = vmatpush1.bf16.msra.mxu0 0
        %736 = vmatprep.subr.bf16.mxu0 0
        %737 = vmatpush1.bf16.msra.mxu0 0
        %738 = vmatprep.mubr.bf16.mxu0 0
        %739 = vmatmul.mubr.bf16.gmra.mrb[0].mxu0 %v413
        %v740 = vpop.f32.mrb[0].mxu0
        %v741 = vadd.f32 0.0, %v740
        %v742 = vpop.f32.mrb[0].mxu0
        %v743 = vadd.f32 0.0, %v742
        %v744 = vpop.f32.mrb[0].mxu0
        %v745 = vpop.f32.mrb[0].mxu0
        %746 = vdwg.mxu0
        %747 = vmatprep.subr.bf16.mxu0 %v667
        %748 = vmatpush1.bf16.msra.mxu0 %v666
        %749 = vmatprep.subr.bf16.mxu0 %v695
        %750 = vmatpush1.bf16.msra.mxu0 %v692
        %751 = vmatprep.subr.bf16.mxu0 0
        %752 = vmatpush1.bf16.msra.mxu0 0
        %753 = vmatprep.subr.bf16.mxu0 0
        %754 = vmatpush1.bf16.msra.mxu0 0
        %755 = vmatprep.subr.bf16.mxu0 0
        %756 = vmatpush1.bf16.msra.mxu0 0
        %757 = vmatprep.subr.bf16.mxu0 0
        %758 = vmatpush1.bf16.msra.mxu0 0
        %759 = vmatprep.subr.bf16.mxu0 0
        %760 = vmatpush1.bf16.msra.mxu0 0
        %761 = vmatprep.subr.bf16.mxu0 0
        %762 = vmatpush1.bf16.msra.mxu0 0
        %763 = vmatprep.subr.bf16.mxu0 0
        %764 = vmatpush1.bf16.msra.mxu0 0
        %765 = vmatprep.subr.bf16.mxu0 0
        %766 = vmatpush1.bf16.msra.mxu0 0
        %767 = vmatprep.subr.bf16.mxu0 0
        %768 = vmatpush1.bf16.msra.mxu0 0
        %769 = vmatprep.subr.bf16.mxu0 0
        %770 = vmatpush1.bf16.msra.mxu0 0
        %771 = vmatprep.subr.bf16.mxu0 0
        %772 = vmatpush1.bf16.msra.mxu0 0
        %773 = vmatprep.subr.bf16.mxu0 0
        %774 = vmatpush1.bf16.msra.mxu0 0
        %775 = vmatprep.subr.bf16.mxu0 0
        %776 = vmatpush1.bf16.msra.mxu0 0
        %777 = vmatprep.subr.bf16.mxu0 0
        %778 = vmatpush1.bf16.msra.mxu0 0
        %779 = vmatprep.mubr.bf16.mxu0 0
        %780 = vmatmul.mubr.bf16.gmra.mrb[0].mxu0 %v413
        %v781 = vpop.f32.mrb[0].mxu0
        %v782 = vadd.f32 0.0, %v781
        %v783 = vpop.f32.mrb[0].mxu0
        %v784 = vadd.f32 0.0, %v783
        %v785 = vpop.f32.mrb[0].mxu0
        %v786 = vpop.f32.mrb[0].mxu0
        %787 = vdwg.mxu0
        %788 = vmatprep.subr.bf16.mxu0 %v669
        %789 = vmatpush1.bf16.msra.mxu0 %v668
        %790 = vmatprep.subr.bf16.mxu0 %v701
        %791 = vmatpush1.bf16.msra.mxu0 %v698
        %792 = vmatprep.subr.bf16.mxu0 0
        %793 = vmatpush1.bf16.msra.mxu0 0
        %794 = vmatprep.subr.bf16.mxu0 0
        %795 = vmatpush1.bf16.msra.mxu0 0
        %796 = vmatprep.subr.bf16.mxu0 0
        %797 = vmatpush1.bf16.msra.mxu0 0
        %798 = vmatprep.subr.bf16.mxu0 0
        %799 = vmatpush1.bf16.msra.mxu0 0
        %800 = vmatprep.subr.bf16.mxu0 0
        %801 = vmatpush1.bf16.msra.mxu0 0
        %802 = vmatprep.subr.bf16.mxu0 0
        %803 = vmatpush1.bf16.msra.mxu0 0
        %804 = vmatprep.subr.bf16.mxu0 0
        %805 = vmatpush1.bf16.msra.mxu0 0
        %806 = vmatprep.subr.bf16.mxu0 0
        %807 = vmatpush1.bf16.msra.mxu0 0
        %808 = vmatprep.subr.bf16.mxu0 0
        %809 = vmatpush1.bf16.msra.mxu0 0
        %810 = vmatprep.subr.bf16.mxu0 0
        %811 = vmatpush1.bf16.msra.mxu0 0
        %812 = vmatprep.subr.bf16.mxu0 0
        %813 = vmatpush1.bf16.msra.mxu0 0
        %814 = vmatprep.subr.bf16.mxu0 0
        %815 = vmatpush1.bf16.msra.mxu0 0
        %816 = vmatprep.subr.bf16.mxu0 0
        %817 = vmatpush1.bf16.msra.mxu0 0
        %818 = vmatprep.subr.bf16.mxu0 0
        %819 = vmatpush1.bf16.msra.mxu0 0
        %820 = vmatprep.mubr.bf16.mxu0 0
        %821 = vmatmul.mubr.bf16.gmra.mrb[0].mxu0 %v413
        %v822 = vpop.f32.mrb[0].mxu0
        %v823 = vadd.f32 0.0, %v822
        %v824 = vpop.f32.mrb[0].mxu0
        %v825 = vadd.f32 0.0, %v824
        %v826 = vpop.f32.mrb[0].mxu0
        %v827 = vpop.f32.mrb[0].mxu0
        %828 = vdwg.mxu0
        %829 = vmatprep.subr.bf16.mxu0 0
        %830 = vmatpush1.bf16.msra.mxu0 %v670
        %831 = vmatprep.subr.bf16.mxu0 0
        %832 = vmatpush1.bf16.msra.mxu0 %v704
        %833 = vmatprep.subr.bf16.mxu0 0
        %834 = vmatpush1.bf16.msra.mxu0 0
        %835 = vmatprep.subr.bf16.mxu0 0
        %836 = vmatpush1.bf16.msra.mxu0 0
        %837 = vmatprep.subr.bf16.mxu0 0
        %838 = vmatpush1.bf16.msra.mxu0 0
        %839 = vmatprep.subr.bf16.mxu0 0
        %840 = vmatpush1.bf16.msra.mxu0 0
        %841 = vmatprep.subr.bf16.mxu0 0
        %842 = vmatpush1.bf16.msra.mxu0 0
        %843 = vmatprep.subr.bf16.mxu0 0
        %844 = vmatpush1.bf16.msra.mxu0 0
        %845 = vmatprep.subr.bf16.mxu0 0
        %846 = vmatpush1.bf16.msra.mxu0 0
        %847 = vmatprep.subr.bf16.mxu0 0
        %848 = vmatpush1.bf16.msra.mxu0 0
        %849 = vmatprep.subr.bf16.mxu0 0
        %850 = vmatpush1.bf16.msra.mxu0 0
        %851 = vmatprep.subr.bf16.mxu0 0
        %852 = vmatpush1.bf16.msra.mxu0 0
        %853 = vmatprep.subr.bf16.mxu0 0
        %854 = vmatpush1.bf16.msra.mxu0 0
        %855 = vmatprep.subr.bf16.mxu0 0
        %856 = vmatpush1.bf16.msra.mxu0 0
        %857 = vmatprep.subr.bf16.mxu0 0
        %858 = vmatpush1.bf16.msra.mxu0 0
        %859 = vmatprep.subr.bf16.mxu0 0
        %860 = vmatpush1.bf16.msra.mxu0 0
        %861 = vmatprep.mubr.bf16.mxu0 0
        %862 = vmatmul.mubr.bf16.gmra.mrb[0].mxu0 %v413
        %v863 = vpop.f32.mrb[0].mxu0
        %v864 = vadd.f32 0.0, %v863
        %v865 = vpop.f32.mrb[0].mxu0
        %v866 = vpop.f32.mrb[0].mxu0
        %v867 = vpop.f32.mrb[0].mxu0
        %868 = vdwg.mxu0
        %v869 = vmax.f32 %v475, %v741
        %v870 = vmax.f32 %v477, %v743
        %v871 = vmax.f32 %v516, %v782
        %v872 = vmax.f32 %v518, %v784
        %v873 = vmax.f32 %v557, %v823
        %v874 = vmax.f32 %v559, %v825
        %v875 = vmax.f32 %v598, %v864
        %s876 = scalar_lea.vmem %s300, 224 [#allocation2]
        %v877 = vld [vmem:[%s876] sm:$0xff]
        %v878 = vld [vmem:[%s876 + $0x8] sm:$0xff]
        %v879 = vld [vmem:[%s876 + $0x10] sm:$0xff]
        %v880 = vld [vmem:[%s876 + $0x18] sm:$0xf]
        %v881 = vld [vmem:[%s876 + $0x1c] sm:$0xff]
        %v882 = vld [vmem:[%s876 + $0x24] sm:$0xff]
        %v883 = vld [vmem:[%s876 + $0x2c] sm:$0xff]
        %v884 = vld [vmem:[%s876 + $0x34] sm:$0xf]
        %v885 = vld [vmem:[%s876 + $0x38] sm:$0xff]
        %v886 = vld [vmem:[%s876 + $0x40] sm:$0xff]
        %v887 = vld [vmem:[%s876 + $0x48] sm:$0xff]
        %v888 = vld [vmem:[%s876 + $0x50] sm:$0xf]
        %v889 = vld [vmem:[%s876 + $0x54] sm:$0x11]
        %v890 = vld [vmem:[%s876 + $0x5c] sm:$0x11]
        %v891 = vld [vmem:[%s876 + $0x64] sm:$0x11]
        %v892 = vld [vmem:[%s876 + $0x6c] sm:$0x1]
        %v909 = vunpack.c.l.b16 %v877
        %v910 = vunpack.c.h.b16 %v877
        %v911 = vunpack.c.l.b16 %v878
        %v912 = vunpack.c.h.b16 %v878
        %v913 = vunpack.c.l.b16 %v879
        %v914 = vunpack.c.h.b16 %v879
        %v915 = vunpack.c.l.b16 %v880
        %v916 = vunpack.c.l.b16 %v881
        %v917 = vunpack.c.h.b16 %v881
        %v918 = vunpack.c.l.b16 %v882
        %v919 = vunpack.c.h.b16 %v882
        %v920 = vunpack.c.l.b16 %v883
        %v921 = vunpack.c.h.b16 %v883
        %v922 = vunpack.c.l.b16 %v884
        %v923 = vunpack.c.l.b16 %v885
        %v924 = vunpack.c.h.b16 %v885
        %v925 = vunpack.c.l.b16 %v886
        %v926 = vunpack.c.h.b16 %v886
        %v927 = vunpack.c.l.b16 %v887
        %v928 = vunpack.c.h.b16 %v887
        %v929 = vunpack.c.l.b16 %v888
        %v930 = vunpack.c.l.b16 %v889
        %v931 = vunpack.c.h.b16 %v889
        %v932 = vunpack.c.l.b16 %v890
        %v933 = vunpack.c.h.b16 %v890
        %v934 = vunpack.c.l.b16 %v891
        %v935 = vunpack.c.h.b16 %v891
        %v936 = vunpack.c.l.b16 %v892
        %v937 = vpack.c.b16 %v916, %v909
        %v938 = vpack.c.b16 %v917, %v910
        %v939 = vpack.c.b16 %v918, %v911
        %v940 = vpack.c.b16 %v919, %v912
        %v941 = vpack.c.b16 %v920, %v913
        %v942 = vpack.c.b16 %v921, %v914
        %v943 = vpack.c.b16 %v922, %v915
        %v944 = vpack.c.b16 %v930, %v923
        %v945 = vpack.c.b16 %v931, %v924
        %v946 = vpack.c.b16 %v932, %v925
        %v947 = vpack.c.b16 %v933, %v926
        %v948 = vpack.c.b16 %v934, %v927
        %v949 = vpack.c.b16 %v935, %v928
        %v950 = vpack.c.b16 %v936, %v929
        %v959 = vand.u32 %v944, %v418
        %v962 = vand.u32 %v945, %v418
        %v965 = vand.u32 %v946, %v418
        %v968 = vand.u32 %v947, %v418
        %v971 = vand.u32 %v948, %v418
        %v974 = vand.u32 %v949, %v418
        %v977 = vand.u32 %v950, %v418
        %979 = vmatprep.subr.bf16.mxu0 %v938
        %980 = vmatpush1.bf16.msra.mxu0 %v937
        %981 = vmatprep.subr.bf16.mxu0 %v962
        %982 = vmatpush1.bf16.msra.mxu0 %v959
        %983 = vmatprep.subr.bf16.mxu0 0
        %984 = vmatpush1.bf16.msra.mxu0 0
        %985 = vmatprep.subr.bf16.mxu0 0
        %986 = vmatpush1.bf16.msra.mxu0 0
        %987 = vmatprep.subr.bf16.mxu0 0
        %988 = vmatpush1.bf16.msra.mxu0 0
        %989 = vmatprep.subr.bf16.mxu0 0
        %990 = vmatpush1.bf16.msra.mxu0 0
        %991 = vmatprep.subr.bf16.mxu0 0
        %992 = vmatpush1.bf16.msra.mxu0 0
        %993 = vmatprep.subr.bf16.mxu0 0
        %994 = vmatpush1.bf16.msra.mxu0 0
        %995 = vmatprep.subr.bf16.mxu0 0
        %996 = vmatpush1.bf16.msra.mxu0 0
        %997 = vmatprep.subr.bf16.mxu0 0
        %998 = vmatpush1.bf16.msra.mxu0 0
        %999 = vmatprep.subr.bf16.mxu0 0
        %1000 = vmatpush1.bf16.msra.mxu0 0
        %1001 = vmatprep.subr.bf16.mxu0 0
        %1002 = vmatpush1.bf16.msra.mxu0 0
        %1003 = vmatprep.subr.bf16.mxu0 0
        %1004 = vmatpush1.bf16.msra.mxu0 0
        %1005 = vmatprep.subr.bf16.mxu0 0
        %1006 = vmatpush1.bf16.msra.mxu0 0
        %1007 = vmatprep.subr.bf16.mxu0 0
        %1008 = vmatpush1.bf16.msra.mxu0 0
        %1009 = vmatprep.subr.bf16.mxu0 0
        %1010 = vmatpush1.bf16.msra.mxu0 0
        %1011 = vmatprep.mubr.bf16.mxu0 0
        %1012 = vmatmul.mubr.bf16.gmra.mrb[0].mxu0 %v413
        %v1013 = vpop.f32.mrb[0].mxu0
        %v1014 = vadd.f32 0.0, %v1013
        %v1015 = vpop.f32.mrb[0].mxu0
        %v1016 = vadd.f32 0.0, %v1015
        %v1017 = vpop.f32.mrb[0].mxu0
        %v1018 = vpop.f32.mrb[0].mxu0
        %1019 = vdwg.mxu0
        %1020 = vmatprep.subr.bf16.mxu0 %v940
        %1021 = vmatpush1.bf16.msra.mxu0 %v939
        %1022 = vmatprep.subr.bf16.mxu0 %v968
        %1023 = vmatpush1.bf16.msra.mxu0 %v965
        %1024 = vmatprep.subr.bf16.mxu0 0
        %1025 = vmatpush1.bf16.msra.mxu0 0
        %1026 = vmatprep.subr.bf16.mxu0 0
        %1027 = vmatpush1.bf16.msra.mxu0 0
        %1028 = vmatprep.subr.bf16.mxu0 0
        %1029 = vmatpush1.bf16.msra.mxu0 0
        %1030 = vmatprep.subr.bf16.mxu0 0
        %1031 = vmatpush1.bf16.msra.mxu0 0
        %1032 = vmatprep.subr.bf16.mxu0 0
        %1033 = vmatpush1.bf16.msra.mxu0 0
        %1034 = vmatprep.subr.bf16.mxu0 0
        %1035 = vmatpush1.bf16.msra.mxu0 0
        %1036 = vmatprep.subr.bf16.mxu0 0
        %1037 = vmatpush1.bf16.msra.mxu0 0
        %1038 = vmatprep.subr.bf16.mxu0 0
        %1039 = vmatpush1.bf16.msra.mxu0 0
        %1040 = vmatprep.subr.bf16.mxu0 0
        %1041 = vmatpush1.bf16.msra.mxu0 0
        %1042 = vmatprep.subr.bf16.mxu0 0
        %1043 = vmatpush1.bf16.msra.mxu0 0
        %1044 = vmatprep.subr.bf16.mxu0 0
        %1045 = vmatpush1.bf16.msra.mxu0 0
        %1046 = vmatprep.subr.bf16.mxu0 0
        %1047 = vmatpush1.bf16.msra.mxu0 0
        %1048 = vmatprep.subr.bf16.mxu0 0
        %1049 = vmatpush1.bf16.msra.mxu0 0
        %1050 = vmatprep.subr.bf16.mxu0 0
        %1051 = vmatpush1.bf16.msra.mxu0 0
        %1052 = vmatprep.mubr.bf16.mxu0 0
        %1053 = vmatmul.mubr.bf16.gmra.mrb[0].mxu0 %v413
        %v1054 = vpop.f32.mrb[0].mxu0
        %v1055 = vadd.f32 0.0, %v1054
        %v1056 = vpop.f32.mrb[0].mxu0
        %v1057 = vadd.f32 0.0, %v1056
        %v1058 = vpop.f32.mrb[0].mxu0
        %v1059 = vpop.f32.mrb[0].mxu0
        %1060 = vdwg.mxu0
        %1061 = vmatprep.subr.bf16.mxu0 %v942
        %1062 = vmatpush1.bf16.msra.mxu0 %v941
        %1063 = vmatprep.subr.bf16.mxu0 %v974
        %1064 = vmatpush1.bf16.msra.mxu0 %v971
        %1065 = vmatprep.subr.bf16.mxu0 0
        %1066 = vmatpush1.bf16.msra.mxu0 0
        %1067 = vmatprep.subr.bf16.mxu0 0
        %1068 = vmatpush1.bf16.msra.mxu0 0
        %1069 = vmatprep.subr.bf16.mxu0 0
        %1070 = vmatpush1.bf16.msra.mxu0 0
        %1071 = vmatprep.subr.bf16.mxu0 0
        %1072 = vmatpush1.bf16.msra.mxu0 0
        %1073 = vmatprep.subr.bf16.mxu0 0
        %1074 = vmatpush1.bf16.msra.mxu0 0
        %1075 = vmatprep.subr.bf16.mxu0 0
        %1076 = vmatpush1.bf16.msra.mxu0 0
        %1077 = vmatprep.subr.bf16.mxu0 0
        %1078 = vmatpush1.bf16.msra.mxu0 0
        %1079 = vmatprep.subr.bf16.mxu0 0
        %1080 = vmatpush1.bf16.msra.mxu0 0
        %1081 = vmatprep.subr.bf16.mxu0 0
        %1082 = vmatpush1.bf16.msra.mxu0 0
        %1083 = vmatprep.subr.bf16.mxu0 0
        %1084 = vmatpush1.bf16.msra.mxu0 0
        %1085 = vmatprep.subr.bf16.mxu0 0
        %1086 = vmatpush1.bf16.msra.mxu0 0
        %1087 = vmatprep.subr.bf16.mxu0 0
        %1088 = vmatpush1.bf16.msra.mxu0 0
        %1089 = vmatprep.subr.bf16.mxu0 0
        %1090 = vmatpush1.bf16.msra.mxu0 0
        %1091 = vmatprep.subr.bf16.mxu0 0
        %1092 = vmatpush1.bf16.msra.mxu0 0
        %1093 = vmatprep.mubr.bf16.mxu0 0
        %1094 = vmatmul.mubr.bf16.gmra.mrb[0].mxu0 %v413
        %v1095 = vpop.f32.mrb[0].mxu0
        %v1096 = vadd.f32 0.0, %v1095
        %v1097 = vpop.f32.mrb[0].mxu0
        %v1098 = vadd.f32 0.0, %v1097
        %v1099 = vpop.f32.mrb[0].mxu0
        %v1100 = vpop.f32.mrb[0].mxu0
        %1101 = vdwg.mxu0
        %1102 = vmatprep.subr.bf16.mxu0 0
        %1103 = vmatpush1.bf16.msra.mxu0 %v943
        %1104 = vmatprep.subr.bf16.mxu0 0
        %1105 = vmatpush1.bf16.msra.mxu0 %v977
        %1106 = vmatprep.subr.bf16.mxu0 0
        %1107 = vmatpush1.bf16.msra.mxu0 0
        %1108 = vmatprep.subr.bf16.mxu0 0
        %1109 = vmatpush1.bf16.msra.mxu0 0
        %1110 = vmatprep.subr.bf16.mxu0 0
        %1111 = vmatpush1.bf16.msra.mxu0 0
        %1112 = vmatprep.subr.bf16.mxu0 0
        %1113 = vmatpush1.bf16.msra.mxu0 0
        %1114 = vmatprep.subr.bf16.mxu0 0
        %1115 = vmatpush1.bf16.msra.mxu0 0
        %1116 = vmatprep.subr.bf16.mxu0 0
        %1117 = vmatpush1.bf16.msra.mxu0 0
        %1118 = vmatprep.subr.bf16.mxu0 0
        %1119 = vmatpush1.bf16.msra.mxu0 0
        %1120 = vmatprep.subr.bf16.mxu0 0
        %1121 = vmatpush1.bf16.msra.mxu0 0
        %1122 = vmatprep.subr.bf16.mxu0 0
        %1123 = vmatpush1.bf16.msra.mxu0 0
        %1124 = vmatprep.subr.bf16.mxu0 0
        %1125 = vmatpush1.bf16.msra.mxu0 0
        %1126 = vmatprep.subr.bf16.mxu0 0
        %1127 = vmatpush1.bf16.msra.mxu0 0
        %1128 = vmatprep.subr.bf16.mxu0 0
        %1129 = vmatpush1.bf16.msra.mxu0 0
        %1130 = vmatprep.subr.bf16.mxu0 0
        %1131 = vmatpush1.bf16.msra.mxu0 0
        %1132 = vmatprep.subr.bf16.mxu0 0
        %1133 = vmatpush1.bf16.msra.mxu0 0
        %1134 = vmatprep.mubr.bf16.mxu0 0
        %1135 = vmatmul.mubr.bf16.gmra.mrb[0].mxu0 %v413
        %v1136 = vpop.f32.mrb[0].mxu0
        %v1137 = vadd.f32 0.0, %v1136
        %v1138 = vpop.f32.mrb[0].mxu0
        %v1139 = vpop.f32.mrb[0].mxu0
        %v1140 = vpop.f32.mrb[0].mxu0
        %1141 = vdwg.mxu0
        %v1142 = vmax.f32 %v869, %v1014
        %v1143 = vmax.f32 %v870, %v1016
        %v1144 = vmax.f32 %v871, %v1055
        %v1145 = vmax.f32 %v872, %v1057
        %v1146 = vmax.f32 %v873, %v1096
        %v1147 = vmax.f32 %v874, %v1098
        %v1148 = vmax.f32 %v875, %v1137
        %s1149 = scalar_lea.vmem %s300, 336 [#allocation2]
        %v1150 = vld [vmem:[%s1149] sm:$0xff]
        %v1151 = vld [vmem:[%s1149 + $0x8] sm:$0xff]
        %v1152 = vld [vmem:[%s1149 + $0x10] sm:$0xff]
        %v1153 = vld [vmem:[%s1149 + $0x18] sm:$0xf]
        %v1154 = vld [vmem:[%s1149 + $0x1c] sm:$0xff]
        %v1155 = vld [vmem:[%s1149 + $0x24] sm:$0xff]
        %v1156 = vld [vmem:[%s1149 + $0x2c] sm:$0xff]
        %v1157 = vld [vmem:[%s1149 + $0x34] sm:$0xf]
        %v1158 = vld [vmem:[%s1149 + $0x38] sm:$0xff]
        %v1159 = vld [vmem:[%s1149 + $0x40] sm:$0xff]
        %v1160 = vld [vmem:[%s1149 + $0x48] sm:$0xff]
        %v1161 = vld [vmem:[%s1149 + $0x50] sm:$0xf]
        %v1162 = vld [vmem:[%s1149 + $0x54] sm:$0x11]
        %v1163 = vld [vmem:[%s1149 + $0x5c] sm:$0x11]
        %v1164 = vld [vmem:[%s1149 + $0x64] sm:$0x11]
        %v1165 = vld [vmem:[%s1149 + $0x6c] sm:$0x1]
        %v1182 = vunpack.c.l.b16 %v1150
        %v1183 = vunpack.c.h.b16 %v1150
        %v1184 = vunpack.c.l.b16 %v1151
        %v1185 = vunpack.c.h.b16 %v1151
        %v1186 = vunpack.c.l.b16 %v1152
        %v1187 = vunpack.c.h.b16 %v1152
        %v1188 = vunpack.c.l.b16 %v1153
        %v1189 = vunpack.c.l.b16 %v1154
        %v1190 = vunpack.c.h.b16 %v1154
        %v1191 = vunpack.c.l.b16 %v1155
        %v1192 = vunpack.c.h.b16 %v1155
        %v1193 = vunpack.c.l.b16 %v1156
        %v1194 = vunpack.c.h.b16 %v1156
        %v1195 = vunpack.c.l.b16 %v1157
        %v1196 = vunpack.c.l.b16 %v1158
        %v1197 = vunpack.c.h.b16 %v1158
        %v1198 = vunpack.c.l.b16 %v1159
        %v1199 = vunpack.c.h.b16 %v1159
        %v1200 = vunpack.c.l.b16 %v1160
        %v1201 = vunpack.c.h.b16 %v1160
        %v1202 = vunpack.c.l.b16 %v1161
        %v1203 = vunpack.c.l.b16 %v1162
        %v1204 = vunpack.c.h.b16 %v1162
        %v1205 = vunpack.c.l.b16 %v1163
        %v1206 = vunpack.c.h.b16 %v1163
        %v1207 = vunpack.c.l.b16 %v1164
        %v1208 = vunpack.c.h.b16 %v1164
        %v1209 = vunpack.c.l.b16 %v1165
        %v1210 = vpack.c.b16 %v1189, %v1182
        %v1211 = vpack.c.b16 %v1190, %v1183
        %v1212 = vpack.c.b16 %v1191, %v1184
        %v1213 = vpack.c.b16 %v1192, %v1185
        %v1214 = vpack.c.b16 %v1193, %v1186
        %v1215 = vpack.c.b16 %v1194, %v1187
        %v1216 = vpack.c.b16 %v1195, %v1188
        %v1217 = vpack.c.b16 %v1203, %v1196
        %v1218 = vpack.c.b16 %v1204, %v1197
        %v1219 = vpack.c.b16 %v1205, %v1198
        %v1220 = vpack.c.b16 %v1206, %v1199
        %v1221 = vpack.c.b16 %v1207, %v1200
        %v1222 = vpack.c.b16 %v1208, %v1201
        %v1223 = vpack.c.b16 %v1209, %v1202
        %v1232 = vand.u32 %v1217, %v418
        %v1235 = vand.u32 %v1218, %v418
        %v1238 = vand.u32 %v1219, %v418
        %v1241 = vand.u32 %v1220, %v418
        %v1244 = vand.u32 %v1221, %v418
        %v1247 = vand.u32 %v1222, %v418
        %v1250 = vand.u32 %v1223, %v418
        %1252 = vmatprep.subr.bf16.mxu0 %v1211
        %1253 = vmatpush1.bf16.msra.mxu0 %v1210
        %1254 = vmatprep.subr.bf16.mxu0 %v1235
        %1255 = vmatpush1.bf16.msra.mxu0 %v1232
        %1256 = vmatprep.subr.bf16.mxu0 0
        %1257 = vmatpush1.bf16.msra.mxu0 0
        %1258 = vmatprep.subr.bf16.mxu0 0
        %1259 = vmatpush1.bf16.msra.mxu0 0
        %1260 = vmatprep.subr.bf16.mxu0 0
        %1261 = vmatpush1.bf16.msra.mxu0 0
        %1262 = vmatprep.subr.bf16.mxu0 0
        %1263 = vmatpush1.bf16.msra.mxu0 0
        %1264 = vmatprep.subr.bf16.mxu0 0
        %1265 = vmatpush1.bf16.msra.mxu0 0
        %1266 = vmatprep.subr.bf16.mxu0 0
        %1267 = vmatpush1.bf16.msra.mxu0 0
        %1268 = vmatprep.subr.bf16.mxu0 0
        %1269 = vmatpush1.bf16.msra.mxu0 0
        %1270 = vmatprep.subr.bf16.mxu0 0
        %1271 = vmatpush1.bf16.msra.mxu0 0
        %1272 = vmatprep.subr.bf16.mxu0 0
        %1273 = vmatpush1.bf16.msra.mxu0 0
        %1274 = vmatprep.subr.bf16.mxu0 0
        %1275 = vmatpush1.bf16.msra.mxu0 0
        %1276 = vmatprep.subr.bf16.mxu0 0
        %1277 = vmatpush1.bf16.msra.mxu0 0
        %1278 = vmatprep.subr.bf16.mxu0 0
        %1279 = vmatpush1.bf16.msra.mxu0 0
        %1280 = vmatprep.subr.bf16.mxu0 0
        %1281 = vmatpush1.bf16.msra.mxu0 0
        %1282 = vmatprep.subr.bf16.mxu0 0
        %1283 = vmatpush1.bf16.msra.mxu0 0
        %1284 = vmatprep.mubr.bf16.mxu0 0
        %1285 = vmatmul.mubr.bf16.gmra.mrb[0].mxu0 %v413
        %v1286 = vpop.f32.mrb[0].mxu0
        %v1287 = vadd.f32 0.0, %v1286
        %v1288 = vpop.f32.mrb[0].mxu0
        %v1289 = vadd.f32 0.0, %v1288
        %v1290 = vpop.f32.mrb[0].mxu0
        %v1291 = vpop.f32.mrb[0].mxu0
        %1292 = vdwg.mxu0
        %1293 = vmatprep.subr.bf16.mxu0 %v1213
        %1294 = vmatpush1.bf16.msra.mxu0 %v1212
        %1295 = vmatprep.subr.bf16.mxu0 %v1241
        %1296 = vmatpush1.bf16.msra.mxu0 %v1238
        %1297 = vmatprep.subr.bf16.mxu0 0
        %1298 = vmatpush1.bf16.msra.mxu0 0
        %1299 = vmatprep.subr.bf16.mxu0 0
        %1300 = vmatpush1.bf16.msra.mxu0 0
        %1301 = vmatprep.subr.bf16.mxu0 0
        %1302 = vmatpush1.bf16.msra.mxu0 0
        %1303 = vmatprep.subr.bf16.mxu0 0
        %1304 = vmatpush1.bf16.msra.mxu0 0
        %1305 = vmatprep.subr.bf16.mxu0 0
        %1306 = vmatpush1.bf16.msra.mxu0 0
        %1307 = vmatprep.subr.bf16.mxu0 0
        %1308 = vmatpush1.bf16.msra.mxu0 0
        %1309 = vmatprep.subr.bf16.mxu0 0
        %1310 = vmatpush1.bf16.msra.mxu0 0
        %1311 = vmatprep.subr.bf16.mxu0 0
        %1312 = vmatpush1.bf16.msra.mxu0 0
        %1313 = vmatprep.subr.bf16.mxu0 0
        %1314 = vmatpush1.bf16.msra.mxu0 0
        %1315 = vmatprep.subr.bf16.mxu0 0
        %1316 = vmatpush1.bf16.msra.mxu0 0
        %1317 = vmatprep.subr.bf16.mxu0 0
        %1318 = vmatpush1.bf16.msra.mxu0 0
        %1319 = vmatprep.subr.bf16.mxu0 0
        %1320 = vmatpush1.bf16.msra.mxu0 0
        %1321 = vmatprep.subr.bf16.mxu0 0
        %1322 = vmatpush1.bf16.msra.mxu0 0
        %1323 = vmatprep.subr.bf16.mxu0 0
        %1324 = vmatpush1.bf16.msra.mxu0 0
        %1325 = vmatprep.mubr.bf16.mxu0 0
        %1326 = vmatmul.mubr.bf16.gmra.mrb[0].mxu0 %v413
        %v1327 = vpop.f32.mrb[0].mxu0
        %v1328 = vadd.f32 0.0, %v1327
        %v1329 = vpop.f32.mrb[0].mxu0
        %v1330 = vadd.f32 0.0, %v1329
        %v1331 = vpop.f32.mrb[0].mxu0
        %v1332 = vpop.f32.mrb[0].mxu0
        %1333 = vdwg.mxu0
        %1334 = vmatprep.subr.bf16.mxu0 %v1215
        %1335 = vmatpush1.bf16.msra.mxu0 %v1214
        %1336 = vmatprep.subr.bf16.mxu0 %v1247
        %1337 = vmatpush1.bf16.msra.mxu0 %v1244
        %1338 = vmatprep.subr.bf16.mxu0 0
        %1339 = vmatpush1.bf16.msra.mxu0 0
        %1340 = vmatprep.subr.bf16.mxu0 0
        %1341 = vmatpush1.bf16.msra.mxu0 0
        %1342 = vmatprep.subr.bf16.mxu0 0
        %1343 = vmatpush1.bf16.msra.mxu0 0
        %1344 = vmatprep.subr.bf16.mxu0 0
        %1345 = vmatpush1.bf16.msra.mxu0 0
        %1346 = vmatprep.subr.bf16.mxu0 0
        %1347 = vmatpush1.bf16.msra.mxu0 0
        %1348 = vmatprep.subr.bf16.mxu0 0
        %1349 = vmatpush1.bf16.msra.mxu0 0
        %1350 = vmatprep.subr.bf16.mxu0 0
        %1351 = vmatpush1.bf16.msra.mxu0 0
        %1352 = vmatprep.subr.bf16.mxu0 0
        %1353 = vmatpush1.bf16.msra.mxu0 0
        %1354 = vmatprep.subr.bf16.mxu0 0
        %1355 = vmatpush1.bf16.msra.mxu0 0
        %1356 = vmatprep.subr.bf16.mxu0 0
        %1357 = vmatpush1.bf16.msra.mxu0 0
        %1358 = vmatprep.subr.bf16.mxu0 0
        %1359 = vmatpush1.bf16.msra.mxu0 0
        %1360 = vmatprep.subr.bf16.mxu0 0
        %1361 = vmatpush1.bf16.msra.mxu0 0
        %1362 = vmatprep.subr.bf16.mxu0 0
        %1363 = vmatpush1.bf16.msra.mxu0 0
        %1364 = vmatprep.subr.bf16.mxu0 0
        %1365 = vmatpush1.bf16.msra.mxu0 0
        %1366 = vmatprep.mubr.bf16.mxu0 0
        %1367 = vmatmul.mubr.bf16.gmra.mrb[0].mxu0 %v413
        %v1368 = vpop.f32.mrb[0].mxu0
        %v1369 = vadd.f32 0.0, %v1368
        %v1370 = vpop.f32.mrb[0].mxu0
        %v1371 = vadd.f32 0.0, %v1370
        %v1372 = vpop.f32.mrb[0].mxu0
        %v1373 = vpop.f32.mrb[0].mxu0
        %1374 = vdwg.mxu0
        %1375 = vmatprep.subr.bf16.mxu0 0
        %1376 = vmatpush1.bf16.msra.mxu0 %v1216
        %1377 = vmatprep.subr.bf16.mxu0 0
        %1378 = vmatpush1.bf16.msra.mxu0 %v1250
        %1379 = vmatprep.subr.bf16.mxu0 0
        %1380 = vmatpush1.bf16.msra.mxu0 0
        %1381 = vmatprep.subr.bf16.mxu0 0
        %1382 = vmatpush1.bf16.msra.mxu0 0
        %1383 = vmatprep.subr.bf16.mxu0 0
        %1384 = vmatpush1.bf16.msra.mxu0 0
        %1385 = vmatprep.subr.bf16.mxu0 0
        %1386 = vmatpush1.bf16.msra.mxu0 0
        %1387 = vmatprep.subr.bf16.mxu0 0
        %1388 = vmatpush1.bf16.msra.mxu0 0
        %1389 = vmatprep.subr.bf16.mxu0 0
        %1390 = vmatpush1.bf16.msra.mxu0 0
        %1391 = vmatprep.subr.bf16.mxu0 0
        %1392 = vmatpush1.bf16.msra.mxu0 0
        %1393 = vmatprep.subr.bf16.mxu0 0
        %1394 = vmatpush1.bf16.msra.mxu0 0
        %1395 = vmatprep.subr.bf16.mxu0 0
        %1396 = vmatpush1.bf16.msra.mxu0 0
        %1397 = vmatprep.subr.bf16.mxu0 0
        %1398 = vmatpush1.bf16.msra.mxu0 0
        %1399 = vmatprep.subr.bf16.mxu0 0
        %1400 = vmatpush1.bf16.msra.mxu0 0
        %1401 = vmatprep.subr.bf16.mxu0 0
        %1402 = vmatpush1.bf16.msra.mxu0 0
        %1403 = vmatprep.subr.bf16.mxu0 0
        %1404 = vmatpush1.bf16.msra.mxu0 0
        %1405 = vmatprep.subr.bf16.mxu0 0
        %1406 = vmatpush1.bf16.msra.mxu0 0
        %1407 = vmatprep.mubr.bf16.mxu0 0
        %1408 = vmatmul.mubr.bf16.gmra.mrb[0].mxu0 %v413
        %v1409 = vpop.f32.mrb[0].mxu0
        %v1410 = vadd.f32 0.0, %v1409
        %v1411 = vpop.f32.mrb[0].mxu0
        %v1412 = vpop.f32.mrb[0].mxu0
        %v1413 = vpop.f32.mrb[0].mxu0
        %1414 = vdwg.mxu0
        %v1415 = vmax.f32 %v1142, %v1287
        %v1416 = vmax.f32 %v1143, %v1289
        %v1417 = vmax.f32 %v1144, %v1328
        %v1418 = vmax.f32 %v1145, %v1330
        %v1419 = vmax.f32 %v1146, %v1369
        %v1420 = vmax.f32 %v1147, %v1371
        %v1421 = vmax.f32 %v1148, %v1410
        %v1422 = vld [vmem:[%s2] sm:$0x3f]
        %1424 = vset.pattern.permute.xlu0 0
        %1425 = vperm.xlu0 %1424, %v1422
        %v1426 = vpop.permute.xlu0 %1425
        %v1428 = vadd.f32 %v1415, %v1426
        %v1429 = vadd.f32 %v1416, %v1426
        %v1430 = vadd.f32 %v1417, %v1426
        %v1431 = vadd.f32 %v1418, %v1426
        %v1432 = vadd.f32 %v1419, %v1426
        %v1433 = vadd.f32 %v1420, %v1426
        %v1434 = vadd.f32 %v1421, %v1426
        %v1435 = vmax.f32 %v1428, 0.0
        %v1436 = vmax.f32 %v1429, 0.0
        %v1437 = vmax.f32 %v1430, 0.0
        %v1438 = vmax.f32 %v1431, 0.0
        %v1439 = vmax.f32 %v1432, 0.0
        %v1440 = vmax.f32 %v1433, 0.0
        %v1441 = vmax.f32 %v1434, 0.0
        %v1442 = vpack.c.bf16 %v1435, %v1435
        %v1443 = vpack.c.bf16 %v1436, %v1436
        %v1444 = vpack.c.bf16 %v1437, %v1437
        %v1445 = vpack.c.bf16 %v1438, %v1438
        %v1446 = vpack.c.bf16 %v1439, %v1439
        %v1447 = vpack.c.bf16 %v1440, %v1440
        %v1448 = vpack.c.bf16 %v1441, %v1441
        %v1456 = vunpack.c.l.b16 %v1442
        %v1457 = vunpack.c.l.b16 %v1443
        %v1458 = vunpack.c.l.b16 %v1444
        %v1459 = vunpack.c.l.b16 %v1445
        %v1460 = vunpack.c.l.b16 %v1446
        %v1461 = vunpack.c.l.b16 %v1447
        %v1462 = vunpack.c.l.b16 %v1448
        %v1463 = vpack.c.b16 %v1457, %v1456
        %v1464 = vpack.c.b16 %v1459, %v1458
        %v1465 = vpack.c.b16 %v1461, %v1460
        %v1466 = vpack.c.b16 %v1462, %v1462
        %1471 = vst [vmem:[%s326] sm:$0x77] %v1463
        %1472 = vst [vmem:[%s326 + $0x8] sm:$0x77] %v1464
        %1473 = vst [vmem:[%s326 + $0x10] sm:$0x77] %v1465
        %1474 = vst [vmem:[%s326 + $0x18] sm:$0x7] %v1466
        %s1475 = smul.u32 7, %s14
        %p1476 = scmp.lt.s32.totalorder %s1475, 13
        %s1477 = scalar_select %p1476, %s1475, 13
        %s1478 = smul.addr %s1477, 4
        %s1479 = scalar_lea.vmem %s3, %s1478
        // Predicated region
        $region59: #{conv_classifier_forward.3} parent=53 // pred_check
          %p1480 = pneg %p100
        $region60: #{conv_classifier_forward.3} parent=53 // pred_check_branch
          %1482 = sbr.rel (%p1480) target = $region62
        $region61: #{conv_classifier_forward.3} parent=53 // pred_region
          %s1483 = smul.u32 7, %s14
        $region62: #{conv_classifier_forward.3} parent=53 // pred_fallthru
          _
      $region54: #{conv_classifier_forward.3} parent=5 // pred_fallthru
        _
      %p1484 = scmp.le.s32.totalorder 2, %s9
      // Predicated region
      $region63: #{conv_classifier_forward.3} parent=5 // pred_check
        %p1485 = pneg %p1484
      $region64: #{conv_classifier_forward.3} parent=5 // pred_check_branch
        %1487 = sbr.rel (%p1485) target = $region66
      $region65: #{conv_classifier_forward.3} parent=5 // pred_region
        %s1488 = ssub.s32 %s9, 2
        // Predicated region
        $region67: #{conv_classifier_forward.3} parent=65 // pred_check
          %p1489 = pneg %p106
        $region68: #{conv_classifier_forward.3} parent=65 // pred_check_branch
          %1491 = sbr.rel (%p1489) target = $region70
        $region69: #{conv_classifier_forward.3} parent=65 // pred_region
          %s1492 = smul.u32 7, %s15
          %p1493 = scmp.lt.s32.totalorder %s1492, 13
          %s1494 = scalar_select %p1493, %s1492, 13
          %s1495 = smul.addr %s1494, 4
          %s1496 = scalar_lea.vmem %s3, %s1495
        $region70: #{conv_classifier_forward.3} parent=65 // pred_fallthru
          _
      $region66: #{conv_classifier_forward.3} parent=5 // pred_fallthru
        _
    $region6: #{conv_classifier_forward.3} parent=1 // loop_footer
      %s13 = sadd.s32 1, %s9
    $region7: #{conv_classifier_forward.3} parent=1 // loop_footer_branch
      %8 = sbr.rel target = $region3
    $region8: #{conv_classifier_forward.3} parent=1 // loop_exit
      _

// kernel: conv_classifier_forward.4
$region0: #{conv_classifier_forward.4}
  #allocation0 [shape = 'u32[]', space=smem, size = 0x4, offset = 0x4, fixed_abs, tag = 'smem constant byte address 0x4 - core index']
  #allocation1 [shape = 'u32[144,128]{1,0:T(1,128)}', space=vmem, size = 0x12000, scoped, tag = 'internal scratch']
  %s0 = inlined_call_operand.vmem [shape: bf16[4,150,256], index: 0, kind: input, shape index: {}]
  %s1 = inlined_call_operand.vmem [shape: bf16[16,150], index: 1, kind: input, shape index: {}]
  %s2 = inlined_call_operand.vmem [shape: f32[16,1], index: 2, kind: input, shape index: {}]
  %s3 = inlined_call_operand.vmem [shape: bf16[16,256], index: 3, kind: output, shape index: {}]
  %s4 = sld [smem:[#allocation0]]
  $region123: #{conv_classifier_forward.4} parent=0
    _
  %s6 = ssub.s32 1, %s4
  %s7 = scalar_select 0, %s6, %s4
  $region1: #{conv_classifier_forward.4} parent=0
    #allocation2 [shape = 'u8[311296]{0}', space=vmem, size = 0x4c000, scoped, tag = 'input window, operand 0']
    #allocation3 [shape = 'u8[8192]{0}', space=vmem, size = 0x2000, scoped, tag = 'output window, operand 0']
    loop: start=0, step=1, limit=4
    $region2: #{conv_classifier_forward.4} parent=1 // loop_pre_header
      _
    $region3: #{conv_classifier_forward.4} parent=1 // loop_header
      %s9 = sphi 0, %s13
      %p10 = scmp.ge.s32.totalorder %s9, 4
      %s19 = sphi 0, %s21
      %s22 = sphi 0, %s19
      %s23 = sphi 0, %s22
      %s39 = sphi 0, %s23
      %s43 = sphi 0, %s43
      %s45 = sphi 0, %s43
      %s46 = sphi 0, %s45
      %s60 = sphi 0, %s46
      %s64 = sphi 0, %s64
      %s66 = sphi 0, %s64
      %s67 = sphi 0, %s66
      %s81 = sphi 0, %s67
      %s87 = sphi 0, %s89
      %s90 = sphi 0, %s87
      %s91 = sphi 0, %s90
      %s107 = sphi 0, %s91
    $region4: #{conv_classifier_forward.4} parent=1 // loop_header_branch
      %12 = sbr.rel (%p10) target = $region8
    $region5: #{conv_classifier_forward.4} parent=1 // loop_body
      %s14 = ssub.s32 %s9, 1
      %s15 = ssub.s32 %s9, 2
      %s16 = sadd.s32 %s9, 1
      %s17 = ssub.s32 %s9, %s16
      %p18 = scmp.eq.s32.totalorder %s17, 0
      %s20 = sadd.s32 %s19, 1
      %s21 = scalar_select %p18, %s19, %s20
      %p24 = pneg %p18
      %p25 = scmp.eq.s32.totalorder %s9, 1
      %p26 = por %p24, %p25
      %p27 = scmp.ne.s32.totalorder %s19, %s22
      %p28 = scmp.eq.s32.totalorder %s9, 0
      %p29 = por %p27, %p28
      %p30 = scmp.ne.s32.totalorder %s19, %s22
      %p31 = scmp.eq.s32.totalorder %s14, 1
      %p32 = por %p30, %p31
      %p33 = scmp.ne.s32.totalorder %s22, %s23
      %p34 = scmp.eq.s32.totalorder %s14, 0
      %p35 = por %p33, %p34
      %p36 = scmp.ne.s32.totalorder %s22, %s23
      %p37 = scmp.eq.s32.totalorder %s15, 1
      %p38 = por %p36, %p37
      %p40 = scmp.ne.s32.totalorder %s23, %s39
      %p41 = scmp.eq.s32.totalorder %s15, 0
      %p42 = por %p40, %p41
      %s44 = sadd.s32 %s43, 1
      %p47 = scmp.eq.s32.totalorder %s9, 1
      %p48 = scmp.ne.s32.totalorder %s43, %s45
      %p49 = scmp.eq.s32.totalorder %s9, 0
      %p50 = por %p48, %p49
      %p51 = scmp.ne.s32.totalorder %s43, %s45
      %p52 = scmp.eq.s32.totalorder %s14, 1
      %p53 = por %p51, %p52
      %p54 = scmp.ne.s32.totalorder %s45, %s46
      %p55 = scmp.eq.s32.totalorder %s14, 0
      %p56 = por %p54, %p55
      %p57 = scmp.ne.s32.totalorder %s45, %s46
      %p58 = scmp.eq.s32.totalorder %s15, 1
      %p59 = por %p57, %p58
      %p61 = scmp.ne.s32.totalorder %s46, %s60
      %p62 = scmp.eq.s32.totalorder %s15, 0
      %p63 = por %p61, %p62
      %s65 = sadd.s32 %s64, 1
      %p68 = scmp.eq.s32.totalorder %s9, 1
      %p69 = scmp.ne.s32.totalorder %s64, %s66
      %p70 = scmp.eq.s32.totalorder %s9, 0
      %p71 = por %p69, %p70
      %p72 = scmp.ne.s32.totalorder %s64, %s66
      %p73 = scmp.eq.s32.totalorder %s14, 1
      %p74 = por %p72, %p73
      %p75 = scmp.ne.s32.totalorder %s66, %s67
      %p76 = scmp.eq.s32.totalorder %s14, 0
      %p77 = por %p75, %p76
      %p78 = scmp.ne.s32.totalorder %s66, %s67
      %p79 = scmp.eq.s32.totalorder %s15, 1
      %p80 = por %p78, %p79
      %p82 = scmp.ne.s32.totalorder %s67, %s81
      %p83 = scmp.eq.s32.totalorder %s15, 0
      %p84 = por %p82, %p83
      %s85 = ssub.s32 %s9, %s16
      %p86 = scmp.eq.s32.totalorder %s85, 0
      %s88 = sadd.s32 %s87, 1
      %s89 = scalar_select %p86, %s87, %s88
      %p92 = pneg %p86
      %p93 = scmp.eq.s32.totalorder %s9, 1
      %p94 = por %p92, %p93
      %p95 = scmp.ne.s32.totalorder %s87, %s90
      %p96 = scmp.eq.s32.totalorder %s9, 0
      %p97 = por %p95, %p96
      %p98 = scmp.ne.s32.totalorder %s87, %s90
      %p99 = scmp.eq.s32.totalorder %s14, 1
      %p100 = por %p98, %p99
      %p101 = scmp.ne.s32.totalorder %s90, %s91
      %p102 = scmp.eq.s32.totalorder %s14, 0
      %p103 = por %p101, %p102
      %p104 = scmp.ne.s32.totalorder %s90, %s91
      %p105 = scmp.eq.s32.totalorder %s15, 1
      %p106 = por %p104, %p105
      %p108 = scmp.ne.s32.totalorder %s91, %s107
      %p109 = scmp.eq.s32.totalorder %s15, 0
      %p110 = por %p108, %p109
      %p111 = scmp.le.s32.totalorder 1, %s9
      %p112 = scmp.lt.s32.totalorder %s9, 3
      %p113 = pnand %p111, %p112
      %p114 = pneg %p113
      // Predicated region
      $region9: #{conv_classifier_forward.4} parent=5 // pred_check
        _
      $region10: #{conv_classifier_forward.4} parent=5 // pred_check_branch
        %116 = sbr.rel (%p113) target = $region12
      $region11: #{conv_classifier_forward.4} parent=5 // pred_region
        %s117 = ssub.s32 %s9, 1
        // Predicated region
        $region13: #{conv_classifier_forward.4} parent=11 // pred_check
          %p118 = pneg %p56
        $region14: #{conv_classifier_forward.4} parent=11 // pred_check_branch
          %120 = sbr.rel (%p118) target = $region16
        $region15: #{conv_classifier_forward.4} parent=11 // pred_region
          _
        $region16: #{conv_classifier_forward.4} parent=11 // pred_fallthru
          _
        // Predicated region
        $region17: #{conv_classifier_forward.4} parent=11 // pred_check
          %p121 = pneg %p77
        $region18: #{conv_classifier_forward.4} parent=11 // pred_check_branch
          %123 = sbr.rel (%p121) target = $region20
        $region19: #{conv_classifier_forward.4} parent=11 // pred_region
          _
        $region20: #{conv_classifier_forward.4} parent=11 // pred_fallthru
          _
      $region12: #{conv_classifier_forward.4} parent=5 // pred_fallthru
        _
      %p124 = scmp.lt.s32.totalorder %s9, 2
      // Predicated region
      $region21: #{conv_classifier_forward.4} parent=5 // pred_check
        %p125 = pneg %p124
      $region22: #{conv_classifier_forward.4} parent=5 // pred_check_branch
        %127 = sbr.rel (%p125) target = $region24
      $region23: #{conv_classifier_forward.4} parent=5 // pred_region
        // Predicated region
        $region25: #{conv_classifier_forward.4} parent=23 // pred_check
          %p128 = pneg %p29
        $region26: #{conv_classifier_forward.4} parent=23 // pred_check_branch
          %130 = sbr.rel (%p128) target = $region28
        $region27: #{conv_classifier_forward.4} parent=23 // pred_region
          %s131 = sand.u32 %s19, 1
          %s132 = sand.u32 %s19, 1
          %s133 = smul.addr %s132, 304
          %s134 = scalar_lea.vmem [#allocation2], %s133
          %s135 = smul.addr %s9, 4
          %s136 = scalar_lea.vmem %s0, %s135
          // Predicated region
          $region29: #{conv_classifier_forward.4} parent=27 // pred_check
            _
          $region30: #{conv_classifier_forward.4} parent=27 // pred_check_branch
            %138 = sbr.rel (0) target = $region32
          $region31: #{conv_classifier_forward.4} parent=27 // pred_region
            // Predicated region
            $region33: #{conv_classifier_forward.4} parent=31 // pred_check
              _
            $region34: #{conv_classifier_forward.4} parent=31 // pred_check_branch
              %140 = sbr.rel target = $region36
            $region35: #{conv_classifier_forward.4} parent=31 // pred_region
              // Predicated region
              $region48: #{conv_classifier_forward.4} parent=35 // pred_check
                _
              $region49: #{conv_classifier_forward.4} parent=35 // pred_check_branch
                %305 = sbr.rel (0) target = $region51
              $region50: #{conv_classifier_forward.4} parent=35 // pred_region
                loop: start=0, step=1, limit=1
                $region52: #{conv_classifier_forward.4} parent=50 // loop_pre_header
                  _
                $region53: #{conv_classifier_forward.4} parent=50 // loop_header
                  %s307 = sphi 0, %s311
                  %p308 = scmp.ge.s32.totalorder %s307, 1
                  %s312 = sphi %s136, %s136
                  %s313 = sphi %s134, %s134
                $region54: #{conv_classifier_forward.4} parent=50 // loop_header_branch
                  %310 = sbr.rel (%p308) target = $region58
                $region55: #{conv_classifier_forward.4} parent=50 // loop_body
                  _
                $region56: #{conv_classifier_forward.4} parent=50 // loop_footer
                  %s311 = sadd.s32 1, %s307
                $region57: #{conv_classifier_forward.4} parent=50 // loop_footer_branch
                  %306 = sbr.rel target = $region53
                $region58: #{conv_classifier_forward.4} parent=50 // loop_exit
                  _
                loop: start=0, step=1, limit=1
                $region59: #{conv_classifier_forward.4} parent=50 // loop_pre_header
                  _
                $region60: #{conv_classifier_forward.4} parent=50 // loop_header
                  %s316 = sphi 0, %s320
                  %p317 = scmp.ge.s32.totalorder %s316, 1
                  %s321 = sphi %s136, %s136
                  %s322 = sphi %s134, %s134
                $region61: #{conv_classifier_forward.4} parent=50 // loop_header_branch
                  %319 = sbr.rel (%p317) target = $region65
                $region62: #{conv_classifier_forward.4} parent=50 // loop_body
                  %v323 = vld [vmem:[%s321] sm:$0xf]
                  %324 = vst [vmem:[%s322] sm:$0xf] %v323
                  %v325 = vld [vmem:[%s321 + $0x8] sm:$0xf]
                  %326 = vst [vmem:[%s322 + $0x4] sm:$0xf] %v325
                  %v327 = vld [vmem:[%s321 + $0x10] sm:$0xf]
                  %328 = vst [vmem:[%s322 + $0x8] sm:$0xf] %v327
                  %v329 = vld [vmem:[%s321 + $0x18] sm:$0xf]
                  %330 = vst [vmem:[%s322 + $0xc] sm:$0xf] %v329
                  %v331 = vld [vmem:[%s321 + $0x20] sm:$0xf]
                  %332 = vst [vmem:[%s322 + $0x10] sm:$0xf] %v331
                  %v333 = vld [vmem:[%s321 + $0x28] sm:$0xf]
                  %334 = vst [vmem:[%s322 + $0x14] sm:$0xf] %v333
                  %v335 = vld [vmem:[%s321 + $0x30] sm:$0xf]
                  %336 = vst [vmem:[%s322 + $0x18] sm:$0xf] %v335
                  %v337 = vld [vmem:[%s321 + $0x38] sm:$0xf]
                  %338 = vst [vmem:[%s322 + $0x1c] sm:$0xf] %v337
                  %v339 = vld [vmem:[%s321 + $0x40] sm:$0xf]
                  %340 = vst [vmem:[%s322 + $0x20] sm:$0xf] %v339
                  %v341 = vld [vmem:[%s321 + $0x48] sm:$0xf]
                  %342 = vst [vmem:[%s322 + $0x24] sm:$0xf] %v341
                  %v343 = vld [vmem:[%s321 + $0x50] sm:$0xf]
                  %344 = vst [vmem:[%s322 + $0x28] sm:$0xf] %v343
                  %v345 = vld [vmem:[%s321 + $0x58] sm:$0xf]
                  %346 = vst [vmem:[%s322 + $0x2c] sm:$0xf] %v345
                  %v347 = vld [vmem:[%s321 + $0x60] sm:$0xf]
                  %348 = vst [vmem:[%s322 + $0x30] sm:$0xf] %v347
                  %v349 = vld [vmem:[%s321 + $0x68] sm:$0xf]
                  %350 = vst [vmem:[%s322 + $0x34] sm:$0xf] %v349
                  %v351 = vld [vmem:[%s321 + $0x70] sm:$0xf]
                  %352 = vst [vmem:[%s322 + $0x38] sm:$0xf] %v351
                  %v353 = vld [vmem:[%s321 + $0x78] sm:$0xf]
                  %354 = vst [vmem:[%s322 + $0x3c] sm:$0xf] %v353
                  %v355 = vld [vmem:[%s321 + $0x80] sm:$0xf]
                  %356 = vst [vmem:[%s322 + $0x40] sm:$0xf] %v355
                  %v357 = vld [vmem:[%s321 + $0x88] sm:$0xf]
                  %358 = vst [vmem:[%s322 + $0x44] sm:$0xf] %v357
                  %v359 = vld [vmem:[%s321 + $0x90] sm:$0xf]
                  %360 = vst [vmem:[%s322 + $0x48] sm:$0xf] %v359
                  %v361 = vld [vmem:[%s321 + $0x98] sm:$0xf]
                  %362 = vst [vmem:[%s322 + $0x4c] sm:$0xf] %v361
                  %v363 = vld [vmem:[%s321 + $0xa0] sm:$0xf]
                  %364 = vst [vmem:[%s322 + $0x50] sm:$0xf] %v363
                  %v365 = vld [vmem:[%s321 + $0xa8] sm:$0xf]
                  %366 = vst [vmem:[%s322 + $0x54] sm:$0xf] %v365
                  %v367 = vld [vmem:[%s321 + $0xb0] sm:$0xf]
                  %368 = vst [vmem:[%s322 + $0x58] sm:$0xf] %v367
                  %v369 = vld [vmem:[%s321 + $0xb8] sm:$0xf]
                  %370 = vst [vmem:[%s322 + $0x5c] sm:$0xf] %v369
                  %v371 = vld [vmem:[%s321 + $0xc0] sm:$0xf]
                  %372 = vst [vmem:[%s322 + $0x60] sm:$0xf] %v371
                  %v373 = vld [vmem:[%s321 + $0xc8] sm:$0xf]
                  %374 = vst [vmem:[%s322 + $0x64] sm:$0xf] %v373
                  %v375 = vld [vmem:[%s321 + $0xd0] sm:$0xf]
                  %376 = vst [vmem:[%s322 + $0x68] sm:$0xf] %v375
                  %v377 = vld [vmem:[%s321 + $0xd8] sm:$0xf]
                  %378 = vst [vmem:[%s322 + $0x6c] sm:$0xf] %v377
                  %v379 = vld [vmem:[%s321 + $0xe0] sm:$0xf]
                  %380 = vst [vmem:[%s322 + $0x70] sm:$0xf] %v379
                  %v381 = vld [vmem:[%s321 + $0xe8] sm:$0xf]
                  %382 = vst [vmem:[%s322 + $0x74] sm:$0xf] %v381
                  %v383 = vld [vmem:[%s321 + $0xf0] sm:$0xf]
                  %384 = vst [vmem:[%s322 + $0x78] sm:$0xf] %v383
                  %v385 = vld [vmem:[%s321 + $0xf8] sm:$0xf]
                  %386 = vst [vmem:[%s322 + $0x7c] sm:$0xf] %v385
                  %v387 = vld [vmem:[%s321 + $0x100] sm:$0xf]
                  %388 = vst [vmem:[%s322 + $0x80] sm:$0xf] %v387
                  %v389 = vld [vmem:[%s321 + $0x108] sm:$0xf]
                  %390 = vst [vmem:[%s322 + $0x84] sm:$0xf] %v389
                  %v391 = vld [vmem:[%s321 + $0x110] sm:$0xf]
                  %392 = vst [vmem:[%s322 + $0x88] sm:$0xf] %v391
                  %v393 = vld [vmem:[%s321 + $0x118] sm:$0xf]
                  %394 = vst [vmem:[%s322 + $0x8c] sm:$0xf] %v393
                  %v395 = vld [vmem:[%s321 + $0x120] sm:$0xf]
                  %396 = vst [vmem:[%s322 + $0x90] sm:$0xf] %v395
                  %v397 = vld [vmem:[%s321 + $0x128] sm:$0xf]
                  %398 = vst [vmem:[%s322 + $0x94] sm:$0xf] %v397
                  %v399 = vld [vmem:[%s321 + $0x130] sm:$0xf]
                  %400 = vst [vmem:[%s322 + $0x98] sm:$0xf] %v399
                  %v401 = vld [vmem:[%s321 + $0x138] sm:$0xf]
                  %402 = vst [vmem:[%s322 + $0x9c] sm:$0xf] %v401
                  %v403 = vld [vmem:[%s321 + $0x140] sm:$0xf]
                  %404 = vst [vmem:[%s322 + $0xa0] sm:$0xf] %v403
                  %v405 = vld [vmem:[%s321 + $0x148] sm:$0xf]
                  %406 = vst [vmem:[%s322 + $0xa4] sm:$0xf] %v405
                  %v407 = vld [vmem:[%s321 + $0x150] sm:$0xf]
                  %408 = vst [vmem:[%s322 + $0xa8] sm:$0xf] %v407
                  %v409 = vld [vmem:[%s321 + $0x158] sm:$0xf]
                  %410 = vst [vmem:[%s322 + $0xac] sm:$0xf] %v409
                  %v411 = vld [vmem:[%s321 + $0x160] sm:$0xf]
                  %412 = vst [vmem:[%s322 + $0xb0] sm:$0xf] %v411
                  %v413 = vld [vmem:[%s321 + $0x168] sm:$0xf]
                  %414 = vst [vmem:[%s322 + $0xb4] sm:$0xf] %v413
                  %v415 = vld [vmem:[%s321 + $0x170] sm:$0xf]
                  %416 = vst [vmem:[%s322 + $0xb8] sm:$0xf] %v415
                  %v417 = vld [vmem:[%s321 + $0x178] sm:$0xf]
                  %418 = vst [vmem:[%s322 + $0xbc] sm:$0xf] %v417
                  %v419 = vld [vmem:[%s321 + $0x180] sm:$0xf]
                  %420 = vst [vmem:[%s322 + $0xc0] sm:$0xf] %v419
                  %v421 = vld [vmem:[%s321 + $0x188] sm:$0xf]
                  %422 = vst [vmem:[%s322 + $0xc4] sm:$0xf] %v421
                  %v423 = vld [vmem:[%s321 + $0x190] sm:$0xf]
                  %424 = vst [vmem:[%s322 + $0xc8] sm:$0xf] %v423
                  %v425 = vld [vmem:[%s321 + $0x198] sm:$0xf]
                  %426 = vst [vmem:[%s322 + $0xcc] sm:$0xf] %v425
                  %v427 = vld [vmem:[%s321 + $0x1a0] sm:$0xf]
                  %428 = vst [vmem:[%s322 + $0xd0] sm:$0xf] %v427
                  %v429 = vld [vmem:[%s321 + $0x1a8] sm:$0xf]
                  %430 = vst [vmem:[%s322 + $0xd4] sm:$0xf] %v429
                  %v431 = vld [vmem:[%s321 + $0x1b0] sm:$0xf]
                  %432 = vst [vmem:[%s322 + $0xd8] sm:$0xf] %v431
                  %v433 = vld [vmem:[%s321 + $0x1b8] sm:$0xf]
                  %434 = vst [vmem:[%s322 + $0xdc] sm:$0xf] %v433
                  %v435 = vld [vmem:[%s321 + $0x1c0] sm:$0xf]
                  %436 = vst [vmem:[%s322 + $0xe0] sm:$0xf] %v435
                  %v437 = vld [vmem:[%s321 + $0x1c8] sm:$0xf]
                  %438 = vst [vmem:[%s322 + $0xe4] sm:$0xf] %v437
                  %v439 = vld [vmem:[%s321 + $0x1d0] sm:$0xf]
                  %440 = vst [vmem:[%s322 + $0xe8] sm:$0xf] %v439
                  %v441 = vld [vmem:[%s321 + $0x1d8] sm:$0xf]
                  %442 = vst [vmem:[%s322 + $0xec] sm:$0xf] %v441
                  %v443 = vld [vmem:[%s321 + $0x1e0] sm:$0xf]
                  %444 = vst [vmem:[%s322 + $0xf0] sm:$0xf] %v443
                  %v445 = vld [vmem:[%s321 + $0x1e8] sm:$0xf]
                  %446 = vst [vmem:[%s322 + $0xf4] sm:$0xf] %v445
                  %v447 = vld [vmem:[%s321 + $0x1f0] sm:$0xf]
                  %448 = vst [vmem:[%s322 + $0xf8] sm:$0xf] %v447
                  %v449 = vld [vmem:[%s321 + $0x1f8] sm:$0xf]
                  %450 = vst [vmem:[%s322 + $0xfc] sm:$0xf] %v449
                  %v451 = vld [vmem:[%s321 + $0x200] sm:$0xf]
                  %452 = vst [vmem:[%s322 + $0x100] sm:$0xf] %v451
                  %v453 = vld [vmem:[%s321 + $0x208] sm:$0xf]
                  %454 = vst [vmem:[%s322 + $0x104] sm:$0xf] %v453
                  %v455 = vld [vmem:[%s321 + $0x210] sm:$0xf]
                  %456 = vst [vmem:[%s322 + $0x108] sm:$0xf] %v455
                  %v457 = vld [vmem:[%s321 + $0x218] sm:$0xf]
                  %458 = vst [vmem:[%s322 + $0x10c] sm:$0xf] %v457
                  %v459 = vld [vmem:[%s321 + $0x220] sm:$0xf]
                  %460 = vst [vmem:[%s322 + $0x110] sm:$0xf] %v459
                  %v461 = vld [vmem:[%s321 + $0x228] sm:$0xf]
                  %462 = vst [vmem:[%s322 + $0x114] sm:$0xf] %v461
                  %v463 = vld [vmem:[%s321 + $0x230] sm:$0xf]
                  %464 = vst [vmem:[%s322 + $0x118] sm:$0xf] %v463
                  %v465 = vld [vmem:[%s321 + $0x238] sm:$0xf]
                  %466 = vst [vmem:[%s322 + $0x11c] sm:$0xf] %v465
                  %v467 = vld [vmem:[%s321 + $0x240] sm:$0xf]
                  %468 = vst [vmem:[%s322 + $0x120] sm:$0xf] %v467
                  %v469 = vld [vmem:[%s321 + $0x248] sm:$0xf]
                  %470 = vst [vmem:[%s322 + $0x124] sm:$0xf] %v469
                  %v471 = vld [vmem:[%s321 + $0x250] sm:$0xf]
                  %472 = vst [vmem:[%s322 + $0x128] sm:$0xf] %v471
                  %v473 = vld [vmem:[%s321 + $0x258] sm:$0xf]
                  %474 = vst [vmem:[%s322 + $0x12c] sm:$0xf] %v473
                $region63: #{conv_classifier_forward.4} parent=50 // loop_footer
                  %s320 = sadd.s32 1, %s316
                $region64: #{conv_classifier_forward.4} parent=50 // loop_footer_branch
                  %315 = sbr.rel target = $region60
                $region65: #{conv_classifier_forward.4} parent=50 // loop_exit
                  _
              $region51: #{conv_classifier_forward.4} parent=35 // pred_fallthru
                _
            $region36: #{conv_classifier_forward.4} parent=31 // pred_fallthru
              _
            // Predicated region
            $region37: #{conv_classifier_forward.4} parent=31 // pred_check
              _
            $region38: #{conv_classifier_forward.4} parent=31 // pred_check_branch
              %142 = sbr.rel (0) target = $region40
            $region39: #{conv_classifier_forward.4} parent=31 // pred_region
              loop: start=0, step=1, limit=1
              $region41: #{conv_classifier_forward.4} parent=39 // loop_pre_header
                _
              $region42: #{conv_classifier_forward.4} parent=39 // loop_header
                %s145 = sphi 0, %s149
                %p146 = scmp.ge.s32.totalorder %s145, 1
                %s150 = sphi %s136, %s136
                %s151 = sphi %s134, %s134
              $region43: #{conv_classifier_forward.4} parent=39 // loop_header_branch
                %148 = sbr.rel (%p146) target = $region47
              $region44: #{conv_classifier_forward.4} parent=39 // loop_body
                %v152 = vld [vmem:[%s150] sm:$0xf]
                %153 = vst [vmem:[%s151] sm:$0xf] %v152
                %v154 = vld [vmem:[%s150 + $0x8] sm:$0xf]
                %155 = vst [vmem:[%s151 + $0x4] sm:$0xf] %v154
                %v156 = vld [vmem:[%s150 + $0x10] sm:$0xf]
                %157 = vst [vmem:[%s151 + $0x8] sm:$0xf] %v156
                %v158 = vld [vmem:[%s150 + $0x18] sm:$0xf]
                %159 = vst [vmem:[%s151 + $0xc] sm:$0xf] %v158
                %v160 = vld [vmem:[%s150 + $0x20] sm:$0xf]
                %161 = vst [vmem:[%s151 + $0x10] sm:$0xf] %v160
                %v162 = vld [vmem:[%s150 + $0x28] sm:$0xf]
                %163 = vst [vmem:[%s151 + $0x14] sm:$0xf] %v162
                %v164 = vld [vmem:[%s150 + $0x30] sm:$0xf]
                %165 = vst [vmem:[%s151 + $0x18] sm:$0xf] %v164
                %v166 = vld [vmem:[%s150 + $0x38] sm:$0xf]
                %167 = vst [vmem:[%s151 + $0x1c] sm:$0xf] %v166
                %v168 = vld [vmem:[%s150 + $0x40] sm:$0xf]
                %169 = vst [vmem:[%s151 + $0x20] sm:$0xf] %v168
                %v170 = vld [vmem:[%s150 + $0x48] sm:$0xf]
                %171 = vst [vmem:[%s151 + $0x24] sm:$0xf] %v170
                %v172 = vld [vmem:[%s150 + $0x50] sm:$0xf]
                %173 = vst [vmem:[%s151 + $0x28] sm:$0xf] %v172
                %v174 = vld [vmem:[%s150 + $0x58] sm:$0xf]
                %175 = vst [vmem:[%s151 + $0x2c] sm:$0xf] %v174
                %v176 = vld [vmem:[%s150 + $0x60] sm:$0xf]
                %177 = vst [vmem:[%s151 + $0x30] sm:$0xf] %v176
                %v178 = vld [vmem:[%s150 + $0x68] sm:$0xf]
                %179 = vst [vmem:[%s151 + $0x34] sm:$0xf] %v178
                %v180 = vld [vmem:[%s150 + $0x70] sm:$0xf]
                %181 = vst [vmem:[%s151 + $0x38] sm:$0xf] %v180
                %v182 = vld [vmem:[%s150 + $0x78] sm:$0xf]
                %183 = vst [vmem:[%s151 + $0x3c] sm:$0xf] %v182
                %v184 = vld [vmem:[%s150 + $0x80] sm:$0xf]
                %185 = vst [vmem:[%s151 + $0x40] sm:$0xf] %v184
                %v186 = vld [vmem:[%s150 + $0x88] sm:$0xf]
                %187 = vst [vmem:[%s151 + $0x44] sm:$0xf] %v186
                %v188 = vld [vmem:[%s150 + $0x90] sm:$0xf]
                %189 = vst [vmem:[%s151 + $0x48] sm:$0xf] %v188
                %v190 = vld [vmem:[%s150 + $0x98] sm:$0xf]
                %191 = vst [vmem:[%s151 + $0x4c] sm:$0xf] %v190
                %v192 = vld [vmem:[%s150 + $0xa0] sm:$0xf]
                %193 = vst [vmem:[%s151 + $0x50] sm:$0xf] %v192
                %v194 = vld [vmem:[%s150 + $0xa8] sm:$0xf]
                %195 = vst [vmem:[%s151 + $0x54] sm:$0xf] %v194
                %v196 = vld [vmem:[%s150 + $0xb0] sm:$0xf]
                %197 = vst [vmem:[%s151 + $0x58] sm:$0xf] %v196
                %v198 = vld [vmem:[%s150 + $0xb8] sm:$0xf]
                %199 = vst [vmem:[%s151 + $0x5c] sm:$0xf] %v198
                %v200 = vld [vmem:[%s150 + $0xc0] sm:$0xf]
                %201 = vst [vmem:[%s151 + $0x60] sm:$0xf] %v200
                %v202 = vld [vmem:[%s150 + $0xc8] sm:$0xf]
                %203 = vst [vmem:[%s151 + $0x64] sm:$0xf] %v202
                %v204 = vld [vmem:[%s150 + $0xd0] sm:$0xf]
                %205 = vst [vmem:[%s151 + $0x68] sm:$0xf] %v204
                %v206 = vld [vmem:[%s150 + $0xd8] sm:$0xf]
                %207 = vst [vmem:[%s151 + $0x6c] sm:$0xf] %v206
                %v208 = vld [vmem:[%s150 + $0xe0] sm:$0xf]
                %209 = vst [vmem:[%s151 + $0x70] sm:$0xf] %v208
                %v210 = vld [vmem:[%s150 + $0xe8] sm:$0xf]
                %211 = vst [vmem:[%s151 + $0x74] sm:$0xf] %v210
                %v212 = vld [vmem:[%s150 + $0xf0] sm:$0xf]
                %213 = vst [vmem:[%s151 + $0x78] sm:$0xf] %v212
                %v214 = vld [vmem:[%s150 + $0xf8] sm:$0xf]
                %215 = vst [vmem:[%s151 + $0x7c] sm:$0xf] %v214
                %v216 = vld [vmem:[%s150 + $0x100] sm:$0xf]
                %217 = vst [vmem:[%s151 + $0x80] sm:$0xf] %v216
                %v218 = vld [vmem:[%s150 + $0x108] sm:$0xf]
                %219 = vst [vmem:[%s151 + $0x84] sm:$0xf] %v218
                %v220 = vld [vmem:[%s150 + $0x110] sm:$0xf]
                %221 = vst [vmem:[%s151 + $0x88] sm:$0xf] %v220
                %v222 = vld [vmem:[%s150 + $0x118] sm:$0xf]
                %223 = vst [vmem:[%s151 + $0x8c] sm:$0xf] %v222
                %v224 = vld [vmem:[%s150 + $0x120] sm:$0xf]
                %225 = vst [vmem:[%s151 + $0x90] sm:$0xf] %v224
                %v226 = vld [vmem:[%s150 + $0x128] sm:$0xf]
                %227 = vst [vmem:[%s151 + $0x94] sm:$0xf] %v226
                %v228 = vld [vmem:[%s150 + $0x130] sm:$0xf]
                %229 = vst [vmem:[%s151 + $0x98] sm:$0xf] %v228
                %v230 = vld [vmem:[%s150 + $0x138] sm:$0xf]
                %231 = vst [vmem:[%s151 + $0x9c] sm:$0xf] %v230
                %v232 = vld [vmem:[%s150 + $0x140] sm:$0xf]
                %233 = vst [vmem:[%s151 + $0xa0] sm:$0xf] %v232
                %v234 = vld [vmem:[%s150 + $0x148] sm:$0xf]
                %235 = vst [vmem:[%s151 + $0xa4] sm:$0xf] %v234
                %v236 = vld [vmem:[%s150 + $0x150] sm:$0xf]
                %237 = vst [vmem:[%s151 + $0xa8] sm:$0xf] %v236
                %v238 = vld [vmem:[%s150 + $0x158] sm:$0xf]
                %239 = vst [vmem:[%s151 + $0xac] sm:$0xf] %v238
                %v240 = vld [vmem:[%s150 + $0x160] sm:$0xf]
                %241 = vst [vmem:[%s151 + $0xb0] sm:$0xf] %v240
                %v242 = vld [vmem:[%s150 + $0x168] sm:$0xf]
                %243 = vst [vmem:[%s151 + $0xb4] sm:$0xf] %v242
                %v244 = vld [vmem:[%s150 + $0x170] sm:$0xf]
                %245 = vst [vmem:[%s151 + $0xb8] sm:$0xf] %v244
                %v246 = vld [vmem:[%s150 + $0x178] sm:$0xf]
                %247 = vst [vmem:[%s151 + $0xbc] sm:$0xf] %v246
                %v248 = vld [vmem:[%s150 + $0x180] sm:$0xf]
                %249 = vst [vmem:[%s151 + $0xc0] sm:$0xf] %v248
                %v250 = vld [vmem:[%s150 + $0x188] sm:$0xf]
                %251 = vst [vmem:[%s151 + $0xc4] sm:$0xf] %v250
                %v252 = vld [vmem:[%s150 + $0x190] sm:$0xf]
                %253 = vst [vmem:[%s151 + $0xc8] sm:$0xf] %v252
                %v254 = vld [vmem:[%s150 + $0x198] sm:$0xf]
                %255 = vst [vmem:[%s151 + $0xcc] sm:$0xf] %v254
                %v256 = vld [vmem:[%s150 + $0x1a0] sm:$0xf]
                %257 = vst [vmem:[%s151 + $0xd0] sm:$0xf] %v256
                %v258 = vld [vmem:[%s150 + $0x1a8] sm:$0xf]
                %259 = vst [vmem:[%s151 + $0xd4] sm:$0xf] %v258
                %v260 = vld [vmem:[%s150 + $0x1b0] sm:$0xf]
                %261 = vst [vmem:[%s151 + $0xd8] sm:$0xf] %v260
                %v262 = vld [vmem:[%s150 + $0x1b8] sm:$0xf]
                %263 = vst [vmem:[%s151 + $0xdc] sm:$0xf] %v262
                %v264 = vld [vmem:[%s150 + $0x1c0] sm:$0xf]
                %265 = vst [vmem:[%s151 + $0xe0] sm:$0xf] %v264
                %v266 = vld [vmem:[%s150 + $0x1c8] sm:$0xf]
                %267 = vst [vmem:[%s151 + $0xe4] sm:$0xf] %v266
                %v268 = vld [vmem:[%s150 + $0x1d0] sm:$0xf]
                %269 = vst [vmem:[%s151 + $0xe8] sm:$0xf] %v268
                %v270 = vld [vmem:[%s150 + $0x1d8] sm:$0xf]
                %271 = vst [vmem:[%s151 + $0xec] sm:$0xf] %v270
                %v272 = vld [vmem:[%s150 + $0x1e0] sm:$0xf]
                %273 = vst [vmem:[%s151 + $0xf0] sm:$0xf] %v272
                %v274 = vld [vmem:[%s150 + $0x1e8] sm:$0xf]
                %275 = vst [vmem:[%s151 + $0xf4] sm:$0xf] %v274
                %v276 = vld [vmem:[%s150 + $0x1f0] sm:$0xf]
                %277 = vst [vmem:[%s151 + $0xf8] sm:$0xf] %v276
                %v278 = vld [vmem:[%s150 + $0x1f8] sm:$0xf]
                %279 = vst [vmem:[%s151 + $0xfc] sm:$0xf] %v278
                %v280 = vld [vmem:[%s150 + $0x200] sm:$0xf]
                %281 = vst [vmem:[%s151 + $0x100] sm:$0xf] %v280
                %v282 = vld [vmem:[%s150 + $0x208] sm:$0xf]
                %283 = vst [vmem:[%s151 + $0x104] sm:$0xf] %v282
                %v284 = vld [vmem:[%s150 + $0x210] sm:$0xf]
                %285 = vst [vmem:[%s151 + $0x108] sm:$0xf] %v284
                %v286 = vld [vmem:[%s150 + $0x218] sm:$0xf]
                %287 = vst [vmem:[%s151 + $0x10c] sm:$0xf] %v286
                %v288 = vld [vmem:[%s150 + $0x220] sm:$0xf]
                %289 = vst [vmem:[%s151 + $0x110] sm:$0xf] %v288
                %v290 = vld [vmem:[%s150 + $0x228] sm:$0xf]
                %291 = vst [vmem:[%s151 + $0x114] sm:$0xf] %v290
                %v292 = vld [vmem:[%s150 + $0x230] sm:$0xf]
                %293 = vst [vmem:[%s151 + $0x118] sm:$0xf] %v292
                %v294 = vld [vmem:[%s150 + $0x238] sm:$0xf]
                %295 = vst [vmem:[%s151 + $0x11c] sm:$0xf] %v294
                %v296 = vld [vmem:[%s150 + $0x240] sm:$0xf]
                %297 = vst [vmem:[%s151 + $0x120] sm:$0xf] %v296
                %v298 = vld [vmem:[%s150 + $0x248] sm:$0xf]
                %299 = vst [vmem:[%s151 + $0x124] sm:$0xf] %v298
                %v300 = vld [vmem:[%s150 + $0x250] sm:$0xf]
                %301 = vst [vmem:[%s151 + $0x128] sm:$0xf] %v300
                %v302 = vld [vmem:[%s150 + $0x258] sm:$0xf]
                %303 = vst [vmem:[%s151 + $0x12c] sm:$0xf] %v302
              $region45: #{conv_classifier_forward.4} parent=39 // loop_footer
                %s149 = sadd.s32 1, %s145
              $region46: #{conv_classifier_forward.4} parent=39 // loop_footer_branch
                %144 = sbr.rel target = $region42
              $region47: #{conv_classifier_forward.4} parent=39 // loop_exit
                _
            $region40: #{conv_classifier_forward.4} parent=31 // pred_fallthru
              _
          $region32: #{conv_classifier_forward.4} parent=27 // pred_fallthru
            _
          %475 = vnop
        $region28: #{conv_classifier_forward.4} parent=23 // pred_fallthru
          _
      $region24: #{conv_classifier_forward.4} parent=5 // pred_fallthru
        _
      %p476 = scmp.le.s32.totalorder 1, %s9
      %p477 = scmp.lt.s32.totalorder %s9, 3
      %p478 = pnand %p476, %p477
      %p479 = pneg %p478
      // Predicated region
      $region66: #{conv_classifier_forward.4} parent=5 // pred_check
        _
      $region67: #{conv_classifier_forward.4} parent=5 // pred_check_branch
        %481 = sbr.rel (%p478) target = $region69
      $region68: #{conv_classifier_forward.4} parent=5 // pred_region
        %s482 = ssub.s32 %s9, 1
        %s483 = sand.u32 %s22, 1
        %s484 = sand.u32 %s22, 1
        %s485 = smul.addr %s484, 304
        %s486 = scalar_lea.vmem [#allocation2], %s485
        // Predicated region
        $region70: #{conv_classifier_forward.4} parent=68 // pred_check
          %p487 = pneg %p35
        $region71: #{conv_classifier_forward.4} parent=68 // pred_check_branch
          %489 = sbr.rel (%p487) target = $region73
        $region72: #{conv_classifier_forward.4} parent=68 // pred_region
          _
        $region73: #{conv_classifier_forward.4} parent=68 // pred_fallthru
          _
        %s490 = sand.u32 %s22, 1
        %s491 = sand.u32 %s22, 1
        %s492 = smul.addr %s491, 304
        %s493 = scalar_lea.vmem [#allocation2], %s492
        %p494 = pneg %p35
        %p495 = pneg %p32
        %p496 = pneg %p56
        %p497 = pneg %p53
        %p498 = pneg %p77
        %p499 = pneg %p74
        %p500 = pneg %p103
        %p501 = pneg %p100
        %s502 = sand.u32 %s90, 1
        %s503 = sand.u32 %s90, 1
        %s504 = smul.addr %s503, 8
        %s505 = scalar_lea.vmem [#allocation3], %s504
        %v507 = vld [vmem:[%s1] sm:$0xff]
        %v508 = vld [vmem:[%s1 + $0x8] sm:$0xff]
        %v509 = vld [vmem:[%s486] sm:$0xf]
        %v510 = vld [vmem:[%s486 + $0x4] sm:$0xf]
        %v511 = vld [vmem:[%s486 + $0x8] sm:$0xf]
        %v512 = vld [vmem:[%s486 + $0xc] sm:$0xf]
        %v513 = vld [vmem:[%s486 + $0x10] sm:$0xf]
        %v514 = vld [vmem:[%s486 + $0x14] sm:$0xf]
        %v515 = vld [vmem:[%s486 + $0x18] sm:$0xf]
        %v516 = vld [vmem:[%s486 + $0x1c] sm:$0xf]
        %v517 = vld [vmem:[%s486 + $0x20] sm:$0xf]
        %v518 = vld [vmem:[%s486 + $0x24] sm:$0xf]
        %v519 = vld [vmem:[%s486 + $0x28] sm:$0xf]
        %v520 = vld [vmem:[%s486 + $0x2c] sm:$0xf]
        %v521 = vld [vmem:[%s486 + $0x30] sm:$0xf]
        %v522 = vld [vmem:[%s486 + $0x34] sm:$0xf]
        %v523 = vld [vmem:[%s486 + $0x38] sm:$0xf]
        %v524 = vld [vmem:[%s486 + $0x3c] sm:$0xf]
        %v525 = vld [vmem:[%s486 + $0x40] sm:$0xf]
        %v526 = vld [vmem:[%s486 + $0x44] sm:$0xf]
        %v527 = vld [vmem:[%s486 + $0x48] sm:$0x7]
        %v530 = vunpack.c.l.b16 %v507
        %v531 = vunpack.c.h.b16 %v507
        %v532 = vunpack.c.l.b16 %v508
        %v533 = vunpack.c.h.b16 %v508
        %v534 = vpack.c.b16 %v532, %v530
        %v535 = vpack.c.b16 %v533, %v531
        %v556 = vunpack.c.l.b16 %v509
        %v557 = vunpack.c.l.b16 %v510
        %v558 = vunpack.c.l.b16 %v511
        %v559 = vunpack.c.l.b16 %v512
        %v560 = vunpack.c.l.b16 %v513
        %v561 = vunpack.c.l.b16 %v514
        %v562 = vunpack.c.l.b16 %v515
        %v563 = vunpack.c.l.b16 %v516
        %v564 = vunpack.c.l.b16 %v517
        %v565 = vunpack.c.l.b16 %v518
        %v566 = vunpack.c.l.b16 %v519
        %v567 = vunpack.c.l.b16 %v520
        %v568 = vunpack.c.l.b16 %v521
        %v569 = vunpack.c.l.b16 %v522
        %v570 = vunpack.c.l.b16 %v523
        %v571 = vunpack.c.l.b16 %v524
        %v572 = vunpack.c.l.b16 %v525
        %v573 = vunpack.c.l.b16 %v526
        %v574 = vunpack.c.l.b16 %v527
        %v575 = vpack.c.b16 %v557, %v556
        %v576 = vpack.c.b16 %v559, %v558
        %v577 = vpack.c.b16 %v561, %v560
        %v578 = vpack.c.b16 %v563, %v562
        %v579 = vpack.c.b16 %v565, %v564
        %v580 = vpack.c.b16 %v567, %v566
        %v581 = vpack.c.b16 %v569, %v568
        %v582 = vpack.c.b16 %v571, %v570
        %v583 = vpack.c.b16 %v573, %v572
        %v584 = vpack.c.b16 %v574, %v574
        %vm594 = vcmask 179200
        %v596 = vsel %vm594, %v535, 0
        %vm598 = vcmask 1042432
        %v600 = vsel %vm598, %v584, 0
        %602 = vmatprep.subr.bf16.mxu0 0
        %603 = vmatpush1.bf16.msra.mxu0 %v575
        %604 = vmatprep.subr.bf16.mxu0 0
        %605 = vmatpush1.bf16.msra.mxu0 %v576
        %606 = vmatprep.subr.bf16.mxu0 0
        %607 = vmatpush1.bf16.msra.mxu0 %v577
        %608 = vmatprep.subr.bf16.mxu0 0
        %609 = vmatpush1.bf16.msra.mxu0 %v578
        %610 = vmatprep.subr.bf16.mxu0 0
        %611 = vmatpush1.bf16.msra.mxu0 %v579
        %612 = vmatprep.subr.bf16.mxu0 0
        %613 = vmatpush1.bf16.msra.mxu0 %v580
        %614 = vmatprep.subr.bf16.mxu0 0
        %615 = vmatpush1.bf16.msra.mxu0 %v581
        %616 = vmatprep.subr.bf16.mxu0 0
        %617 = vmatpush1.bf16.msra.mxu0 %v582
        %618 = vmatprep.subr.bf16.mxu0 0
        %619 = vmatpush1.bf16.msra.mxu0 %v583
        %620 = vmatprep.subr.bf16.mxu0 0
        %621 = vmatpush1.bf16.msra.mxu0 %v600
        %622 = vmatprep.subr.bf16.mxu0 0
        %623 = vmatpush1.bf16.msra.mxu0 0
        %624 = vmatprep.subr.bf16.mxu0 0
        %625 = vmatpush1.bf16.msra.mxu0 0
        %626 = vmatprep.subr.bf16.mxu0 0
        %627 = vmatpush1.bf16.msra.mxu0 0
        %628 = vmatprep.subr.bf16.mxu0 0
        %629 = vmatpush1.bf16.msra.mxu0 0
        %630 = vmatprep.subr.bf16.mxu0 0
        %631 = vmatpush1.bf16.msra.mxu0 0
        %632 = vmatprep.subr.bf16.mxu0 0
        %633 = vmatpush1.bf16.msra.mxu0 0
        %634 = vmatprep.mubr.bf16.mxu0 %v596
        %635 = vmatmul.mubr.bf16.gmra.mrb[0].mxu0 %v534
        %v636 = vpop.f32.mrb[0].mxu0
        %v637 = vadd.f32 0.0, %v636
        %v638 = vpop.f32.mrb[0].mxu0
        %v639 = vpop.f32.mrb[0].mxu0
        %v640 = vadd.f32 0.0, %v639
        %v641 = vpop.f32.mrb[0].mxu0
        %642 = vdwg.mxu0
        %s643 = scalar_lea.vmem %s486, 76 [#allocation2]
        %v644 = vld [vmem:[%s643] sm:$0xf]
        %v645 = vld [vmem:[%s643 + $0x4] sm:$0xf]
        %v646 = vld [vmem:[%s643 + $0x8] sm:$0xf]
        %v647 = vld [vmem:[%s643 + $0xc] sm:$0xf]
        %v648 = vld [vmem:[%s643 + $0x10] sm:$0xf]
        %v649 = vld [vmem:[%s643 + $0x14] sm:$0xf]
        %v650 = vld [vmem:[%s643 + $0x18] sm:$0xf]
        %v651 = vld [vmem:[%s643 + $0x1c] sm:$0xf]
        %v652 = vld [vmem:[%s643 + $0x20] sm:$0xf]
        %v653 = vld [vmem:[%s643 + $0x24] sm:$0xf]
        %v654 = vld [vmem:[%s643 + $0x28] sm:$0xf]
        %v655 = vld [vmem:[%s643 + $0x2c] sm:$0xf]
        %v656 = vld [vmem:[%s643 + $0x30] sm:$0xf]
        %v657 = vld [vmem:[%s643 + $0x34] sm:$0xf]
        %v658 = vld [vmem:[%s643 + $0x38] sm:$0xf]
        %v659 = vld [vmem:[%s643 + $0x3c] sm:$0xf]
        %v660 = vld [vmem:[%s643 + $0x40] sm:$0xf]
        %v661 = vld [vmem:[%s643 + $0x44] sm:$0xf]
        %v662 = vld [vmem:[%s643 + $0x48] sm:$0x7]
        %v682 = vunpack.c.l.b16 %v644
        %v683 = vunpack.c.l.b16 %v645
        %v684 = vunpack.c.l.b16 %v646
        %v685 = vunpack.c.l.b16 %v647
        %v686 = vunpack.c.l.b16 %v648
        %v687 = vunpack.c.l.b16 %v649
        %v688 = vunpack.c.l.b16 %v650
        %v689 = vunpack.c.l.b16 %v651
        %v690 = vunpack.c.l.b16 %v652
        %v691 = vunpack.c.l.b16 %v653
        %v692 = vunpack.c.l.b16 %v654
        %v693 = vunpack.c.l.b16 %v655
        %v694 = vunpack.c.l.b16 %v656
        %v695 = vunpack.c.l.b16 %v657
        %v696 = vunpack.c.l.b16 %v658
        %v697 = vunpack.c.l.b16 %v659
        %v698 = vunpack.c.l.b16 %v660
        %v699 = vunpack.c.l.b16 %v661
        %v700 = vunpack.c.l.b16 %v662
        %v701 = vpack.c.b16 %v683, %v682
        %v702 = vpack.c.b16 %v685, %v684
        %v703 = vpack.c.b16 %v687, %v686
        %v704 = vpack.c.b16 %v689, %v688
        %v705 = vpack.c.b16 %v691, %v690
        %v706 = vpack.c.b16 %v693, %v692
        %v707 = vpack.c.b16 %v695, %v694
        %v708 = vpack.c.b16 %v697, %v696
        %v709 = vpack.c.b16 %v699, %v698
        %v710 = vpack.c.b16 %v700, %v700
        %v721 = vsel %vm598, %v710, 0
        %723 = vmatprep.subr.bf16.mxu0 0
        %724 = vmatpush1.bf16.msra.mxu0 %v701
        %725 = vmatprep.subr.bf16.mxu0 0
        %726 = vmatpush1.bf16.msra.mxu0 %v702
        %727 = vmatprep.subr.bf16.mxu0 0
        %728 = vmatpush1.bf16.msra.mxu0 %v703
        %729 = vmatprep.subr.bf16.mxu0 0
        %730 = vmatpush1.bf16.msra.mxu0 %v704
        %731 = vmatprep.subr.bf16.mxu0 0
        %732 = vmatpush1.bf16.msra.mxu0 %v705
        %733 = vmatprep.subr.bf16.mxu0 0
        %734 = vmatpush1.bf16.msra.mxu0 %v706
        %735 = vmatprep.subr.bf16.mxu0 0
        %736 = vmatpush1.bf16.msra.mxu0 %v707
        %737 = vmatprep.subr.bf16.mxu0 0
        %738 = vmatpush1.bf16.msra.mxu0 %v708
        %739 = vmatprep.subr.bf16.mxu0 0
        %740 = vmatpush1.bf16.msra.mxu0 %v709
        %741 = vmatprep.subr.bf16.mxu0 0
        %742 = vmatpush1.bf16.msra.mxu0 %v721
        %743 = vmatprep.subr.bf16.mxu0 0
        %744 = vmatpush1.bf16.msra.mxu0 0
        %745 = vmatprep.subr.bf16.mxu0 0
        %746 = vmatpush1.bf16.msra.mxu0 0
        %747 = vmatprep.subr.bf16.mxu0 0
        %748 = vmatpush1.bf16.msra.mxu0 0
        %749 = vmatprep.subr.bf16.mxu0 0
        %750 = vmatpush1.bf16.msra.mxu0 0
        %751 = vmatprep.subr.bf16.mxu0 0
        %752 = vmatpush1.bf16.msra.mxu0 0
        %753 = vmatprep.subr.bf16.mxu0 0
        %754 = vmatpush1.bf16.msra.mxu0 0
        %755 = vmatprep.mubr.bf16.mxu0 %v596
        %756 = vmatmul.mubr.bf16.gmra.mrb[0].mxu0 %v534
        %v757 = vpop.f32.mrb[0].mxu0
        %v758 = vadd.f32 0.0, %v757
        %v759 = vpop.f32.mrb[0].mxu0
        %v760 = vpop.f32.mrb[0].mxu0
        %v761 = vadd.f32 0.0, %v760
        %v762 = vpop.f32.mrb[0].mxu0
        %763 = vdwg.mxu0
        %v764 = vmax.f32 %v637, %v758
        %v765 = vmax.f32 %v640, %v761
        %s766 = scalar_lea.vmem %s486, 152 [#allocation2]
        %v767 = vld [vmem:[%s766] sm:$0xf]
        %v768 = vld [vmem:[%s766 + $0x4] sm:$0xf]
        %v769 = vld [vmem:[%s766 + $0x8] sm:$0xf]
        %v770 = vld [vmem:[%s766 + $0xc] sm:$0xf]
        %v771 = vld [vmem:[%s766 + $0x10] sm:$0xf]
        %v772 = vld [vmem:[%s766 + $0x14] sm:$0xf]
        %v773 = vld [vmem:[%s766 + $0x18] sm:$0xf]
        %v774 = vld [vmem:[%s766 + $0x1c] sm:$0xf]
        %v775 = vld [vmem:[%s766 + $0x20] sm:$0xf]
        %v776 = vld [vmem:[%s766 + $0x24] sm:$0xf]
        %v777 = vld [vmem:[%s766 + $0x28] sm:$0xf]
        %v778 = vld [vmem:[%s766 + $0x2c] sm:$0xf]
        %v779 = vld [vmem:[%s766 + $0x30] sm:$0xf]
        %v780 = vld [vmem:[%s766 + $0x34] sm:$0xf]
        %v781 = vld [vmem:[%s766 + $0x38] sm:$0xf]
        %v782 = vld [vmem:[%s766 + $0x3c] sm:$0xf]
        %v783 = vld [vmem:[%s766 + $0x40] sm:$0xf]
        %v784 = vld [vmem:[%s766 + $0x44] sm:$0xf]
        %v785 = vld [vmem:[%s766 + $0x48] sm:$0x7]
        %v805 = vunpack.c.l.b16 %v767
        %v806 = vunpack.c.l.b16 %v768
        %v807 = vunpack.c.l.b16 %v769
        %v808 = vunpack.c.l.b16 %v770
        %v809 = vunpack.c.l.b16 %v771
        %v810 = vunpack.c.l.b16 %v772
        %v811 = vunpack.c.l.b16 %v773
        %v812 = vunpack.c.l.b16 %v774
        %v813 = vunpack.c.l.b16 %v775
        %v814 = vunpack.c.l.b16 %v776
        %v815 = vunpack.c.l.b16 %v777
        %v816 = vunpack.c.l.b16 %v778
        %v817 = vunpack.c.l.b16 %v779
        %v818 = vunpack.c.l.b16 %v780
        %v819 = vunpack.c.l.b16 %v781
        %v820 = vunpack.c.l.b16 %v782
        %v821 = vunpack.c.l.b16 %v783
        %v822 = vunpack.c.l.b16 %v784
        %v823 = vunpack.c.l.b16 %v785
        %v824 = vpack.c.b16 %v806, %v805
        %v825 = vpack.c.b16 %v808, %v807
        %v826 = vpack.c.b16 %v810, %v809
        %v827 = vpack.c.b16 %v812, %v811
        %v828 = vpack.c.b16 %v814, %v813
        %v829 = vpack.c.b16 %v816, %v815
        %v830 = vpack.c.b16 %v818, %v817
        %v831 = vpack.c.b16 %v820, %v819
        %v832 = vpack.c.b16 %v822, %v821
        %v833 = vpack.c.b16 %v823, %v823
        %v844 = vsel %vm598, %v833, 0
        %846 = vmatprep.subr.bf16.mxu0 0
        %847 = vmatpush1.bf16.msra.mxu0 %v824
        %848 = vmatprep.subr.bf16.mxu0 0
        %849 = vmatpush1.bf16.msra.mxu0 %v825
        %850 = vmatprep.subr.bf16.mxu0 0
        %851 = vmatpush1.bf16.msra.mxu0 %v826
        %852 = vmatprep.subr.bf16.mxu0 0
        %853 = vmatpush1.bf16.msra.mxu0 %v827
        %854 = vmatprep.subr.bf16.mxu0 0
        %855 = vmatpush1.bf16.msra.mxu0 %v828
        %856 = vmatprep.subr.bf16.mxu0 0
        %857 = vmatpush1.bf16.msra.mxu0 %v829
        %858 = vmatprep.subr.bf16.mxu0 0
        %859 = vmatpush1.bf16.msra.mxu0 %v830
        %860 = vmatprep.subr.bf16.mxu0 0
        %861 = vmatpush1.bf16.msra.mxu0 %v831
        %862 = vmatprep.subr.bf16.mxu0 0
        %863 = vmatpush1.bf16.msra.mxu0 %v832
        %864 = vmatprep.subr.bf16.mxu0 0
        %865 = vmatpush1.bf16.msra.mxu0 %v844
        %866 = vmatprep.subr.bf16.mxu0 0
        %867 = vmatpush1.bf16.msra.mxu0 0
        %868 = vmatprep.subr.bf16.mxu0 0
        %869 = vmatpush1.bf16.msra.mxu0 0
        %870 = vmatprep.subr.bf16.mxu0 0
        %871 = vmatpush1.bf16.msra.mxu0 0
        %872 = vmatprep.subr.bf16.mxu0 0
        %873 = vmatpush1.bf16.msra.mxu0 0
        %874 = vmatprep.subr.bf16.mxu0 0
        %875 = vmatpush1.bf16.msra.mxu0 0
        %876 = vmatprep.subr.bf16.mxu0 0
        %877 = vmatpush1.bf16.msra.mxu0 0
        %878 = vmatprep.mubr.bf16.mxu0 %v596
        %879 = vmatmul.mubr.bf16.gmra.mrb[0].mxu0 %v534
        %v880 = vpop.f32.mrb[0].mxu0
        %v881 = vadd.f32 0.0, %v880
        %v882 = vpop.f32.mrb[0].mxu0
        %v883 = vpop.f32.mrb[0].mxu0
        %v884 = vadd.f32 0.0, %v883
        %v885 = vpop.f32.mrb[0].mxu0
        %886 = vdwg.mxu0
        %v887 = vmax.f32 %v764, %v881
        %v888 = vmax.f32 %v765, %v884
        %s889 = scalar_lea.vmem %s486, 228 [#allocation2]
        %v890 = vld [vmem:[%s889] sm:$0xf]
        %v891 = vld [vmem:[%s889 + $0x4] sm:$0xf]
        %v892 = vld [vmem:[%s889 + $0x8] sm:$0xf]
        %v893 = vld [vmem:[%s889 + $0xc] sm:$0xf]
        %v894 = vld [vmem:[%s889 + $0x10] sm:$0xf]
        %v895 = vld [vmem:[%s889 + $0x14] sm:$0xf]
        %v896 = vld [vmem:[%s889 + $0x18] sm:$0xf]
        %v897 = vld [vmem:[%s889 + $0x1c] sm:$0xf]
        %v898 = vld [vmem:[%s889 + $0x20] sm:$0xf]
        %v899 = vld [vmem:[%s889 + $0x24] sm:$0xf]
        %v900 = vld [vmem:[%s889 + $0x28] sm:$0xf]
        %v901 = vld [vmem:[%s889 + $0x2c] sm:$0xf]
        %v902 = vld [vmem:[%s889 + $0x30] sm:$0xf]
        %v903 = vld [vmem:[%s889 + $0x34] sm:$0xf]
        %v904 = vld [vmem:[%s889 + $0x38] sm:$0xf]
        %v905 = vld [vmem:[%s889 + $0x3c] sm:$0xf]
        %v906 = vld [vmem:[%s889 + $0x40] sm:$0xf]
        %v907 = vld [vmem:[%s889 + $0x44] sm:$0xf]
        %v908 = vld [vmem:[%s889 + $0x48] sm:$0x7]
        %v928 = vunpack.c.l.b16 %v890
        %v929 = vunpack.c.l.b16 %v891
        %v930 = vunpack.c.l.b16 %v892
        %v931 = vunpack.c.l.b16 %v893
        %v932 = vunpack.c.l.b16 %v894
        %v933 = vunpack.c.l.b16 %v895
        %v934 = vunpack.c.l.b16 %v896
        %v935 = vunpack.c.l.b16 %v897
        %v936 = vunpack.c.l.b16 %v898
        %v937 = vunpack.c.l.b16 %v899
        %v938 = vunpack.c.l.b16 %v900
        %v939 = vunpack.c.l.b16 %v901
        %v940 = vunpack.c.l.b16 %v902
        %v941 = vunpack.c.l.b16 %v903
        %v942 = vunpack.c.l.b16 %v904
        %v943 = vunpack.c.l.b16 %v905
        %v944 = vunpack.c.l.b16 %v906
        %v945 = vunpack.c.l.b16 %v907
        %v946 = vunpack.c.l.b16 %v908
        %v947 = vpack.c.b16 %v929, %v928
        %v948 = vpack.c.b16 %v931, %v930
        %v949 = vpack.c.b16 %v933, %v932
        %v950 = vpack.c.b16 %v935, %v934
        %v951 = vpack.c.b16 %v937, %v936
        %v952 = vpack.c.b16 %v939, %v938
        %v953 = vpack.c.b16 %v941, %v940
        %v954 = vpack.c.b16 %v943, %v942
        %v955 = vpack.c.b16 %v945, %v944
        %v956 = vpack.c.b16 %v946, %v946
        %v967 = vsel %vm598, %v956, 0
        %969 = vmatprep.subr.bf16.mxu0 0
        %970 = vmatpush1.bf16.msra.mxu0 %v947
        %971 = vmatprep.subr.bf16.mxu0 0
        %972 = vmatpush1.bf16.msra.mxu0 %v948
        %973 = vmatprep.subr.bf16.mxu0 0
        %974 = vmatpush1.bf16.msra.mxu0 %v949
        %975 = vmatprep.subr.bf16.mxu0 0
        %976 = vmatpush1.bf16.msra.mxu0 %v950
        %977 = vmatprep.subr.bf16.mxu0 0
        %978 = vmatpush1.bf16.msra.mxu0 %v951
        %979 = vmatprep.subr.bf16.mxu0 0
        %980 = vmatpush1.bf16.msra.mxu0 %v952
        %981 = vmatprep.subr.bf16.mxu0 0
        %982 = vmatpush1.bf16.msra.mxu0 %v953
        %983 = vmatprep.subr.bf16.mxu0 0
        %984 = vmatpush1.bf16.msra.mxu0 %v954
        %985 = vmatprep.subr.bf16.mxu0 0
        %986 = vmatpush1.bf16.msra.mxu0 %v955
        %987 = vmatprep.subr.bf16.mxu0 0
        %988 = vmatpush1.bf16.msra.mxu0 %v967
        %989 = vmatprep.subr.bf16.mxu0 0
        %990 = vmatpush1.bf16.msra.mxu0 0
        %991 = vmatprep.subr.bf16.mxu0 0
        %992 = vmatpush1.bf16.msra.mxu0 0
        %993 = vmatprep.subr.bf16.mxu0 0
        %994 = vmatpush1.bf16.msra.mxu0 0
        %995 = vmatprep.subr.bf16.mxu0 0
        %996 = vmatpush1.bf16.msra.mxu0 0
        %997 = vmatprep.subr.bf16.mxu0 0
        %998 = vmatpush1.bf16.msra.mxu0 0
        %999 = vmatprep.subr.bf16.mxu0 0
        %1000 = vmatpush1.bf16.msra.mxu0 0
        %1001 = vmatprep.mubr.bf16.mxu0 %v596
        %1002 = vmatmul.mubr.bf16.gmra.mrb[0].mxu0 %v534
        %v1003 = vpop.f32.mrb[0].mxu0
        %v1004 = vadd.f32 0.0, %v1003
        %v1005 = vpop.f32.mrb[0].mxu0
        %v1006 = vpop.f32.mrb[0].mxu0
        %v1007 = vadd.f32 0.0, %v1006
        %v1008 = vpop.f32.mrb[0].mxu0
        %1009 = vdwg.mxu0
        %v1010 = vmax.f32 %v887, %v1004
        %v1011 = vmax.f32 %v888, %v1007
        %v1012 = vld [vmem:[%s2] sm:$0xff]
        %v1013 = vld [vmem:[%s2 + $0x8] sm:$0xff]
        %1015 = vset.pattern.permute.xlu0 0
        %1016 = vperm.xlu0 %1015, %v1012
        %v1017 = vpop.permute.xlu0 %1016
        %1020 = vset.pattern.permute.xlu0 0
        %1021 = vperm.xlu0 %1020, %v1013
        %v1022 = vpop.permute.xlu0 %1021
        %v1024 = vadd.f32 %v1010, %v1017
        %v1025 = vadd.f32 %v1011, %v1022
        %v1026 = vmax.f32 %v1024, 0.0
        %v1027 = vmax.f32 %v1025, 0.0
        %v1028 = vpack.c.bf16 %v1027, %v1026
        %v1030 = vunpack.c.l.b16 %v1028
        %v1031 = vunpack.c.h.b16 %v1028
        %v1032 = vpack.c.b16 %v1030, %v1030
        %v1033 = vpack.c.b16 %v1031, %v1031
        %1036 = vst [vmem:[%s505] sm:$0xf] %v1032
        %1037 = vst [vmem:[%s505 + $0x4] sm:$0xf] %v1033
        %s1038 = sand.u32 %s90, 1
        %s1039 = sand.u32 %s90, 1
        %s1040 = smul.addr %s1039, 8
        %s1041 = scalar_lea.vmem [#allocation3], %s1040
        // Predicated region
        $region74: #{conv_classifier_forward.4} parent=68 // pred_check
          %p1042 = pneg %p100
        $region75: #{conv_classifier_forward.4} parent=68 // pred_check_branch
          %1044 = sbr.rel (%p1042) target = $region77
        $region76: #{conv_classifier_forward.4} parent=68 // pred_region
          %s1045 = smul.addr %s14, 4
          %s1046 = scalar_lea.vmem %s3, %s1045
          // Predicated region
          $region78: #{conv_classifier_forward.4} parent=76 // pred_check
            _
          $region79: #{conv_classifier_forward.4} parent=76 // pred_check_branch
            %1048 = sbr.rel (0) target = $region81
          $region80: #{conv_classifier_forward.4} parent=76 // pred_region
            // Predicated region
            $region82: #{conv_classifier_forward.4} parent=80 // pred_check
              _
            $region83: #{conv_classifier_forward.4} parent=80 // pred_check_branch
              %1050 = sbr.rel target = $region85
            $region84: #{conv_classifier_forward.4} parent=80 // pred_region
              // Predicated region
              $region97: #{conv_classifier_forward.4} parent=84 // pred_check
                _
              $region98: #{conv_classifier_forward.4} parent=84 // pred_check_branch
                %1067 = sbr.rel (0) target = $region100
              $region99: #{conv_classifier_forward.4} parent=84 // pred_region
                loop: start=0, step=1, limit=1
                $region101: #{conv_classifier_forward.4} parent=99 // loop_pre_header
                  _
                $region102: #{conv_classifier_forward.4} parent=99 // loop_header
                  %s1069 = sphi 0, %s1073
                  %p1070 = scmp.ge.s32.totalorder %s1069, 1
                  %s1074 = sphi %s1041, %s1041
                  %s1075 = sphi %s1046, %s1046
                $region103: #{conv_classifier_forward.4} parent=99 // loop_header_branch
                  %1072 = sbr.rel (%p1070) target = $region107
                $region104: #{conv_classifier_forward.4} parent=99 // loop_body
                  _
                $region105: #{conv_classifier_forward.4} parent=99 // loop_footer
                  %s1073 = sadd.s32 1, %s1069
                $region106: #{conv_classifier_forward.4} parent=99 // loop_footer_branch
                  %1068 = sbr.rel target = $region102
                $region107: #{conv_classifier_forward.4} parent=99 // loop_exit
                  _
                loop: start=0, step=1, limit=1
                $region108: #{conv_classifier_forward.4} parent=99 // loop_pre_header
                  _
                $region109: #{conv_classifier_forward.4} parent=99 // loop_header
                  %s1078 = sphi 0, %s1082
                  %p1079 = scmp.ge.s32.totalorder %s1078, 1
                  %s1083 = sphi %s1041, %s1041
                  %s1084 = sphi %s1046, %s1046
                $region110: #{conv_classifier_forward.4} parent=99 // loop_header_branch
                  %1081 = sbr.rel (%p1079) target = $region114
                $region111: #{conv_classifier_forward.4} parent=99 // loop_body
                  %v1085 = vld [vmem:[%s1083] sm:$0xf]
                  %1086 = vst [vmem:[%s1084] sm:$0xf] %v1085
                  %v1087 = vld [vmem:[%s1083 + $0x4] sm:$0xf]
                  %1088 = vst [vmem:[%s1084 + $0x8] sm:$0xf] %v1087
                $region112: #{conv_classifier_forward.4} parent=99 // loop_footer
                  %s1082 = sadd.s32 1, %s1078
                $region113: #{conv_classifier_forward.4} parent=99 // loop_footer_branch
                  %1077 = sbr.rel target = $region109
                $region114: #{conv_classifier_forward.4} parent=99 // loop_exit
                  _
              $region100: #{conv_classifier_forward.4} parent=84 // pred_fallthru
                _
            $region85: #{conv_classifier_forward.4} parent=80 // pred_fallthru
              _
            // Predicated region
            $region86: #{conv_classifier_forward.4} parent=80 // pred_check
              _
            $region87: #{conv_classifier_forward.4} parent=80 // pred_check_branch
              %1052 = sbr.rel (0) target = $region89
            $region88: #{conv_classifier_forward.4} parent=80 // pred_region
              loop: start=0, step=1, limit=1
              $region90: #{conv_classifier_forward.4} parent=88 // loop_pre_header
                _
              $region91: #{conv_classifier_forward.4} parent=88 // loop_header
                %s1055 = sphi 0, %s1059
                %p1056 = scmp.ge.s32.totalorder %s1055, 1
                %s1060 = sphi %s1041, %s1041
                %s1061 = sphi %s1046, %s1046
              $region92: #{conv_classifier_forward.4} parent=88 // loop_header_branch
                %1058 = sbr.rel (%p1056) target = $region96
              $region93: #{conv_classifier_forward.4} parent=88 // loop_body
                %v1062 = vld [vmem:[%s1060] sm:$0xf]
                %1063 = vst [vmem:[%s1061] sm:$0xf] %v1062
                %v1064 = vld [vmem:[%s1060 + $0x4] sm:$0xf]
                %1065 = vst [vmem:[%s1061 + $0x8] sm:$0xf] %v1064
              $region94: #{conv_classifier_forward.4} parent=88 // loop_footer
                %s1059 = sadd.s32 1, %s1055
              $region95: #{conv_classifier_forward.4} parent=88 // loop_footer_branch
                %1054 = sbr.rel target = $region91
              $region96: #{conv_classifier_forward.4} parent=88 // loop_exit
                _
            $region89: #{conv_classifier_forward.4} parent=80 // pred_fallthru
              _
          $region81: #{conv_classifier_forward.4} parent=76 // pred_fallthru
            _
          %1089 = vnop
        $region77: #{conv_classifier_forward.4} parent=68 // pred_fallthru
          _
      $region69: #{conv_classifier_forward.4} parent=5 // pred_fallthru
        _
      %p1090 = scmp.le.s32.totalorder 2, %s9
      // Predicated region
      $region115: #{conv_classifier_forward.4} parent=5 // pred_check
        %p1091 = pneg %p1090
      $region116: #{conv_classifier_forward.4} parent=5 // pred_check_branch
        %1093 = sbr.rel (%p1091) target = $region118
      $region117: #{conv_classifier_forward.4} parent=5 // pred_region
        %s1094 = ssub.s32 %s9, 2
        // Predicated region
        $region119: #{conv_classifier_forward.4} parent=117 // pred_check
          %p1095 = pneg %p106
        $region120: #{conv_classifier_forward.4} parent=117 // pred_check_branch
          %1097 = sbr.rel (%p1095) target = $region122
        $region121: #{conv_classifier_forward.4} parent=117 // pred_region
          %s1098 = sand.u32 %s91, 1
          %s1099 = sand.u32 %s91, 1
          %s1100 = smul.addr %s1099, 8
          %s1101 = scalar_lea.vmem [#allocation3], %s1100
        $region122: #{conv_classifier_forward.4} parent=117 // pred_fallthru
          _
      $region118: #{conv_classifier_forward.4} parent=5 // pred_fallthru
        _
    $region6: #{conv_classifier_forward.4} parent=1 // loop_footer
      %s13 = sadd.s32 1, %s9
    $region7: #{conv_classifier_forward.4} parent=1 // loop_footer_branch
      %8 = sbr.rel target = $region3
    $region8: #{conv_classifier_forward.4} parent=1 // loop_exit
      _

// kernel: conv_classifier_forward.5
$region0: #{conv_classifier_forward.5}
  #allocation0 [shape = 'u32[]', space=smem, size = 0x4, offset = 0x4, fixed_abs, tag = 'smem constant byte address 0x4 - core index']
  #allocation1 [shape = 'u32[144,128]{1,0:T(1,128)}', space=vmem, size = 0x12000, scoped, tag = 'internal scratch']
  %s0 = inlined_call_operand.vmem [shape: bf16[8,400], index: 0, kind: input, shape index: {}]
  %s1 = inlined_call_operand.vmem [shape: bf16[400,64], index: 1, kind: input, shape index: {}]
  %s2 = inlined_call_operand.vmem [shape: f32[1,64], index: 2, kind: input, shape index: {}]
  %s3 = inlined_call_operand.vmem [shape: bf16[64,128], index: 3, kind: input, shape index: {}]
  %s4 = inlined_call_operand.vmem [shape: f32[1,128], index: 4, kind: input, shape index: {}]
  %s5 = inlined_call_operand.hbm [shape: f32[8,128], index: 5, kind: output, shape index: {}]
  %s6 = sld [smem:[#allocation0]]
  $region30: #{conv_classifier_forward.5} parent=0
    _
  %s8 = ssub.s32 1, %s6
  %s9 = scalar_select 0, %s8, %s6
  $region1: #{conv_classifier_forward.5} parent=0
    #allocation2 [shape = 'u8[4096]{0}', space=vmem, size = 0x1000, scoped, tag = 'output window, operand 0, single buffered']
    #allocation3 [shape = 's32[1]{0}', space=sflag, size = 0x4, scoped, tag = 'scoped memory for conv_classifier_forward.5']
    %10 = vsyncpa [#allocation3], 0
    // Predicated region
    $region2: #{conv_classifier_forward.5} parent=1 // pred_check
      _
    $region3: #{conv_classifier_forward.5} parent=1 // pred_check_branch
      %12 = sbr.rel (0) target = $region5
    $region4: #{conv_classifier_forward.5} parent=1 // pred_region
      _
    $region5: #{conv_classifier_forward.5} parent=1 // pred_fallthru
      _
    // Predicated region
    $region6: #{conv_classifier_forward.5} parent=1 // pred_check
      _
    $region7: #{conv_classifier_forward.5} parent=1 // pred_check_branch
      %14 = sbr.rel (0) target = $region9
    $region8: #{conv_classifier_forward.5} parent=1 // pred_region
      _
    $region9: #{conv_classifier_forward.5} parent=1 // pred_fallthru
      _
    // Predicated region
    $region10: #{conv_classifier_forward.5} parent=1 // pred_check
      _
    $region11: #{conv_classifier_forward.5} parent=1 // pred_check_branch
      %16 = sbr.rel (0) target = $region13
    $region12: #{conv_classifier_forward.5} parent=1 // pred_region
      _
    $region13: #{conv_classifier_forward.5} parent=1 // pred_fallthru
      _
    // Predicated region
    $region14: #{conv_classifier_forward.5} parent=1 // pred_check
      _
    $region15: #{conv_classifier_forward.5} parent=1 // pred_check_branch
      %18 = sbr.rel (0) target = $region17
    $region16: #{conv_classifier_forward.5} parent=1 // pred_region
      _
    $region17: #{conv_classifier_forward.5} parent=1 // pred_fallthru
      _
    // Predicated region
    $region18: #{conv_classifier_forward.5} parent=1 // pred_check
      _
    $region19: #{conv_classifier_forward.5} parent=1 // pred_check_branch
      %20 = sbr.rel (0) target = $region21
    $region20: #{conv_classifier_forward.5} parent=1 // pred_region
      _
    $region21: #{conv_classifier_forward.5} parent=1 // pred_fallthru
      _
    %v22 = vld [vmem:[%s0] sm:$0xff]
    %v23 = vld [vmem:[%s0 + $0x8] sm:$0xff]
    %v24 = vld [vmem:[%s1] sm:$0xf]
    %v25 = vld [vmem:[%s1 + $0x4] sm:$0xf]
    %v26 = vld [vmem:[%s1 + $0x8] sm:$0xf]
    %v27 = vld [vmem:[%s1 + $0xc] sm:$0xf]
    %v28 = vld [vmem:[%s1 + $0x10] sm:$0xf]
    %v29 = vld [vmem:[%s1 + $0x14] sm:$0xf]
    %v30 = vld [vmem:[%s1 + $0x18] sm:$0xf]
    %v31 = vld [vmem:[%s1 + $0x1c] sm:$0xf]
    %v32 = vld [vmem:[%s1 + $0x20] sm:$0xf]
    %v33 = vld [vmem:[%s1 + $0x24] sm:$0xf]
    %v34 = vld [vmem:[%s1 + $0x28] sm:$0xf]
    %v35 = vld [vmem:[%s1 + $0x2c] sm:$0xf]
    %v36 = vld [vmem:[%s1 + $0x30] sm:$0xf]
    %v37 = vld [vmem:[%s1 + $0x34] sm:$0xf]
    %v38 = vld [vmem:[%s1 + $0x38] sm:$0xf]
    %v39 = vld [vmem:[%s1 + $0x3c] sm:$0xf]
    %v40 = vld [vmem:[%s1 + $0x40] sm:$0xf]
    %v41 = vld [vmem:[%s1 + $0x44] sm:$0xf]
    %v42 = vld [vmem:[%s1 + $0x48] sm:$0xf]
    %v43 = vld [vmem:[%s1 + $0x4c] sm:$0xf]
    %v44 = vld [vmem:[%s1 + $0x50] sm:$0xf]
    %v45 = vld [vmem:[%s1 + $0x54] sm:$0xf]
    %v46 = vld [vmem:[%s1 + $0x58] sm:$0xf]
    %v47 = vld [vmem:[%s1 + $0x5c] sm:$0xf]
    %v48 = vld [vmem:[%s1 + $0x60] sm:$0xf]
    %v49 = vld [vmem:[%s1 + $0x64] sm:$0xf]
    %v50 = vld [vmem:[%s1 + $0x68] sm:$0xf]
    %v51 = vld [vmem:[%s1 + $0x6c] sm:$0xf]
    %v52 = vld [vmem:[%s1 + $0x70] sm:$0xf]
    %v53 = vld [vmem:[%s1 + $0x74] sm:$0xf]
    %v54 = vld [vmem:[%s1 + $0x78] sm:$0xf]
    %v55 = vld [vmem:[%s1 + $0x7c] sm:$0xf]
    %v56 = vld [vmem:[%s1 + $0x80] sm:$0xf]
    %v57 = vld [vmem:[%s1 + $0x84] sm:$0xf]
    %v58 = vld [vmem:[%s1 + $0x88] sm:$0xf]
    %v59 = vld [vmem:[%s1 + $0x8c] sm:$0xf]
    %v60 = vld [vmem:[%s1 + $0x90] sm:$0xf]
    %v61 = vld [vmem:[%s1 + $0x94] sm:$0xf]
    %v62 = vld [vmem:[%s1 + $0x98] sm:$0xf]
    %v63 = vld [vmem:[%s1 + $0x9c] sm:$0xf]
    %v64 = vld [vmem:[%s1 + $0xa0] sm:$0xf]
    %v65 = vld [vmem:[%s1 + $0xa4] sm:$0xf]
    %v66 = vld [vmem:[%s1 + $0xa8] sm:$0xf]
    %v67 = vld [vmem:[%s1 + $0xac] sm:$0xf]
    %v68 = vld [vmem:[%s1 + $0xb0] sm:$0xf]
    %v69 = vld [vmem:[%s1 + $0xb4] sm:$0xf]
    %v70 = vld [vmem:[%s1 + $0xb8] sm:$0xf]
    %v71 = vld [vmem:[%s1 + $0xbc] sm:$0xf]
    %v72 = vld [vmem:[%s1 + $0xc0] sm:$0xf]
    %v73 = vld [vmem:[%s1 + $0xc4] sm:$0xf]
    %v74 = vld [vmem:[%s2] sm:$0x1]
    %v76 = vlaneseq
    %v77 = vshrl.u32 %v76, 7
    %v78 = vsub.s32 0, %v77
    %v79 = vrot.slane %v74, %v78
    %v83 = vunpack.c.l.b16 %v22
    %v84 = vunpack.c.h.b16 %v22
    %v85 = vunpack.c.l.b16 %v23
    %v86 = vunpack.c.h.b16 %v23
    %v87 = vpack.c.b16 %v83, %v83
    %v88 = vpack.c.b16 %v84, %v84
    %v89 = vpack.c.b16 %v85, %v85
    %v90 = vpack.c.b16 %v86, %v86
    %v144 = vunpack.c.l.b16 %v24
    %v145 = vunpack.c.l.b16 %v25
    %v146 = vunpack.c.l.b16 %v26
    %v147 = vunpack.c.l.b16 %v27
    %v148 = vunpack.c.l.b16 %v28
    %v149 = vunpack.c.l.b16 %v29
    %v150 = vunpack.c.l.b16 %v30
    %v151 = vunpack.c.l.b16 %v31
    %v152 = vunpack.c.l.b16 %v32
    %v153 = vunpack.c.l.b16 %v33
    %v154 = vunpack.c.l.b16 %v34
    %v155 = vunpack.c.l.b16 %v35
    %v156 = vunpack.c.l.b16 %v36
    %v157 = vunpack.c.l.b16 %v37
    %v158 = vunpack.c.l.b16 %v38
    %v159 = vunpack.c.l.b16 %v39
    %v160 = vunpack.c.l.b16 %v40
    %v161 = vunpack.c.l.b16 %v41
    %v162 = vunpack.c.l.b16 %v42
    %v163 = vunpack.c.l.b16 %v43
    %v164 = vunpack.c.l.b16 %v44
    %v165 = vunpack.c.l.b16 %v45
    %v166 = vunpack.c.l.b16 %v46
    %v167 = vunpack.c.l.b16 %v47
    %v168 = vunpack.c.l.b16 %v48
    %v169 = vunpack.c.l.b16 %v49
    %v170 = vunpack.c.l.b16 %v50
    %v171 = vunpack.c.l.b16 %v51
    %v172 = vunpack.c.l.b16 %v52
    %v173 = vunpack.c.l.b16 %v53
    %v174 = vunpack.c.l.b16 %v54
    %v175 = vunpack.c.l.b16 %v55
    %v176 = vunpack.c.l.b16 %v56
    %v177 = vunpack.c.l.b16 %v57
    %v178 = vunpack.c.l.b16 %v58
    %v179 = vunpack.c.l.b16 %v59
    %v180 = vunpack.c.l.b16 %v60
    %v181 = vunpack.c.l.b16 %v61
    %v182 = vunpack.c.l.b16 %v62
    %v183 = vunpack.c.l.b16 %v63
    %v184 = vunpack.c.l.b16 %v64
    %v185 = vunpack.c.l.b16 %v65
    %v186 = vunpack.c.l.b16 %v66
    %v187 = vunpack.c.l.b16 %v67
    %v188 = vunpack.c.l.b16 %v68
    %v189 = vunpack.c.l.b16 %v69
    %v190 = vunpack.c.l.b16 %v70
    %v191 = vunpack.c.l.b16 %v71
    %v192 = vunpack.c.l.b16 %v72
    %v193 = vunpack.c.l.b16 %v73
    %v194 = vpack.c.b16 %v145, %v144
    %v195 = vpack.c.b16 %v147, %v146
    %v196 = vpack.c.b16 %v149, %v148
    %v197 = vpack.c.b16 %v151, %v150
    %v198 = vpack.c.b16 %v153, %v152
    %v199 = vpack.c.b16 %v155, %v154
    %v200 = vpack.c.b16 %v157, %v156
    %v201 = vpack.c.b16 %v159, %v158
    %v202 = vpack.c.b16 %v161, %v160
    %v203 = vpack.c.b16 %v163, %v162
    %v204 = vpack.c.b16 %v165, %v164
    %v205 = vpack.c.b16 %v167, %v166
    %v206 = vpack.c.b16 %v169, %v168
    %v207 = vpack.c.b16 %v171, %v170
    %v208 = vpack.c.b16 %v173, %v172
    %v209 = vpack.c.b16 %v175, %v174
    %v210 = vpack.c.b16 %v177, %v176
    %v211 = vpack.c.b16 %v179, %v178
    %v212 = vpack.c.b16 %v181, %v180
    %v213 = vpack.c.b16 %v183, %v182
    %v214 = vpack.c.b16 %v185, %v184
    %v215 = vpack.c.b16 %v187, %v186
    %v216 = vpack.c.b16 %v189, %v188
    %v217 = vpack.c.b16 %v191, %v190
    %v218 = vpack.c.b16 %v193, %v192
    %vm244 = vcmask 130048
    %v246 = vsel %vm244, %v90, 0
    %248 = vmatprep.subr.bf16.mxu0 0
    %249 = vmatpush1.bf16.msra.mxu0 %v194
    %250 = vmatprep.subr.bf16.mxu0 0
    %251 = vmatpush1.bf16.msra.mxu0 %v195
    %252 = vmatprep.subr.bf16.mxu0 0
    %253 = vmatpush1.bf16.msra.mxu0 %v196
    %254 = vmatprep.subr.bf16.mxu0 0
    %255 = vmatpush1.bf16.msra.mxu0 %v197
    %256 = vmatprep.subr.bf16.mxu0 0
    %257 = vmatpush1.bf16.msra.mxu0 %v198
    %258 = vmatprep.subr.bf16.mxu0 0
    %259 = vmatpush1.bf16.msra.mxu0 %v199
    %260 = vmatprep.subr.bf16.mxu0 0
    %261 = vmatpush1.bf16.msra.mxu0 %v200
    %262 = vmatprep.subr.bf16.mxu0 0
    %263 = vmatpush1.bf16.msra.mxu0 %v201
    %264 = vmatprep.subr.bf16.mxu0 0
    %265 = vmatpush1.bf16.msra.mxu0 %v202
    %266 = vmatprep.subr.bf16.mxu0 0
    %267 = vmatpush1.bf16.msra.mxu0 %v203
    %268 = vmatprep.subr.bf16.mxu0 0
    %269 = vmatpush1.bf16.msra.mxu0 %v204
    %270 = vmatprep.subr.bf16.mxu0 0
    %271 = vmatpush1.bf16.msra.mxu0 %v205
    %272 = vmatprep.subr.bf16.mxu0 0
    %273 = vmatpush1.bf16.msra.mxu0 %v206
    %274 = vmatprep.subr.bf16.mxu0 0
    %275 = vmatpush1.bf16.msra.mxu0 %v207
    %276 = vmatprep.subr.bf16.mxu0 0
    %277 = vmatpush1.bf16.msra.mxu0 %v208
    %278 = vmatprep.subr.bf16.mxu0 0
    %279 = vmatpush1.bf16.msra.mxu0 %v209
    %280 = vmatprep.mubr.bf16.mxu0 %v88
    %281 = vmatmul.mubr.bf16.gmra.mrb[0].mxu0 %v87
    %v282 = vpop.f32.mrb[0].mxu0
    %v283 = vadd.f32 %v79, %v282
    %v284 = vpop.f32.mrb[0].mxu0
    %v285 = vpop.f32.mrb[0].mxu0
    %v286 = vpop.f32.mrb[0].mxu0
    %287 = vdwg.mxu0
    %288 = vmatprep.subr.bf16.mxu0 0
    %289 = vmatpush1.bf16.msra.mxu0 %v210
    %290 = vmatprep.subr.bf16.mxu0 0
    %291 = vmatpush1.bf16.msra.mxu0 %v211
    %292 = vmatprep.subr.bf16.mxu0 0
    %293 = vmatpush1.bf16.msra.mxu0 %v212
    %294 = vmatprep.subr.bf16.mxu0 0
    %295 = vmatpush1.bf16.msra.mxu0 %v213
    %296 = vmatprep.subr.bf16.mxu0 0
    %297 = vmatpush1.bf16.msra.mxu0 %v214
    %298 = vmatprep.subr.bf16.mxu0 0
    %299 = vmatpush1.bf16.msra.mxu0 %v215
    %300 = vmatprep.subr.bf16.mxu0 0
    %301 = vmatpush1.bf16.msra.mxu0 %v216
    %302 = vmatprep.subr.bf16.mxu0 0
    %303 = vmatpush1.bf16.msra.mxu0 %v217
    %304 = vmatprep.subr.bf16.mxu0 0
    %305 = vmatpush1.bf16.msra.mxu0 %v218
    %306 = vmatprep.subr.bf16.mxu0 0
    %307 = vmatpush1.bf16.msra.mxu0 0
    %308 = vmatprep.subr.bf16.mxu0 0
    %309 = vmatpush1.bf16.msra.mxu0 0
    %310 = vmatprep.subr.bf16.mxu0 0
    %311 = vmatpush1.bf16.msra.mxu0 0
    %312 = vmatprep.subr.bf16.mxu0 0
    %313 = vmatpush1.bf16.msra.mxu0 0
    %314 = vmatprep.subr.bf16.mxu0 0
    %315 = vmatpush1.bf16.msra.mxu0 0
    %316 = vmatprep.subr.bf16.mxu0 0
    %317 = vmatpush1.bf16.msra.mxu0 0
    %318 = vmatprep.subr.bf16.mxu0 0
    %319 = vmatpush1.bf16.msra.mxu0 0
    %320 = vmatprep.mubr.bf16.mxu0 %v246
    %321 = vmatmul.mubr.bf16.gmra.mrb[0].mxu0 %v89
    %v322 = vpop.f32.mrb[0].mxu0
    %v323 = vadd.f32 %v283, %v322
    %v324 = vpop.f32.mrb[0].mxu0
    %v325 = vpop.f32.mrb[0].mxu0
    %v326 = vpop.f32.mrb[0].mxu0
    %327 = vdwg.mxu0
    %v328 = vmax.f32 %v323, 0.0
    %v329 = vpack.c.bf16 %v328, %v328
    %v330 = vld [vmem:[%s3] sm:$0xf]
    %v331 = vld [vmem:[%s3 + $0x4] sm:$0xf]
    %v332 = vld [vmem:[%s3 + $0x8] sm:$0xf]
    %v333 = vld [vmem:[%s3 + $0xc] sm:$0xf]
    %v334 = vld [vmem:[%s3 + $0x10] sm:$0xf]
    %v335 = vld [vmem:[%s3 + $0x14] sm:$0xf]
    %v336 = vld [vmem:[%s3 + $0x18] sm:$0xf]
    %v337 = vld [vmem:[%s3 + $0x1c] sm:$0xf]
    %v338 = vld [vmem:[%s4] sm:$0x1]
    %v340 = vlaneseq
    %v341 = vshrl.u32 %v340, 7
    %v342 = vsub.s32 0, %v341
    %v343 = vrot.slane %v338, %v342
    %v353 = vunpack.c.l.b16 %v330
    %v354 = vunpack.c.l.b16 %v331
    %v355 = vunpack.c.l.b16 %v332
    %v356 = vunpack.c.l.b16 %v333
    %v357 = vunpack.c.l.b16 %v334
    %v358 = vunpack.c.l.b16 %v335
    %v359 = vunpack.c.l.b16 %v336
    %v360 = vunpack.c.l.b16 %v337
    %v361 = vpack.c.b16 %v354, %v353
    %v362 = vpack.c.b16 %v356, %v355
    %v363 = vpack.c.b16 %v358, %v357
    %v364 = vpack.c.b16 %v360, %v359
    %vm369 = vcmask 523264
    %v371 = vsel %vm369, %v329, 0
    %373 = vmatprep.subr.bf16.mxu0 0
    %374 = vmatpush1.bf16.msra.mxu0 %v361
    %375 = vmatprep.subr.bf16.mxu0 0
    %376 = vmatpush1.bf16.msra.mxu0 %v362
    %377 = vmatprep.subr.bf16.mxu0 0
    %378 = vmatpush1.bf16.msra.mxu0 %v363
    %379 = vmatprep.subr.bf16.mxu0 0
    %380 = vmatpush1.bf16.msra.mxu0 %v364
    %381 = vmatprep.subr.bf16.mxu0 0
    %382 = vmatpush1.bf16.msra.mxu0 0
    %383 = vmatprep.subr.bf16.mxu0 0
    %384 = vmatpush1.bf16.msra.mxu0 0
    %385 = vmatprep.subr.bf16.mxu0 0
    %386 = vmatpush1.bf16.msra.mxu0 0
    %387 = vmatprep.subr.bf16.mxu0 0
    %388 = vmatpush1.bf16.msra.mxu0 0
    %389 = vmatprep.subr.bf16.mxu0 0
    %390 = vmatpush1.bf16.msra.mxu0 0
    %391 = vmatprep.subr.bf16.mxu0 0
    %392 = vmatpush1.bf16.msra.mxu0 0
    %393 = vmatprep.subr.bf16.mxu0 0
    %394 = vmatpush1.bf16.msra.mxu0 0
    %395 = vmatprep.subr.bf16.mxu0 0
    %396 = vmatpush1.bf16.msra.mxu0 0
    %397 = vmatprep.subr.bf16.mxu0 0
    %398 = vmatpush1.bf16.msra.mxu0 0
    %399 = vmatprep.subr.bf16.mxu0 0
    %400 = vmatpush1.bf16.msra.mxu0 0
    %401 = vmatprep.subr.bf16.mxu0 0
    %402 = vmatpush1.bf16.msra.mxu0 0
    %403 = vmatprep.subr.bf16.mxu0 0
    %404 = vmatpush1.bf16.msra.mxu0 0
    %405 = vmatprep.mubr.bf16.mxu0 0
    %406 = vmatmul.mubr.bf16.gmra.mrb[0].mxu0 %v371
    %v407 = vpop.f32.mrb[0].mxu0
    %v408 = vadd.f32 %v343, %v407
    %v409 = vpop.f32.mrb[0].mxu0
    %v410 = vpop.f32.mrb[0].mxu0
    %v411 = vpop.f32.mrb[0].mxu0
    %412 = vdwg.mxu0
    %413 = vmax.xlane.f32.xlu0 %v408
    %v414 = vpop.xlane.xlu0 %413
    %v415 = vsub.f32 %v408, %v414
    %v416 = vmul.f32 %v415, 1.442695
    %v417 = vpow.pop %v416
    %418 = vadd.xlane.f32.xlu0 %v417
    %v419 = vpop.xlane.xlu0 %418
    %v420 = vrcp.pop %v419
    %v421 = vmul.f32 %v417, %v420
    %422 = vst [vmem:[#allocation2] sm:$0xff] %v421
    // Predicated region
    $region22: #{conv_classifier_forward.5} parent=1 // pred_check
      _
    $region23: #{conv_classifier_forward.5} parent=1 // pred_check_branch
      %424 = sbr.rel (0) target = $region25
    $region24: #{conv_classifier_forward.5} parent=1 // pred_region
      %s426 = ssub.s32 128, 128
      %427 = vsyncadd [#allocation3], %s426
      %s429 = sshll.u32 [#allocation2], 4
      %s430 = int_to_ptr.vmem [resolvable:$true] %s429
      %432 = dma.vmem_to_hbm [thread:$0]  %s430, 128, %s5, [#allocation3]
    $region25: #{conv_classifier_forward.5} parent=1 // pred_fallthru
      _
    // Predicated region
    $region26: #{conv_classifier_forward.5} parent=1 // pred_check
      _
    $region27: #{conv_classifier_forward.5} parent=1 // pred_check_branch
      %434 = sbr.rel (0) target = $region29
    $region28: #{conv_classifier_forward.5} parent=1 // pred_region
      %435 = dma.done [#allocation3], 128
    $region29: #{conv_classifier_forward.5} parent=1 // pred_fallthru
      _
    %436 = vsyncpa [#allocation3], 1

</llo_original>
